<compile_context>
chip_gen: v7x
topology: tpu7x:2x2x1
jax: 0.10.0
libtpu: 0.0.40
codegen_flags: <defaults>
</compile_context>

<pallas_src>
import functools

import jax
import jax.numpy as jnp
from jax.experimental import pallas as pl
from jax.experimental.pallas import tpu as pltpu


def _qnet_kernel(dims,
                 x_ref, w1_ref, b1_ref, w2_ref, b2_ref, w3_ref, b3_ref,
                 fc1w_ref, fc1b_ref, fc2w_ref, fc2b_ref,
                 out_ref,
                 patch1_ref, p_ref, patch2_ref, h2_ref, patch3_ref, head_ref):
    B, C, H, W = dims
    H1, W1 = H - 1, W - 1          # after conv1 (2x2 valid)
    Hp, Wp = H1 // 2, W1 // 2      # after maxpool 2x2 stride 2 (floor)
    H2, W2 = Hp - 1, Wp - 1        # after conv2
    H3, W3 = H2 - 1, W2 - 1        # after conv3
    f32 = jnp.float32

    n1 = H1 * W * B                # padded rows of conv1 output / patch1
    n2 = H2 * Wp * B               # padded rows of conv2 output / patch2
    n3 = H3 * Wp * B               # padded rows of conv3 output / patch3
    npool = Hp * Wp * B            # compact rows of maxpool output

    def mm(a, b):
        return jnp.dot(a, b, preferred_element_type=f32)

    # ---- conv1: im2col (4 taps side-by-side in lanes) + one matmul + ReLU ----
    for dh in range(2):
        for dw in range(2):
            t = 2 * dh + dw
            s = dh * W * B + dw * B
            patch1_ref[:, t * C:(t + 1) * C] = x_ref[s:s + n1, :]
    h1 = jnp.maximum(mm(patch1_ref[...], w1_ref[...]) + b1_ref[...], 0.0)  # (n1,16)

    # ---- maxpool 2x2 stride 2 (vectorized: 2 maxima + 1 store) ----
    v = h1[:2 * Hp * W * B, :].reshape(Hp, 2 * W * B, 16)
    v = jnp.maximum(v[:, :W * B, :], v[:, W * B:, :])          # vertical max
    v = v[:, :2 * Wp * B, :].reshape(Hp * Wp, 2 * B, 16)
    v = jnp.maximum(v[:, :B, :], v[:, B:, :])                  # horizontal max
    p_ref[:npool, :] = v.reshape(npool, 16)
    p_ref[npool:, :] = jnp.zeros((B, 16), f32)                 # zero pad rows

    # ---- conv2: im2col + one matmul + ReLU ----
    for dh in range(2):
        for dw in range(2):
            t = 2 * dh + dw
            s = dh * Wp * B + dw * B
            patch2_ref[:, t * 16:(t + 1) * 16] = p_ref[s:s + n2, :]
    h2 = jnp.maximum(mm(patch2_ref[...], w2_ref[...]) + b2_ref[...], 0.0)  # (n2,32)
    h2_ref[:n2, :] = h2
    h2_ref[n2:, :] = jnp.zeros((B, 32), f32)                   # zero pad rows

    # ---- conv3: im2col + one matmul + ReLU ----
    for dh in range(2):
        for dw in range(2):
            t = 2 * dh + dw
            s = dh * Wp * B + dw * B
            patch3_ref[:, t * 32:(t + 1) * 32] = h2_ref[s:s + n3, :]
    h3 = jnp.maximum(mm(patch3_ref[...], w3_ref[...]) + b3_ref[...], 0.0)  # (n3,64)

    # ---- critic head: pack valid (y3,w3) blocks along lanes, 2 matmuls ----
    for y3 in range(H3):
        for w3 in range(W3):
            hw = y3 * W3 + w3
            r = y3 * Wp * B + w3 * B
            head_ref[:, hw * 64:(hw + 1) * 64] = h3[r:r + B, :]
    z1 = jnp.tanh(mm(head_ref[...], fc1w_ref[...]) + fc1b_ref[...])
    out_ref[...] = mm(z1, fc2w_ref[...]) + fc2b_ref[...]


def prepare_params(params, H, W):
    """One-time weight repacking (keep out of the per-call path)."""
    H1, W1 = H - 1, W - 1
    Hp, Wp = H1 // 2, W1 // 2
    H2, W2 = Hp - 1, Wp - 1
    H3, W3 = H2 - 1, W2 - 1

    def conv_w(w):                 # (O, I, 2, 2) -> (4*I, O), row = (2dh+dw)*I + i
        o, i, kh, kw = w.shape
        return jnp.transpose(w, (2, 3, 1, 0)).reshape(kh * kw * i, o)

    # PyTorch fc1 weight is (64, emb) with emb index = c*H3*W3 + y*W3 + w
    # (NCHW reshape(B,-1) order).  Repack as (H3*W3*64, 64) matching the
    # kernel's lane order hw*64 + c.
    fc1_w = params["fc1_w"].reshape(64, 64, H3, W3)
    fc1_w = jnp.transpose(fc1_w, (2, 3, 1, 0)).reshape(H3 * W3 * 64, 64)
    return {
        "w1": conv_w(params["conv1_w"]), "b1": params["conv1_b"].reshape(1, -1),
        "w2": conv_w(params["conv2_w"]), "b2": params["conv2_b"].reshape(1, -1),
        "w3": conv_w(params["conv3_w"]), "b3": params["conv3_b"].reshape(1, -1),
        "fc1_w": fc1_w, "fc1_b": params["fc1_b"].reshape(1, -1),
        "fc2_w": params["fc2_w"].T, "fc2_b": params["fc2_b"].reshape(1, -1),
    }


def qnetwork_forward(x_nchw, packed):
    """Pallas forward. x_nchw: (B, C, H, W) f32; packed = prepare_params(...)."""
    B, C, H, W = x_nchw.shape
    H1, W1 = H - 1, W - 1
    Hp, Wp = H1 // 2, W1 // 2
    H2, W2 = Hp - 1, Wp - 1
    H3, W3 = H2 - 1, W2 - 1
    A = packed["fc2_w"].shape[1]

    n1 = H1 * W * B
    n2 = H2 * Wp * B
    n3 = H3 * Wp * B
    npool = Hp * Wp * B

    # Per-call glue: only the input transpose + B zero pad rows (so the
    # shifted im2col slices inside the kernel never go out of bounds).
    # NOTE: B a multiple of 8 keeps every row-block slice sublane-aligned.
    x_flat = jnp.transpose(x_nchw, (2, 3, 0, 1)).reshape(H * W * B, C)
    x_flat = jnp.concatenate(
        [x_flat, jnp.zeros((B, C), x_flat.dtype)], axis=0)

    vmem = pl.BlockSpec(memory_space=pltpu.MemorySpace.VMEM)
    out = pl.pallas_call(
        functools.partial(_qnet_kernel, (B, C, H, W)),
        out_shape=jax.ShapeDtypeStruct((B, A), jnp.float32),
        in_specs=[vmem] * 11,
        out_specs=vmem,
        scratch_shapes=[
            pltpu.VMEM((n1, 4 * C), jnp.float32),         # conv1 im2col patch
            pltpu.VMEM((npool + B, 16), jnp.float32),     # maxpool out (+pad)
            pltpu.VMEM((n2, 64), jnp.float32),            # conv2 im2col patch
            pltpu.VMEM((n2 + B, 32), jnp.float32),        # conv2 out (+pad)
            pltpu.VMEM((n3, 128), jnp.float32),           # conv3 im2col patch
            pltpu.VMEM((B, H3 * W3 * 64), jnp.float32),   # head feature pack
        ],
    )(x_flat, packed["w1"], packed["b1"], packed["w2"], packed["b2"],
      packed["w3"], packed["b3"], packed["fc1_w"], packed["fc1_b"],
      packed["fc2_w"], packed["fc2_b"])
    return out


def qnetwork_reference(x, params):
    """Pure-JAX (XLA) reference matching the PyTorch module exactly."""
    def conv(h, w, b):
        y = jax.lax.conv_general_dilated(
            h, w, (1, 1), "VALID",
            dimension_numbers=("NCHW", "OIHW", "NCHW"))
        return y + b[None, :, None, None]

    h = jax.nn.relu(conv(x, params["conv1_w"], params["conv1_b"]))
    h = jax.lax.reduce_window(h, -jnp.inf, jax.lax.max,
                              (1, 1, 2, 2), (1, 1, 2, 2), "VALID")
    h = jax.nn.relu(conv(h, params["conv2_w"], params["conv2_b"]))
    h = jax.nn.relu(conv(h, params["conv3_w"], params["conv3_b"]))
    flat = h.reshape(h.shape[0], -1)
    z = jnp.tanh(flat @ params["fc1_w"].T + params["fc1_b"])
    return z @ params["fc2_w"].T + params["fc2_b"]


def init_params(key, c, n_actions, emb):
    ks = jax.random.split(key, 10)
    s = 0.1
    return {
        "conv1_w": s * jax.random.normal(ks[0], (16, c, 2, 2), jnp.float32),
        "conv1_b": s * jax.random.normal(ks[1], (16,), jnp.float32),
        "conv2_w": s * jax.random.normal(ks[2], (32, 16, 2, 2), jnp.float32),
        "conv2_b": s * jax.random.normal(ks[3], (32,), jnp.float32),
        "conv3_w": s * jax.random.normal(ks[4], (64, 32, 2, 2), jnp.float32),
        "conv3_b": s * jax.random.normal(ks[5], (64,), jnp.float32),
        "fc1_w": s * jax.random.normal(ks[6], (64, emb), jnp.float32),
        "fc1_b": s * jax.random.normal(ks[7], (64,), jnp.float32),
        "fc2_w": s * jax.random.normal(ks[8], (n_actions, 64), jnp.float32),
        "fc2_b": s * jax.random.normal(ks[9], (n_actions,), jnp.float32),
    }


if __name__ == "__main__":
    # observation space (H, W, C) = (9, 9, 3), 8 vector envs, 5 actions.
    B, C, H, W = 8, 3, 9, 9
    n_actions = 5
    emb = ((H - 1) // 2 - 2) * ((W - 1) // 2 - 2) * 64   # = 2*2*64 = 256

    key = jax.random.PRNGKey(0)
    k_x, k_p = jax.random.split(key)
    x = jax.random.normal(k_x, (B, C, H, W), jnp.float32)
    params = init_params(k_p, C, n_actions, emb)

    packed = prepare_params(params, H, W)            # one-time weight packing
    fwd = jax.jit(qnetwork_forward)
    out = jax.block_until_ready(fwd(x, packed))

    ref = qnetwork_reference(x, params)
    assert out.shape == (B, n_actions)
    if not jnp.allclose(out, ref, rtol=1e-4, atol=1e-4):
        raise AssertionError(
            f"kernel/reference mismatch, max abs diff = {jnp.max(jnp.abs(out - ref))}")
    print("KERNEL_OK")
</pallas_src>

<mosaic_0001>
module attributes {stable_mosaic.version = 11 : i64} {
  func.func @_qnet_kernel(%arg0: memref<656x3xf32, #tpu.memory_space<vmem>>, %arg1: memref<12x16xf32, #tpu.memory_space<vmem>>, %arg2: memref<1x16xf32, #tpu.memory_space<vmem>>, %arg3: memref<64x32xf32, #tpu.memory_space<vmem>>, %arg4: memref<1x32xf32, #tpu.memory_space<vmem>>, %arg5: memref<128x64xf32, #tpu.memory_space<vmem>>, %arg6: memref<1x64xf32, #tpu.memory_space<vmem>>, %arg7: memref<256x64xf32, #tpu.memory_space<vmem>>, %arg8: memref<1x64xf32, #tpu.memory_space<vmem>>, %arg9: memref<64x5xf32, #tpu.memory_space<vmem>>, %arg10: memref<1x5xf32, #tpu.memory_space<vmem>>, %arg11: memref<8x5xf32, #tpu.memory_space<vmem>>, %arg12: memref<576x12xf32, #tpu.memory_space<vmem>>, %arg13: memref<136x16xf32, #tpu.memory_space<vmem>>, %arg14: memref<96x64xf32, #tpu.memory_space<vmem>>, %arg15: memref<104x32xf32, #tpu.memory_space<vmem>>, %arg16: memref<64x128xf32, #tpu.memory_space<vmem>>, %arg17: memref<8x256xf32, #tpu.memory_space<vmem>>) attributes {dimension_semantics = [], scalar_prefetch = 0 : i64, scratch_operands = 6 : i64, tpu.core_type = #tpu.core_type<tc>} {
    %c0 = arith.constant 0 : index
    %c0_0 = arith.constant 0 : index
    %0 = vector.load %arg0[%c0, %c0_0] : memref<656x3xf32, #tpu.memory_space<vmem>>, vector<576x3xf32>
    %c0_1 = arith.constant 0 : index
    %c0_2 = arith.constant 0 : index
    %1 = vector.load %arg12[%c0_1, %c0_2] : memref<576x12xf32, #tpu.memory_space<vmem>>, vector<576x3xf32>
    tpu.vector_store %arg12[%c0_1, %c0_2], %0 {strides = array<i32>} : memref<576x12xf32, #tpu.memory_space<vmem>>, vector<576x3xf32>,
    %c8 = arith.constant 8 : index
    %c0_3 = arith.constant 0 : index
    %2 = vector.load %arg0[%c8, %c0_3] : memref<656x3xf32, #tpu.memory_space<vmem>>, vector<576x3xf32>
    %c0_4 = arith.constant 0 : index
    %c3 = arith.constant 3 : index
    %3 = vector.load %arg12[%c0_4, %c3] : memref<576x12xf32, #tpu.memory_space<vmem>>, vector<576x3xf32>
    tpu.vector_store %arg12[%c0_4, %c3], %2 {strides = array<i32>} : memref<576x12xf32, #tpu.memory_space<vmem>>, vector<576x3xf32>,
    %c72 = arith.constant 72 : index
    %c0_5 = arith.constant 0 : index
    %4 = vector.load %arg0[%c72, %c0_5] : memref<656x3xf32, #tpu.memory_space<vmem>>, vector<576x3xf32>
    %c0_6 = arith.constant 0 : index
    %c6 = arith.constant 6 : index
    %5 = vector.load %arg12[%c0_6, %c6] : memref<576x12xf32, #tpu.memory_space<vmem>>, vector<576x3xf32>
    tpu.vector_store %arg12[%c0_6, %c6], %4 {strides = array<i32>} : memref<576x12xf32, #tpu.memory_space<vmem>>, vector<576x3xf32>,
    %c80 = arith.constant 80 : index
    %c0_7 = arith.constant 0 : index
    %6 = vector.load %arg0[%c80, %c0_7] : memref<656x3xf32, #tpu.memory_space<vmem>>, vector<576x3xf32>
    %c0_8 = arith.constant 0 : index
    %c9 = arith.constant 9 : index
    %7 = vector.load %arg12[%c0_8, %c9] : memref<576x12xf32, #tpu.memory_space<vmem>>, vector<576x3xf32>
    tpu.vector_store %arg12[%c0_8, %c9], %6 {strides = array<i32>} : memref<576x12xf32, #tpu.memory_space<vmem>>, vector<576x3xf32>,
    %c0_9 = arith.constant 0 : index
    %c0_10 = arith.constant 0 : index
    %8 = vector.load %arg12[%c0_9, %c0_10] : memref<576x12xf32, #tpu.memory_space<vmem>>, vector<576x12xf32>
    %c0_11 = arith.constant 0 : index
    %c0_12 = arith.constant 0 : index
    %9 = vector.load %arg1[%c0_11, %c0_12] : memref<12x16xf32, #tpu.memory_space<vmem>>, vector<12x16xf32>
    %cst = arith.constant dense<0.000000e+00> : vector<576x16xf32>
    %10 = tpu.matmul %8, %9, %cst {dimension_numbers = #tpu.dot_dimension_numbers<[1], [0], [0], [1], [0, 0, 1, 1], [], []>} : vector<576x12xf32>, vector<12x16xf32>, vector<576x16xf32> -> vector<576x16xf32>
    %c0_13 = arith.constant 0 : index
    %c0_14 = arith.constant 0 : index
    %11 = vector.load %arg2[%c0_13, %c0_14] : memref<1x16xf32, #tpu.memory_space<vmem>>, vector<1x16xf32>
    %12 = vector.broadcast %11 : vector<1x16xf32> to vector<576x16xf32>
    %13 = arith.addf %10, %12 : vector<576x16xf32>
    %cst_15 = arith.constant 0.000000e+00 : f32
    %14 = vector.broadcast %cst_15 : f32 to vector<576x16xf32>
    %15 = arith.maximumf %13, %14 : vector<576x16xf32>
    %16 = vector.shape_cast %15 : vector<576x16xf32> to vector<4x144x16xf32>
    %17 = vector.extract_strided_slice %16 {offsets = [0, 0, 0], sizes = [4, 72, 16], strides = [1, 1, 1]} : vector<4x144x16xf32> to vector<4x72x16xf32>
    %18 = vector.extract_strided_slice %16 {offsets = [0, 72, 0], sizes = [4, 72, 16], strides = [1, 1, 1]} : vector<4x144x16xf32> to vector<4x72x16xf32>
    %19 = arith.maximumf %17, %18 : vector<4x72x16xf32>
    %20 = vector.extract_strided_slice %19 {offsets = [0, 0, 0], sizes = [4, 64, 16], strides = [1, 1, 1]} : vector<4x72x16xf32> to vector<4x64x16xf32>
    %21 = vector.shape_cast %20 : vector<4x64x16xf32> to vector<16x16x16xf32>
    %22 = vector.extract_strided_slice %21 {offsets = [0, 0, 0], sizes = [16, 8, 16], strides = [1, 1, 1]} : vector<16x16x16xf32> to vector<16x8x16xf32>
    %23 = vector.extract_strided_slice %21 {offsets = [0, 8, 0], sizes = [16, 8, 16], strides = [1, 1, 1]} : vector<16x16x16xf32> to vector<16x8x16xf32>
    %24 = arith.maximumf %22, %23 : vector<16x8x16xf32>
    %25 = vector.shape_cast %24 : vector<16x8x16xf32> to vector<128x16xf32>
    %c0_16 = arith.constant 0 : index
    %c0_17 = arith.constant 0 : index
    %26 = vector.load %arg13[%c0_16, %c0_17] : memref<136x16xf32, #tpu.memory_space<vmem>>, vector<128x16xf32>
    tpu.vector_store %arg13[%c0_16, %c0_17], %25 {strides = array<i32>} : memref<136x16xf32, #tpu.memory_space<vmem>>, vector<128x16xf32>,
    %cst_18 = arith.constant 0.000000e+00 : f32
    %27 = vector.broadcast %cst_18 : f32 to vector<8x16xf32>
    %c128 = arith.constant 128 : index
    %c0_19 = arith.constant 0 : index
    %28 = vector.load %arg13[%c128, %c0_19] : memref<136x16xf32, #tpu.memory_space<vmem>>, vector<8x16xf32>
    tpu.vector_store %arg13[%c128, %c0_19], %27 {strides = array<i32>} : memref<136x16xf32, #tpu.memory_space<vmem>>, vector<8x16xf32>,
    %c0_20 = arith.constant 0 : index
    %c0_21 = arith.constant 0 : index
    %29 = vector.load %arg13[%c0_20, %c0_21] : memref<136x16xf32, #tpu.memory_space<vmem>>, vector<96x16xf32>
    %c0_22 = arith.constant 0 : index
    %c0_23 = arith.constant 0 : index
    %30 = vector.load %arg14[%c0_22, %c0_23] : memref<96x64xf32, #tpu.memory_space<vmem>>, vector<96x16xf32>
    tpu.vector_store %arg14[%c0_22, %c0_23], %29 {strides = array<i32>} : memref<96x64xf32, #tpu.memory_space<vmem>>, vector<96x16xf32>,
    %c8_24 = arith.constant 8 : index
    %c0_25 = arith.constant 0 : index
    %31 = vector.load %arg13[%c8_24, %c0_25] : memref<136x16xf32, #tpu.memory_space<vmem>>, vector<96x16xf32>
    %c0_26 = arith.constant 0 : index
    %c16 = arith.constant 16 : index
    %32 = vector.load %arg14[%c0_26, %c16] : memref<96x64xf32, #tpu.memory_space<vmem>>, vector<96x16xf32>
    tpu.vector_store %arg14[%c0_26, %c16], %31 {strides = array<i32>} : memref<96x64xf32, #tpu.memory_space<vmem>>, vector<96x16xf32>,
    %c32 = arith.constant 32 : index
    %c0_27 = arith.constant 0 : index
    %33 = vector.load %arg13[%c32, %c0_27] : memref<136x16xf32, #tpu.memory_space<vmem>>, vector<96x16xf32>
    %c0_28 = arith.constant 0 : index
    %c32_29 = arith.constant 32 : index
    %34 = vector.load %arg14[%c0_28, %c32_29] : memref<96x64xf32, #tpu.memory_space<vmem>>, vector<96x16xf32>
    tpu.vector_store %arg14[%c0_28, %c32_29], %33 {strides = array<i32>} : memref<96x64xf32, #tpu.memory_space<vmem>>, vector<96x16xf32>,
    %c40 = arith.constant 40 : index
    %c0_30 = arith.constant 0 : index
    %35 = vector.load %arg13[%c40, %c0_30] : memref<136x16xf32, #tpu.memory_space<vmem>>, vector<96x16xf32>
    %c0_31 = arith.constant 0 : index
    %c48 = arith.constant 48 : index
    %36 = vector.load %arg14[%c0_31, %c48] : memref<96x64xf32, #tpu.memory_space<vmem>>, vector<96x16xf32>
    tpu.vector_store %arg14[%c0_31, %c48], %35 {strides = array<i32>} : memref<96x64xf32, #tpu.memory_space<vmem>>, vector<96x16xf32>,
    %c0_32 = arith.constant 0 : index
    %c0_33 = arith.constant 0 : index
    %37 = vector.load %arg14[%c0_32, %c0_33] : memref<96x64xf32, #tpu.memory_space<vmem>>, vector<96x64xf32>
    %c0_34 = arith.constant 0 : index
    %c0_35 = arith.constant 0 : index
    %38 = vector.load %arg3[%c0_34, %c0_35] : memref<64x32xf32, #tpu.memory_space<vmem>>, vector<64x32xf32>
    %cst_36 = arith.constant dense<0.000000e+00> : vector<96x32xf32>
    %39 = tpu.matmul %37, %38, %cst_36 {dimension_numbers = #tpu.dot_dimension_numbers<[1], [0], [0], [1], [0, 0, 1, 1], [], []>} : vector<96x64xf32>, vector<64x32xf32>, vector<96x32xf32> -> vector<96x32xf32>
    %c0_37 = arith.constant 0 : index
    %c0_38 = arith.constant 0 : index
    %40 = vector.load %arg4[%c0_37, %c0_38] : memref<1x32xf32, #tpu.memory_space<vmem>>, vector<1x32xf32>
    %41 = vector.broadcast %40 : vector<1x32xf32> to vector<96x32xf32>
    %42 = arith.addf %39, %41 : vector<96x32xf32>
    %cst_39 = arith.constant 0.000000e+00 : f32
    %43 = vector.broadcast %cst_39 : f32 to vector<96x32xf32>
    %44 = arith.maximumf %42, %43 : vector<96x32xf32>
    %c0_40 = arith.constant 0 : index
    %c0_41 = arith.constant 0 : index
    %45 = vector.load %arg15[%c0_40, %c0_41] : memref<104x32xf32, #tpu.memory_space<vmem>>, vector<96x32xf32>
    tpu.vector_store %arg15[%c0_40, %c0_41], %44 {strides = array<i32>} : memref<104x32xf32, #tpu.memory_space<vmem>>, vector<96x32xf32>,
    %cst_42 = arith.constant 0.000000e+00 : f32
    %46 = vector.broadcast %cst_42 : f32 to vector<8x32xf32>
    %c96 = arith.constant 96 : index
    %c0_43 = arith.constant 0 : index
    %47 = vector.load %arg15[%c96, %c0_43] : memref<104x32xf32, #tpu.memory_space<vmem>>, vector<8x32xf32>
    tpu.vector_store %arg15[%c96, %c0_43], %46 {strides = array<i32>} : memref<104x32xf32, #tpu.memory_space<vmem>>, vector<8x32xf32>,
    %c0_44 = arith.constant 0 : index
    %c0_45 = arith.constant 0 : index
    %48 = vector.load %arg15[%c0_44, %c0_45] : memref<104x32xf32, #tpu.memory_space<vmem>>, vector<64x32xf32>
    %c0_46 = arith.constant 0 : index
    %c0_47 = arith.constant 0 : index
    %49 = vector.load %arg16[%c0_46, %c0_47] : memref<64x128xf32, #tpu.memory_space<vmem>>, vector<64x32xf32>
    tpu.vector_store %arg16[%c0_46, %c0_47], %48 {strides = array<i32>} : memref<64x128xf32, #tpu.memory_space<vmem>>, vector<64x32xf32>,
    %c8_48 = arith.constant 8 : index
    %c0_49 = arith.constant 0 : index
    %50 = vector.load %arg15[%c8_48, %c0_49] : memref<104x32xf32, #tpu.memory_space<vmem>>, vector<64x32xf32>
    %c0_50 = arith.constant 0 : index
    %c32_51 = arith.constant 32 : index
    %51 = vector.load %arg16[%c0_50, %c32_51] : memref<64x128xf32, #tpu.memory_space<vmem>>, vector<64x32xf32>
    tpu.vector_store %arg16[%c0_50, %c32_51], %50 {strides = array<i32>} : memref<64x128xf32, #tpu.memory_space<vmem>>, vector<64x32xf32>,
    %c32_52 = arith.constant 32 : index
    %c0_53 = arith.constant 0 : index
    %52 = vector.load %arg15[%c32_52, %c0_53] : memref<104x32xf32, #tpu.memory_space<vmem>>, vector<64x32xf32>
    %c0_54 = arith.constant 0 : index
    %c64 = arith.constant 64 : index
    %53 = vector.load %arg16[%c0_54, %c64] : memref<64x128xf32, #tpu.memory_space<vmem>>, vector<64x32xf32>
    tpu.vector_store %arg16[%c0_54, %c64], %52 {strides = array<i32>} : memref<64x128xf32, #tpu.memory_space<vmem>>, vector<64x32xf32>,
    %c40_55 = arith.constant 40 : index
    %c0_56 = arith.constant 0 : index
    %54 = vector.load %arg15[%c40_55, %c0_56] : memref<104x32xf32, #tpu.memory_space<vmem>>, vector<64x32xf32>
    %c0_57 = arith.constant 0 : index
    %c96_58 = arith.constant 96 : index
    %55 = vector.load %arg16[%c0_57, %c96_58] : memref<64x128xf32, #tpu.memory_space<vmem>>, vector<64x32xf32>
    tpu.vector_store %arg16[%c0_57, %c96_58], %54 {strides = array<i32>} : memref<64x128xf32, #tpu.memory_space<vmem>>, vector<64x32xf32>,
    %c0_59 = arith.constant 0 : index
    %c0_60 = arith.constant 0 : index
    %56 = vector.load %arg16[%c0_59, %c0_60] : memref<64x128xf32, #tpu.memory_space<vmem>>, vector<64x128xf32>
    %c0_61 = arith.constant 0 : index
    %c0_62 = arith.constant 0 : index
    %57 = vector.load %arg5[%c0_61, %c0_62] : memref<128x64xf32, #tpu.memory_space<vmem>>, vector<128x64xf32>
    %cst_63 = arith.constant dense<0.000000e+00> : vector<64x64xf32>
    %58 = tpu.matmul %56, %57, %cst_63 {dimension_numbers = #tpu.dot_dimension_numbers<[1], [0], [0], [1], [0, 0, 1, 1], [], []>} : vector<64x128xf32>, vector<128x64xf32>, vector<64x64xf32> -> vector<64x64xf32>
    %c0_64 = arith.constant 0 : index
    %c0_65 = arith.constant 0 : index
    %59 = vector.load %arg6[%c0_64, %c0_65] : memref<1x64xf32, #tpu.memory_space<vmem>>, vector<1x64xf32>
    %60 = vector.broadcast %59 : vector<1x64xf32> to vector<64x64xf32>
    %61 = arith.addf %58, %60 : vector<64x64xf32>
    %cst_66 = arith.constant 0.000000e+00 : f32
    %62 = vector.broadcast %cst_66 : f32 to vector<64x64xf32>
    %63 = arith.maximumf %61, %62 : vector<64x64xf32>
    %64 = vector.extract_strided_slice %63 {offsets = [0, 0], sizes = [8, 64], strides = [1, 1]} : vector<64x64xf32> to vector<8x64xf32>
    %c0_67 = arith.constant 0 : index
    %c0_68 = arith.constant 0 : index
    %65 = vector.load %arg17[%c0_67, %c0_68] : memref<8x256xf32, #tpu.memory_space<vmem>>, vector<8x64xf32>
    tpu.vector_store %arg17[%c0_67, %c0_68], %64 {strides = array<i32>} : memref<8x256xf32, #tpu.memory_space<vmem>>, vector<8x64xf32>,
    %66 = vector.extract_strided_slice %63 {offsets = [8, 0], sizes = [8, 64], strides = [1, 1]} : vector<64x64xf32> to vector<8x64xf32>
    %c0_69 = arith.constant 0 : index
    %c64_70 = arith.constant 64 : index
    %67 = vector.load %arg17[%c0_69, %c64_70] : memref<8x256xf32, #tpu.memory_space<vmem>>, vector<8x64xf32>
    tpu.vector_store %arg17[%c0_69, %c64_70], %66 {strides = array<i32>} : memref<8x256xf32, #tpu.memory_space<vmem>>, vector<8x64xf32>,
    %68 = vector.extract_strided_slice %63 {offsets = [32, 0], sizes = [8, 64], strides = [1, 1]} : vector<64x64xf32> to vector<8x64xf32>
    %c0_71 = arith.constant 0 : index
    %c128_72 = arith.constant 128 : index
    %69 = vector.load %arg17[%c0_71, %c128_72] : memref<8x256xf32, #tpu.memory_space<vmem>>, vector<8x64xf32>
    tpu.vector_store %arg17[%c0_71, %c128_72], %68 {strides = array<i32>} : memref<8x256xf32, #tpu.memory_space<vmem>>, vector<8x64xf32>,
    %70 = vector.extract_strided_slice %63 {offsets = [40, 0], sizes = [8, 64], strides = [1, 1]} : vector<64x64xf32> to vector<8x64xf32>
    %c0_73 = arith.constant 0 : index
    %c192 = arith.constant 192 : index
    %71 = vector.load %arg17[%c0_73, %c192] : memref<8x256xf32, #tpu.memory_space<vmem>>, vector<8x64xf32>
    tpu.vector_store %arg17[%c0_73, %c192], %70 {strides = array<i32>} : memref<8x256xf32, #tpu.memory_space<vmem>>, vector<8x64xf32>,
    %c0_74 = arith.constant 0 : index
    %c0_75 = arith.constant 0 : index
    %72 = vector.load %arg17[%c0_74, %c0_75] : memref<8x256xf32, #tpu.memory_space<vmem>>, vector<8x256xf32>
    %c0_76 = arith.constant 0 : index
    %c0_77 = arith.constant 0 : index
    %73 = vector.load %arg7[%c0_76, %c0_77] : memref<256x64xf32, #tpu.memory_space<vmem>>, vector<256x64xf32>
    %cst_78 = arith.constant dense<0.000000e+00> : vector<8x64xf32>
    %74 = tpu.matmul %72, %73, %cst_78 {dimension_numbers = #tpu.dot_dimension_numbers<[1], [0], [0], [1], [0, 0, 1, 1], [], []>} : vector<8x256xf32>, vector<256x64xf32>, vector<8x64xf32> -> vector<8x64xf32>
    %c0_79 = arith.constant 0 : index
    %c0_80 = arith.constant 0 : index
    %75 = vector.load %arg8[%c0_79, %c0_80] : memref<1x64xf32, #tpu.memory_space<vmem>>, vector<1x64xf32>
    %76 = vector.broadcast %75 : vector<1x64xf32> to vector<8x64xf32>
    %77 = arith.addf %74, %76 : vector<8x64xf32>
    %78 = math.tanh %77 : vector<8x64xf32>
    %c0_81 = arith.constant 0 : index
    %c0_82 = arith.constant 0 : index
    %79 = vector.load %arg9[%c0_81, %c0_82] : memref<64x5xf32, #tpu.memory_space<vmem>>, vector<64x5xf32>
    %cst_83 = arith.constant dense<0.000000e+00> : vector<8x5xf32>
    %80 = tpu.matmul %78, %79, %cst_83 {dimension_numbers = #tpu.dot_dimension_numbers<[1], [0], [0], [1], [0, 0, 1, 1], [], []>} : vector<8x64xf32>, vector<64x5xf32>, vector<8x5xf32> -> vector<8x5xf32>
    %c0_84 = arith.constant 0 : index
    %c0_85 = arith.constant 0 : index
    %81 = vector.load %arg10[%c0_84, %c0_85] : memref<1x5xf32, #tpu.memory_space<vmem>>, vector<1x5xf32>
    %82 = vector.broadcast %81 : vector<1x5xf32> to vector<8x5xf32>
    %83 = arith.addf %80, %82 : vector<8x5xf32>
    %c0_86 = arith.constant 0 : index
    %c0_87 = arith.constant 0 : index
    %84 = vector.load %arg11[%c0_86, %c0_87] : memref<8x5xf32, #tpu.memory_space<vmem>>, vector<8x5xf32>
    tpu.vector_store %arg11[%c0_86, %c0_87], %83 {strides = array<i32>} : memref<8x5xf32, #tpu.memory_space<vmem>>, vector<8x5xf32>,
    return
  }
}

</mosaic_0001>

<llo_original>
// kernel: qnetwork_forward.1
$region0: #{qnetwork_forward.1}
  #allocation0 [shape = 'u32[]', space=smem, size = 0x4, offset = 0x4, fixed_abs, tag = 'smem constant byte address 0x4 - core index']
  #allocation1 [shape = 'u32[144,128]{1,0:T(1,128)}', space=vmem, size = 0x12000, scoped, tag = 'internal scratch']
  #allocation2 [shape = 'f32[576,12]{1,0:T(8,128)}', space=vmem, size = 0x48000, scoped, tag = 'scratch operand']
  #allocation3 [shape = 'f32[136,16]{1,0:T(8,128)}', space=vmem, size = 0x11000, scoped, tag = 'scratch operand']
  #allocation4 [shape = 'f32[96,64]{1,0:T(8,128)}', space=vmem, size = 0xc000, scoped, tag = 'scratch operand']
  #allocation5 [shape = 'f32[104,32]{1,0:T(8,128)}', space=vmem, size = 0xd000, scoped, tag = 'scratch operand']
  #allocation6 [shape = 'f32[64,128]{1,0:T(8,128)}', space=vmem, size = 0x8000, scoped, tag = 'scratch operand']
  #allocation7 [shape = 'f32[8,256]{1,0:T(8,128)}', space=vmem, size = 0x2000, scoped, tag = 'scratch operand']
  %s0 = inlined_call_operand.vmem [shape: f32[656,3], index: 0, kind: input, shape index: {}]
  %s1 = inlined_call_operand.vmem [shape: f32[12,16], index: 1, kind: input, shape index: {}]
  %s2 = inlined_call_operand.vmem [shape: f32[1,16], index: 2, kind: input, shape index: {}]
  %s3 = inlined_call_operand.vmem [shape: f32[64,32], index: 3, kind: input, shape index: {}]
  %s4 = inlined_call_operand.vmem [shape: f32[1,32], index: 4, kind: input, shape index: {}]
  %s5 = inlined_call_operand.vmem [shape: f32[128,64], index: 5, kind: input, shape index: {}]
  %s6 = inlined_call_operand.vmem [shape: f32[1,64], index: 6, kind: input, shape index: {}]
  %s7 = inlined_call_operand.vmem [shape: f32[256,64], index: 7, kind: input, shape index: {}]
  %s8 = inlined_call_operand.vmem [shape: f32[1,64], index: 8, kind: input, shape index: {}]
  %s9 = inlined_call_operand.vmem [shape: f32[64,5], index: 9, kind: input, shape index: {}]
  %s10 = inlined_call_operand.vmem [shape: f32[1,5], index: 10, kind: input, shape index: {}]
  %s11 = inlined_call_operand.hbm [shape: f32[8,5], index: 11, kind: output, shape index: {}]
  %s12 = sld [smem:[#allocation0]]
  $region54: #{qnetwork_forward.1} parent=0
    _
  %s14 = ssub.s32 1, %s12
  %s15 = scalar_select 0, %s14, %s12
  $region1: #{qnetwork_forward.1} parent=0
    #allocation8 [shape = 'u8[4096]{0}', space=vmem, size = 0x1000, scoped, tag = 'output window, operand 0, single buffered']
    #allocation9 [shape = 's32[1]{0}', space=sflag, size = 0x4, scoped, tag = 'scoped memory for qnetwork_forward.1']
    %16 = vsyncpa [#allocation9], 0
    // Predicated region
    $region2: #{qnetwork_forward.1} parent=1 // pred_check
      _
    $region3: #{qnetwork_forward.1} parent=1 // pred_check_branch
      %18 = sbr.rel (0) target = $region5
    $region4: #{qnetwork_forward.1} parent=1 // pred_region
      _
    $region5: #{qnetwork_forward.1} parent=1 // pred_fallthru
      _
    // Predicated region
    $region6: #{qnetwork_forward.1} parent=1 // pred_check
      _
    $region7: #{qnetwork_forward.1} parent=1 // pred_check_branch
      %20 = sbr.rel (0) target = $region9
    $region8: #{qnetwork_forward.1} parent=1 // pred_region
      _
    $region9: #{qnetwork_forward.1} parent=1 // pred_fallthru
      _
    // Predicated region
    $region10: #{qnetwork_forward.1} parent=1 // pred_check
      _
    $region11: #{qnetwork_forward.1} parent=1 // pred_check_branch
      %22 = sbr.rel (0) target = $region13
    $region12: #{qnetwork_forward.1} parent=1 // pred_region
      _
    $region13: #{qnetwork_forward.1} parent=1 // pred_fallthru
      _
    // Predicated region
    $region14: #{qnetwork_forward.1} parent=1 // pred_check
      _
    $region15: #{qnetwork_forward.1} parent=1 // pred_check_branch
      %24 = sbr.rel (0) target = $region17
    $region16: #{qnetwork_forward.1} parent=1 // pred_region
      _
    $region17: #{qnetwork_forward.1} parent=1 // pred_fallthru
      _
    // Predicated region
    $region18: #{qnetwork_forward.1} parent=1 // pred_check
      _
    $region19: #{qnetwork_forward.1} parent=1 // pred_check_branch
      %26 = sbr.rel (0) target = $region21
    $region20: #{qnetwork_forward.1} parent=1 // pred_region
      _
    $region21: #{qnetwork_forward.1} parent=1 // pred_fallthru
      _
    // Predicated region
    $region22: #{qnetwork_forward.1} parent=1 // pred_check
      _
    $region23: #{qnetwork_forward.1} parent=1 // pred_check_branch
      %28 = sbr.rel (0) target = $region25
    $region24: #{qnetwork_forward.1} parent=1 // pred_region
      _
    $region25: #{qnetwork_forward.1} parent=1 // pred_fallthru
      _
    // Predicated region
    $region26: #{qnetwork_forward.1} parent=1 // pred_check
      _
    $region27: #{qnetwork_forward.1} parent=1 // pred_check_branch
      %30 = sbr.rel (0) target = $region29
    $region28: #{qnetwork_forward.1} parent=1 // pred_region
      _
    $region29: #{qnetwork_forward.1} parent=1 // pred_fallthru
      _
    // Predicated region
    $region30: #{qnetwork_forward.1} parent=1 // pred_check
      _
    $region31: #{qnetwork_forward.1} parent=1 // pred_check_branch
      %32 = sbr.rel (0) target = $region33
    $region32: #{qnetwork_forward.1} parent=1 // pred_region
      _
    $region33: #{qnetwork_forward.1} parent=1 // pred_fallthru
      _
    // Predicated region
    $region34: #{qnetwork_forward.1} parent=1 // pred_check
      _
    $region35: #{qnetwork_forward.1} parent=1 // pred_check_branch
      %34 = sbr.rel (0) target = $region37
    $region36: #{qnetwork_forward.1} parent=1 // pred_region
      _
    $region37: #{qnetwork_forward.1} parent=1 // pred_fallthru
      _
    // Predicated region
    $region38: #{qnetwork_forward.1} parent=1 // pred_check
      _
    $region39: #{qnetwork_forward.1} parent=1 // pred_check_branch
      %36 = sbr.rel (0) target = $region41
    $region40: #{qnetwork_forward.1} parent=1 // pred_region
      _
    $region41: #{qnetwork_forward.1} parent=1 // pred_fallthru
      _
    // Predicated region
    $region42: #{qnetwork_forward.1} parent=1 // pred_check
      _
    $region43: #{qnetwork_forward.1} parent=1 // pred_check_branch
      %38 = sbr.rel (0) target = $region45
    $region44: #{qnetwork_forward.1} parent=1 // pred_region
      _
    $region45: #{qnetwork_forward.1} parent=1 // pred_fallthru
      _
    %v39 = vld [vmem:[%s0] sm:$0xff]
    %v40 = vld [vmem:[%s0 + $0x8] sm:$0xff]
    %v41 = vld [vmem:[%s0 + $0x10] sm:$0xff]
    %v42 = vld [vmem:[%s0 + $0x18] sm:$0xff]
    %v43 = vld [vmem:[%s0 + $0x20] sm:$0xff]
    %v44 = vld [vmem:[%s0 + $0x28] sm:$0xff]
    %v45 = vld [vmem:[%s0 + $0x30] sm:$0xff]
    %v46 = vld [vmem:[%s0 + $0x38] sm:$0xff]
    %v47 = vld [vmem:[%s0 + $0x40] sm:$0xff]
    %v48 = vld [vmem:[%s0 + $0x48] sm:$0xff]
    %v49 = vld [vmem:[%s0 + $0x50] sm:$0xff]
    %v50 = vld [vmem:[%s0 + $0x58] sm:$0xff]
    %v51 = vld [vmem:[%s0 + $0x60] sm:$0xff]
    %v52 = vld [vmem:[%s0 + $0x68] sm:$0xff]
    %v53 = vld [vmem:[%s0 + $0x70] sm:$0xff]
    %v54 = vld [vmem:[%s0 + $0x78] sm:$0xff]
    %v55 = vld [vmem:[%s0 + $0x80] sm:$0xff]
    %v56 = vld [vmem:[%s0 + $0x88] sm:$0xff]
    %v57 = vld [vmem:[%s0 + $0x90] sm:$0xff]
    %v58 = vld [vmem:[%s0 + $0x98] sm:$0xff]
    %v59 = vld [vmem:[%s0 + $0xa0] sm:$0xff]
    %v60 = vld [vmem:[%s0 + $0xa8] sm:$0xff]
    %v61 = vld [vmem:[%s0 + $0xb0] sm:$0xff]
    %v62 = vld [vmem:[%s0 + $0xb8] sm:$0xff]
    %v63 = vld [vmem:[%s0 + $0xc0] sm:$0xff]
    %v64 = vld [vmem:[%s0 + $0xc8] sm:$0xff]
    %v65 = vld [vmem:[%s0 + $0xd0] sm:$0xff]
    %v66 = vld [vmem:[%s0 + $0xd8] sm:$0xff]
    %v67 = vld [vmem:[%s0 + $0xe0] sm:$0xff]
    %v68 = vld [vmem:[%s0 + $0xe8] sm:$0xff]
    %v69 = vld [vmem:[%s0 + $0xf0] sm:$0xff]
    %v70 = vld [vmem:[%s0 + $0xf8] sm:$0xff]
    %v71 = vld [vmem:[%s0 + $0x100] sm:$0xff]
    %v72 = vld [vmem:[%s0 + $0x108] sm:$0xff]
    %v73 = vld [vmem:[%s0 + $0x110] sm:$0xff]
    %v74 = vld [vmem:[%s0 + $0x118] sm:$0xff]
    %v75 = vld [vmem:[%s0 + $0x120] sm:$0xff]
    %v76 = vld [vmem:[%s0 + $0x128] sm:$0xff]
    %v77 = vld [vmem:[%s0 + $0x130] sm:$0xff]
    %v78 = vld [vmem:[%s0 + $0x138] sm:$0xff]
    %v79 = vld [vmem:[%s0 + $0x140] sm:$0xff]
    %v80 = vld [vmem:[%s0 + $0x148] sm:$0xff]
    %v81 = vld [vmem:[%s0 + $0x150] sm:$0xff]
    %v82 = vld [vmem:[%s0 + $0x158] sm:$0xff]
    %v83 = vld [vmem:[%s0 + $0x160] sm:$0xff]
    %v84 = vld [vmem:[%s0 + $0x168] sm:$0xff]
    %v85 = vld [vmem:[%s0 + $0x170] sm:$0xff]
    %v86 = vld [vmem:[%s0 + $0x178] sm:$0xff]
    %v87 = vld [vmem:[%s0 + $0x180] sm:$0xff]
    %v88 = vld [vmem:[%s0 + $0x188] sm:$0xff]
    %v89 = vld [vmem:[%s0 + $0x190] sm:$0xff]
    %v90 = vld [vmem:[%s0 + $0x198] sm:$0xff]
    %v91 = vld [vmem:[%s0 + $0x1a0] sm:$0xff]
    %v92 = vld [vmem:[%s0 + $0x1a8] sm:$0xff]
    %v93 = vld [vmem:[%s0 + $0x1b0] sm:$0xff]
    %v94 = vld [vmem:[%s0 + $0x1b8] sm:$0xff]
    %v95 = vld [vmem:[%s0 + $0x1c0] sm:$0xff]
    %v96 = vld [vmem:[%s0 + $0x1c8] sm:$0xff]
    %v97 = vld [vmem:[%s0 + $0x1d0] sm:$0xff]
    %v98 = vld [vmem:[%s0 + $0x1d8] sm:$0xff]
    %v99 = vld [vmem:[%s0 + $0x1e0] sm:$0xff]
    %v100 = vld [vmem:[%s0 + $0x1e8] sm:$0xff]
    %v101 = vld [vmem:[%s0 + $0x1f0] sm:$0xff]
    %v102 = vld [vmem:[%s0 + $0x1f8] sm:$0xff]
    %v103 = vld [vmem:[%s0 + $0x200] sm:$0xff]
    %v104 = vld [vmem:[%s0 + $0x208] sm:$0xff]
    %v105 = vld [vmem:[%s0 + $0x210] sm:$0xff]
    %v106 = vld [vmem:[%s0 + $0x218] sm:$0xff]
    %v107 = vld [vmem:[%s0 + $0x220] sm:$0xff]
    %v108 = vld [vmem:[%s0 + $0x228] sm:$0xff]
    %v109 = vld [vmem:[%s0 + $0x230] sm:$0xff]
    %v110 = vld [vmem:[%s0 + $0x238] sm:$0xff]
    %vm111 = vcmask 23552
    %112 = vst.msk [vmem:[#allocation2] sm:$0xff] %vm111, %v39
    %113 = vst.msk [vmem:[#allocation2 + $0x8] sm:$0xff] %vm111, %v40
    %114 = vst.msk [vmem:[#allocation2 + $0x10] sm:$0xff] %vm111, %v41
    %115 = vst.msk [vmem:[#allocation2 + $0x18] sm:$0xff] %vm111, %v42
    %116 = vst.msk [vmem:[#allocation2 + $0x20] sm:$0xff] %vm111, %v43
    %117 = vst.msk [vmem:[#allocation2 + $0x28] sm:$0xff] %vm111, %v44
    %118 = vst.msk [vmem:[#allocation2 + $0x30] sm:$0xff] %vm111, %v45
    %119 = vst.msk [vmem:[#allocation2 + $0x38] sm:$0xff] %vm111, %v46
    %120 = vst.msk [vmem:[#allocation2 + $0x40] sm:$0xff] %vm111, %v47
    %121 = vst.msk [vmem:[#allocation2 + $0x48] sm:$0xff] %vm111, %v48
    %122 = vst.msk [vmem:[#allocation2 + $0x50] sm:$0xff] %vm111, %v49
    %123 = vst.msk [vmem:[#allocation2 + $0x58] sm:$0xff] %vm111, %v50
    %124 = vst.msk [vmem:[#allocation2 + $0x60] sm:$0xff] %vm111, %v51
    %125 = vst.msk [vmem:[#allocation2 + $0x68] sm:$0xff] %vm111, %v52
    %126 = vst.msk [vmem:[#allocation2 + $0x70] sm:$0xff] %vm111, %v53
    %127 = vst.msk [vmem:[#allocation2 + $0x78] sm:$0xff] %vm111, %v54
    %128 = vst.msk [vmem:[#allocation2 + $0x80] sm:$0xff] %vm111, %v55
    %129 = vst.msk [vmem:[#allocation2 + $0x88] sm:$0xff] %vm111, %v56
    %130 = vst.msk [vmem:[#allocation2 + $0x90] sm:$0xff] %vm111, %v57
    %131 = vst.msk [vmem:[#allocation2 + $0x98] sm:$0xff] %vm111, %v58
    %132 = vst.msk [vmem:[#allocation2 + $0xa0] sm:$0xff] %vm111, %v59
    %133 = vst.msk [vmem:[#allocation2 + $0xa8] sm:$0xff] %vm111, %v60
    %134 = vst.msk [vmem:[#allocation2 + $0xb0] sm:$0xff] %vm111, %v61
    %135 = vst.msk [vmem:[#allocation2 + $0xb8] sm:$0xff] %vm111, %v62
    %136 = vst.msk [vmem:[#allocation2 + $0xc0] sm:$0xff] %vm111, %v63
    %137 = vst.msk [vmem:[#allocation2 + $0xc8] sm:$0xff] %vm111, %v64
    %138 = vst.msk [vmem:[#allocation2 + $0xd0] sm:$0xff] %vm111, %v65
    %139 = vst.msk [vmem:[#allocation2 + $0xd8] sm:$0xff] %vm111, %v66
    %140 = vst.msk [vmem:[#allocation2 + $0xe0] sm:$0xff] %vm111, %v67
    %141 = vst.msk [vmem:[#allocation2 + $0xe8] sm:$0xff] %vm111, %v68
    %142 = vst.msk [vmem:[#allocation2 + $0xf0] sm:$0xff] %vm111, %v69
    %143 = vst.msk [vmem:[#allocation2 + $0xf8] sm:$0xff] %vm111, %v70
    %144 = vst.msk [vmem:[#allocation2 + $0x100] sm:$0xff] %vm111, %v71
    %145 = vst.msk [vmem:[#allocation2 + $0x108] sm:$0xff] %vm111, %v72
    %146 = vst.msk [vmem:[#allocation2 + $0x110] sm:$0xff] %vm111, %v73
    %147 = vst.msk [vmem:[#allocation2 + $0x118] sm:$0xff] %vm111, %v74
    %148 = vst.msk [vmem:[#allocation2 + $0x120] sm:$0xff] %vm111, %v75
    %149 = vst.msk [vmem:[#allocation2 + $0x128] sm:$0xff] %vm111, %v76
    %150 = vst.msk [vmem:[#allocation2 + $0x130] sm:$0xff] %vm111, %v77
    %151 = vst.msk [vmem:[#allocation2 + $0x138] sm:$0xff] %vm111, %v78
    %152 = vst.msk [vmem:[#allocation2 + $0x140] sm:$0xff] %vm111, %v79
    %153 = vst.msk [vmem:[#allocation2 + $0x148] sm:$0xff] %vm111, %v80
    %154 = vst.msk [vmem:[#allocation2 + $0x150] sm:$0xff] %vm111, %v81
    %155 = vst.msk [vmem:[#allocation2 + $0x158] sm:$0xff] %vm111, %v82
    %156 = vst.msk [vmem:[#allocation2 + $0x160] sm:$0xff] %vm111, %v83
    %157 = vst.msk [vmem:[#allocation2 + $0x168] sm:$0xff] %vm111, %v84
    %158 = vst.msk [vmem:[#allocation2 + $0x170] sm:$0xff] %vm111, %v85
    %159 = vst.msk [vmem:[#allocation2 + $0x178] sm:$0xff] %vm111, %v86
    %160 = vst.msk [vmem:[#allocation2 + $0x180] sm:$0xff] %vm111, %v87
    %161 = vst.msk [vmem:[#allocation2 + $0x188] sm:$0xff] %vm111, %v88
    %162 = vst.msk [vmem:[#allocation2 + $0x190] sm:$0xff] %vm111, %v89
    %163 = vst.msk [vmem:[#allocation2 + $0x198] sm:$0xff] %vm111, %v90
    %164 = vst.msk [vmem:[#allocation2 + $0x1a0] sm:$0xff] %vm111, %v91
    %165 = vst.msk [vmem:[#allocation2 + $0x1a8] sm:$0xff] %vm111, %v92
    %166 = vst.msk [vmem:[#allocation2 + $0x1b0] sm:$0xff] %vm111, %v93
    %167 = vst.msk [vmem:[#allocation2 + $0x1b8] sm:$0xff] %vm111, %v94
    %168 = vst.msk [vmem:[#allocation2 + $0x1c0] sm:$0xff] %vm111, %v95
    %169 = vst.msk [vmem:[#allocation2 + $0x1c8] sm:$0xff] %vm111, %v96
    %170 = vst.msk [vmem:[#allocation2 + $0x1d0] sm:$0xff] %vm111, %v97
    %171 = vst.msk [vmem:[#allocation2 + $0x1d8] sm:$0xff] %vm111, %v98
    %172 = vst.msk [vmem:[#allocation2 + $0x1e0] sm:$0xff] %vm111, %v99
    %173 = vst.msk [vmem:[#allocation2 + $0x1e8] sm:$0xff] %vm111, %v100
    %174 = vst.msk [vmem:[#allocation2 + $0x1f0] sm:$0xff] %vm111, %v101
    %175 = vst.msk [vmem:[#allocation2 + $0x1f8] sm:$0xff] %vm111, %v102
    %176 = vst.msk [vmem:[#allocation2 + $0x200] sm:$0xff] %vm111, %v103
    %177 = vst.msk [vmem:[#allocation2 + $0x208] sm:$0xff] %vm111, %v104
    %178 = vst.msk [vmem:[#allocation2 + $0x210] sm:$0xff] %vm111, %v105
    %179 = vst.msk [vmem:[#allocation2 + $0x218] sm:$0xff] %vm111, %v106
    %180 = vst.msk [vmem:[#allocation2 + $0x220] sm:$0xff] %vm111, %v107
    %181 = vst.msk [vmem:[#allocation2 + $0x228] sm:$0xff] %vm111, %v108
    %182 = vst.msk [vmem:[#allocation2 + $0x230] sm:$0xff] %vm111, %v109
    %183 = vst.msk [vmem:[#allocation2 + $0x238] sm:$0xff] %vm111, %v110
    %v184 = vld [vmem:[%s0 + $0x8] sm:$0xff]
    %v185 = vld [vmem:[%s0 + $0x10] sm:$0xff]
    %v186 = vld [vmem:[%s0 + $0x18] sm:$0xff]
    %v187 = vld [vmem:[%s0 + $0x20] sm:$0xff]
    %v188 = vld [vmem:[%s0 + $0x28] sm:$0xff]
    %v189 = vld [vmem:[%s0 + $0x30] sm:$0xff]
    %v190 = vld [vmem:[%s0 + $0x38] sm:$0xff]
    %v191 = vld [vmem:[%s0 + $0x40] sm:$0xff]
    %v192 = vld [vmem:[%s0 + $0x48] sm:$0xff]
    %v193 = vld [vmem:[%s0 + $0x50] sm:$0xff]
    %v194 = vld [vmem:[%s0 + $0x58] sm:$0xff]
    %v195 = vld [vmem:[%s0 + $0x60] sm:$0xff]
    %v196 = vld [vmem:[%s0 + $0x68] sm:$0xff]
    %v197 = vld [vmem:[%s0 + $0x70] sm:$0xff]
    %v198 = vld [vmem:[%s0 + $0x78] sm:$0xff]
    %v199 = vld [vmem:[%s0 + $0x80] sm:$0xff]
    %v200 = vld [vmem:[%s0 + $0x88] sm:$0xff]
    %v201 = vld [vmem:[%s0 + $0x90] sm:$0xff]
    %v202 = vld [vmem:[%s0 + $0x98] sm:$0xff]
    %v203 = vld [vmem:[%s0 + $0xa0] sm:$0xff]
    %v204 = vld [vmem:[%s0 + $0xa8] sm:$0xff]
    %v205 = vld [vmem:[%s0 + $0xb0] sm:$0xff]
    %v206 = vld [vmem:[%s0 + $0xb8] sm:$0xff]
    %v207 = vld [vmem:[%s0 + $0xc0] sm:$0xff]
    %v208 = vld [vmem:[%s0 + $0xc8] sm:$0xff]
    %v209 = vld [vmem:[%s0 + $0xd0] sm:$0xff]
    %v210 = vld [vmem:[%s0 + $0xd8] sm:$0xff]
    %v211 = vld [vmem:[%s0 + $0xe0] sm:$0xff]
    %v212 = vld [vmem:[%s0 + $0xe8] sm:$0xff]
    %v213 = vld [vmem:[%s0 + $0xf0] sm:$0xff]
    %v214 = vld [vmem:[%s0 + $0xf8] sm:$0xff]
    %v215 = vld [vmem:[%s0 + $0x100] sm:$0xff]
    %v216 = vld [vmem:[%s0 + $0x108] sm:$0xff]
    %v217 = vld [vmem:[%s0 + $0x110] sm:$0xff]
    %v218 = vld [vmem:[%s0 + $0x118] sm:$0xff]
    %v219 = vld [vmem:[%s0 + $0x120] sm:$0xff]
    %v220 = vld [vmem:[%s0 + $0x128] sm:$0xff]
    %v221 = vld [vmem:[%s0 + $0x130] sm:$0xff]
    %v222 = vld [vmem:[%s0 + $0x138] sm:$0xff]
    %v223 = vld [vmem:[%s0 + $0x140] sm:$0xff]
    %v224 = vld [vmem:[%s0 + $0x148] sm:$0xff]
    %v225 = vld [vmem:[%s0 + $0x150] sm:$0xff]
    %v226 = vld [vmem:[%s0 + $0x158] sm:$0xff]
    %v227 = vld [vmem:[%s0 + $0x160] sm:$0xff]
    %v228 = vld [vmem:[%s0 + $0x168] sm:$0xff]
    %v229 = vld [vmem:[%s0 + $0x170] sm:$0xff]
    %v230 = vld [vmem:[%s0 + $0x178] sm:$0xff]
    %v231 = vld [vmem:[%s0 + $0x180] sm:$0xff]
    %v232 = vld [vmem:[%s0 + $0x188] sm:$0xff]
    %v233 = vld [vmem:[%s0 + $0x190] sm:$0xff]
    %v234 = vld [vmem:[%s0 + $0x198] sm:$0xff]
    %v235 = vld [vmem:[%s0 + $0x1a0] sm:$0xff]
    %v236 = vld [vmem:[%s0 + $0x1a8] sm:$0xff]
    %v237 = vld [vmem:[%s0 + $0x1b0] sm:$0xff]
    %v238 = vld [vmem:[%s0 + $0x1b8] sm:$0xff]
    %v239 = vld [vmem:[%s0 + $0x1c0] sm:$0xff]
    %v240 = vld [vmem:[%s0 + $0x1c8] sm:$0xff]
    %v241 = vld [vmem:[%s0 + $0x1d0] sm:$0xff]
    %v242 = vld [vmem:[%s0 + $0x1d8] sm:$0xff]
    %v243 = vld [vmem:[%s0 + $0x1e0] sm:$0xff]
    %v244 = vld [vmem:[%s0 + $0x1e8] sm:$0xff]
    %v245 = vld [vmem:[%s0 + $0x1f0] sm:$0xff]
    %v246 = vld [vmem:[%s0 + $0x1f8] sm:$0xff]
    %v247 = vld [vmem:[%s0 + $0x200] sm:$0xff]
    %v248 = vld [vmem:[%s0 + $0x208] sm:$0xff]
    %v249 = vld [vmem:[%s0 + $0x210] sm:$0xff]
    %v250 = vld [vmem:[%s0 + $0x218] sm:$0xff]
    %v251 = vld [vmem:[%s0 + $0x220] sm:$0xff]
    %v252 = vld [vmem:[%s0 + $0x228] sm:$0xff]
    %v253 = vld [vmem:[%s0 + $0x230] sm:$0xff]
    %v254 = vld [vmem:[%s0 + $0x238] sm:$0xff]
    %v255 = vld [vmem:[%s0 + $0x240] sm:$0xff]
    %328 = vrot.lane.b32.xlu0 %v184, 3
    %v329 = vpop.permute.xlu0 %328
    %330 = vrot.lane.b32.xlu0 %v185, 3
    %v331 = vpop.permute.xlu0 %330
    %332 = vrot.lane.b32.xlu0 %v186, 3
    %v333 = vpop.permute.xlu0 %332
    %334 = vrot.lane.b32.xlu0 %v187, 3
    %v335 = vpop.permute.xlu0 %334
    %336 = vrot.lane.b32.xlu0 %v188, 3
    %v337 = vpop.permute.xlu0 %336
    %338 = vrot.lane.b32.xlu0 %v189, 3
    %v339 = vpop.permute.xlu0 %338
    %340 = vrot.lane.b32.xlu0 %v190, 3
    %v341 = vpop.permute.xlu0 %340
    %342 = vrot.lane.b32.xlu0 %v191, 3
    %v343 = vpop.permute.xlu0 %342
    %344 = vrot.lane.b32.xlu0 %v192, 3
    %v345 = vpop.permute.xlu0 %344
    %346 = vrot.lane.b32.xlu0 %v193, 3
    %v347 = vpop.permute.xlu0 %346
    %348 = vrot.lane.b32.xlu0 %v194, 3
    %v349 = vpop.permute.xlu0 %348
    %350 = vrot.lane.b32.xlu0 %v195, 3
    %v351 = vpop.permute.xlu0 %350
    %352 = vrot.lane.b32.xlu0 %v196, 3
    %v353 = vpop.permute.xlu0 %352
    %354 = vrot.lane.b32.xlu0 %v197, 3
    %v355 = vpop.permute.xlu0 %354
    %356 = vrot.lane.b32.xlu0 %v198, 3
    %v357 = vpop.permute.xlu0 %356
    %358 = vrot.lane.b32.xlu0 %v199, 3
    %v359 = vpop.permute.xlu0 %358
    %360 = vrot.lane.b32.xlu0 %v200, 3
    %v361 = vpop.permute.xlu0 %360
    %362 = vrot.lane.b32.xlu0 %v201, 3
    %v363 = vpop.permute.xlu0 %362
    %364 = vrot.lane.b32.xlu0 %v202, 3
    %v365 = vpop.permute.xlu0 %364
    %366 = vrot.lane.b32.xlu0 %v203, 3
    %v367 = vpop.permute.xlu0 %366
    %368 = vrot.lane.b32.xlu0 %v204, 3
    %v369 = vpop.permute.xlu0 %368
    %370 = vrot.lane.b32.xlu0 %v205, 3
    %v371 = vpop.permute.xlu0 %370
    %372 = vrot.lane.b32.xlu0 %v206, 3
    %v373 = vpop.permute.xlu0 %372
    %374 = vrot.lane.b32.xlu0 %v207, 3
    %v375 = vpop.permute.xlu0 %374
    %376 = vrot.lane.b32.xlu0 %v208, 3
    %v377 = vpop.permute.xlu0 %376
    %378 = vrot.lane.b32.xlu0 %v209, 3
    %v379 = vpop.permute.xlu0 %378
    %380 = vrot.lane.b32.xlu0 %v210, 3
    %v381 = vpop.permute.xlu0 %380
    %382 = vrot.lane.b32.xlu0 %v211, 3
    %v383 = vpop.permute.xlu0 %382
    %384 = vrot.lane.b32.xlu0 %v212, 3
    %v385 = vpop.permute.xlu0 %384
    %386 = vrot.lane.b32.xlu0 %v213, 3
    %v387 = vpop.permute.xlu0 %386
    %388 = vrot.lane.b32.xlu0 %v214, 3
    %v389 = vpop.permute.xlu0 %388
    %390 = vrot.lane.b32.xlu0 %v215, 3
    %v391 = vpop.permute.xlu0 %390
    %392 = vrot.lane.b32.xlu0 %v216, 3
    %v393 = vpop.permute.xlu0 %392
    %394 = vrot.lane.b32.xlu0 %v217, 3
    %v395 = vpop.permute.xlu0 %394
    %396 = vrot.lane.b32.xlu0 %v218, 3
    %v397 = vpop.permute.xlu0 %396
    %398 = vrot.lane.b32.xlu0 %v219, 3
    %v399 = vpop.permute.xlu0 %398
    %400 = vrot.lane.b32.xlu0 %v220, 3
    %v401 = vpop.permute.xlu0 %400
    %402 = vrot.lane.b32.xlu0 %v221, 3
    %v403 = vpop.permute.xlu0 %402
    %404 = vrot.lane.b32.xlu0 %v222, 3
    %v405 = vpop.permute.xlu0 %404
    %406 = vrot.lane.b32.xlu0 %v223, 3
    %v407 = vpop.permute.xlu0 %406
    %408 = vrot.lane.b32.xlu0 %v224, 3
    %v409 = vpop.permute.xlu0 %408
    %410 = vrot.lane.b32.xlu0 %v225, 3
    %v411 = vpop.permute.xlu0 %410
    %412 = vrot.lane.b32.xlu0 %v226, 3
    %v413 = vpop.permute.xlu0 %412
    %414 = vrot.lane.b32.xlu0 %v227, 3
    %v415 = vpop.permute.xlu0 %414
    %416 = vrot.lane.b32.xlu0 %v228, 3
    %v417 = vpop.permute.xlu0 %416
    %418 = vrot.lane.b32.xlu0 %v229, 3
    %v419 = vpop.permute.xlu0 %418
    %420 = vrot.lane.b32.xlu0 %v230, 3
    %v421 = vpop.permute.xlu0 %420
    %422 = vrot.lane.b32.xlu0 %v231, 3
    %v423 = vpop.permute.xlu0 %422
    %424 = vrot.lane.b32.xlu0 %v232, 3
    %v425 = vpop.permute.xlu0 %424
    %426 = vrot.lane.b32.xlu0 %v233, 3
    %v427 = vpop.permute.xlu0 %426
    %428 = vrot.lane.b32.xlu0 %v234, 3
    %v429 = vpop.permute.xlu0 %428
    %430 = vrot.lane.b32.xlu0 %v235, 3
    %v431 = vpop.permute.xlu0 %430
    %432 = vrot.lane.b32.xlu0 %v236, 3
    %v433 = vpop.permute.xlu0 %432
    %434 = vrot.lane.b32.xlu0 %v237, 3
    %v435 = vpop.permute.xlu0 %434
    %436 = vrot.lane.b32.xlu0 %v238, 3
    %v437 = vpop.permute.xlu0 %436
    %438 = vrot.lane.b32.xlu0 %v239, 3
    %v439 = vpop.permute.xlu0 %438
    %440 = vrot.lane.b32.xlu0 %v240, 3
    %v441 = vpop.permute.xlu0 %440
    %442 = vrot.lane.b32.xlu0 %v241, 3
    %v443 = vpop.permute.xlu0 %442
    %444 = vrot.lane.b32.xlu0 %v242, 3
    %v445 = vpop.permute.xlu0 %444
    %446 = vrot.lane.b32.xlu0 %v243, 3
    %v447 = vpop.permute.xlu0 %446
    %448 = vrot.lane.b32.xlu0 %v244, 3
    %v449 = vpop.permute.xlu0 %448
    %450 = vrot.lane.b32.xlu0 %v245, 3
    %v451 = vpop.permute.xlu0 %450
    %452 = vrot.lane.b32.xlu0 %v246, 3
    %v453 = vpop.permute.xlu0 %452
    %454 = vrot.lane.b32.xlu0 %v247, 3
    %v455 = vpop.permute.xlu0 %454
    %456 = vrot.lane.b32.xlu0 %v248, 3
    %v457 = vpop.permute.xlu0 %456
    %458 = vrot.lane.b32.xlu0 %v249, 3
    %v459 = vpop.permute.xlu0 %458
    %460 = vrot.lane.b32.xlu0 %v250, 3
    %v461 = vpop.permute.xlu0 %460
    %462 = vrot.lane.b32.xlu0 %v251, 3
    %v463 = vpop.permute.xlu0 %462
    %464 = vrot.lane.b32.xlu0 %v252, 3
    %v465 = vpop.permute.xlu0 %464
    %466 = vrot.lane.b32.xlu0 %v253, 3
    %v467 = vpop.permute.xlu0 %466
    %468 = vrot.lane.b32.xlu0 %v254, 3
    %v469 = vpop.permute.xlu0 %468
    %470 = vrot.lane.b32.xlu0 %v255, 3
    %v471 = vpop.permute.xlu0 %470
    %vm544 = vcmask 48152
    %545 = vst.msk [vmem:[#allocation2] sm:$0xff] %vm544, %v329
    %546 = vst.msk [vmem:[#allocation2 + $0x8] sm:$0xff] %vm544, %v331
    %547 = vst.msk [vmem:[#allocation2 + $0x10] sm:$0xff] %vm544, %v333
    %548 = vst.msk [vmem:[#allocation2 + $0x18] sm:$0xff] %vm544, %v335
    %549 = vst.msk [vmem:[#allocation2 + $0x20] sm:$0xff] %vm544, %v337
    %550 = vst.msk [vmem:[#allocation2 + $0x28] sm:$0xff] %vm544, %v339
    %551 = vst.msk [vmem:[#allocation2 + $0x30] sm:$0xff] %vm544, %v341
    %552 = vst.msk [vmem:[#allocation2 + $0x38] sm:$0xff] %vm544, %v343
    %553 = vst.msk [vmem:[#allocation2 + $0x40] sm:$0xff] %vm544, %v345
    %554 = vst.msk [vmem:[#allocation2 + $0x48] sm:$0xff] %vm544, %v347
    %555 = vst.msk [vmem:[#allocation2 + $0x50] sm:$0xff] %vm544, %v349
    %556 = vst.msk [vmem:[#allocation2 + $0x58] sm:$0xff] %vm544, %v351
    %557 = vst.msk [vmem:[#allocation2 + $0x60] sm:$0xff] %vm544, %v353
    %558 = vst.msk [vmem:[#allocation2 + $0x68] sm:$0xff] %vm544, %v355
    %559 = vst.msk [vmem:[#allocation2 + $0x70] sm:$0xff] %vm544, %v357
    %560 = vst.msk [vmem:[#allocation2 + $0x78] sm:$0xff] %vm544, %v359
    %561 = vst.msk [vmem:[#allocation2 + $0x80] sm:$0xff] %vm544, %v361
    %562 = vst.msk [vmem:[#allocation2 + $0x88] sm:$0xff] %vm544, %v363
    %563 = vst.msk [vmem:[#allocation2 + $0x90] sm:$0xff] %vm544, %v365
    %564 = vst.msk [vmem:[#allocation2 + $0x98] sm:$0xff] %vm544, %v367
    %565 = vst.msk [vmem:[#allocation2 + $0xa0] sm:$0xff] %vm544, %v369
    %566 = vst.msk [vmem:[#allocation2 + $0xa8] sm:$0xff] %vm544, %v371
    %567 = vst.msk [vmem:[#allocation2 + $0xb0] sm:$0xff] %vm544, %v373
    %568 = vst.msk [vmem:[#allocation2 + $0xb8] sm:$0xff] %vm544, %v375
    %569 = vst.msk [vmem:[#allocation2 + $0xc0] sm:$0xff] %vm544, %v377
    %570 = vst.msk [vmem:[#allocation2 + $0xc8] sm:$0xff] %vm544, %v379
    %571 = vst.msk [vmem:[#allocation2 + $0xd0] sm:$0xff] %vm544, %v381
    %572 = vst.msk [vmem:[#allocation2 + $0xd8] sm:$0xff] %vm544, %v383
    %573 = vst.msk [vmem:[#allocation2 + $0xe0] sm:$0xff] %vm544, %v385
    %574 = vst.msk [vmem:[#allocation2 + $0xe8] sm:$0xff] %vm544, %v387
    %575 = vst.msk [vmem:[#allocation2 + $0xf0] sm:$0xff] %vm544, %v389
    %576 = vst.msk [vmem:[#allocation2 + $0xf8] sm:$0xff] %vm544, %v391
    %577 = vst.msk [vmem:[#allocation2 + $0x100] sm:$0xff] %vm544, %v393
    %578 = vst.msk [vmem:[#allocation2 + $0x108] sm:$0xff] %vm544, %v395
    %579 = vst.msk [vmem:[#allocation2 + $0x110] sm:$0xff] %vm544, %v397
    %580 = vst.msk [vmem:[#allocation2 + $0x118] sm:$0xff] %vm544, %v399
    %581 = vst.msk [vmem:[#allocation2 + $0x120] sm:$0xff] %vm544, %v401
    %582 = vst.msk [vmem:[#allocation2 + $0x128] sm:$0xff] %vm544, %v403
    %583 = vst.msk [vmem:[#allocation2 + $0x130] sm:$0xff] %vm544, %v405
    %584 = vst.msk [vmem:[#allocation2 + $0x138] sm:$0xff] %vm544, %v407
    %585 = vst.msk [vmem:[#allocation2 + $0x140] sm:$0xff] %vm544, %v409
    %586 = vst.msk [vmem:[#allocation2 + $0x148] sm:$0xff] %vm544, %v411
    %587 = vst.msk [vmem:[#allocation2 + $0x150] sm:$0xff] %vm544, %v413
    %588 = vst.msk [vmem:[#allocation2 + $0x158] sm:$0xff] %vm544, %v415
    %589 = vst.msk [vmem:[#allocation2 + $0x160] sm:$0xff] %vm544, %v417
    %590 = vst.msk [vmem:[#allocation2 + $0x168] sm:$0xff] %vm544, %v419
    %591 = vst.msk [vmem:[#allocation2 + $0x170] sm:$0xff] %vm544, %v421
    %592 = vst.msk [vmem:[#allocation2 + $0x178] sm:$0xff] %vm544, %v423
    %593 = vst.msk [vmem:[#allocation2 + $0x180] sm:$0xff] %vm544, %v425
    %594 = vst.msk [vmem:[#allocation2 + $0x188] sm:$0xff] %vm544, %v427
    %595 = vst.msk [vmem:[#allocation2 + $0x190] sm:$0xff] %vm544, %v429
    %596 = vst.msk [vmem:[#allocation2 + $0x198] sm:$0xff] %vm544, %v431
    %597 = vst.msk [vmem:[#allocation2 + $0x1a0] sm:$0xff] %vm544, %v433
    %598 = vst.msk [vmem:[#allocation2 + $0x1a8] sm:$0xff] %vm544, %v435
    %599 = vst.msk [vmem:[#allocation2 + $0x1b0] sm:$0xff] %vm544, %v437
    %600 = vst.msk [vmem:[#allocation2 + $0x1b8] sm:$0xff] %vm544, %v439
    %601 = vst.msk [vmem:[#allocation2 + $0x1c0] sm:$0xff] %vm544, %v441
    %602 = vst.msk [vmem:[#allocation2 + $0x1c8] sm:$0xff] %vm544, %v443
    %603 = vst.msk [vmem:[#allocation2 + $0x1d0] sm:$0xff] %vm544, %v445
    %604 = vst.msk [vmem:[#allocation2 + $0x1d8] sm:$0xff] %vm544, %v447
    %605 = vst.msk [vmem:[#allocation2 + $0x1e0] sm:$0xff] %vm544, %v449
    %606 = vst.msk [vmem:[#allocation2 + $0x1e8] sm:$0xff] %vm544, %v451
    %607 = vst.msk [vmem:[#allocation2 + $0x1f0] sm:$0xff] %vm544, %v453
    %608 = vst.msk [vmem:[#allocation2 + $0x1f8] sm:$0xff] %vm544, %v455
    %609 = vst.msk [vmem:[#allocation2 + $0x200] sm:$0xff] %vm544, %v457
    %610 = vst.msk [vmem:[#allocation2 + $0x208] sm:$0xff] %vm544, %v459
    %611 = vst.msk [vmem:[#allocation2 + $0x210] sm:$0xff] %vm544, %v461
    %612 = vst.msk [vmem:[#allocation2 + $0x218] sm:$0xff] %vm544, %v463
    %613 = vst.msk [vmem:[#allocation2 + $0x220] sm:$0xff] %vm544, %v465
    %614 = vst.msk [vmem:[#allocation2 + $0x228] sm:$0xff] %vm544, %v467
    %615 = vst.msk [vmem:[#allocation2 + $0x230] sm:$0xff] %vm544, %v469
    %616 = vst.msk [vmem:[#allocation2 + $0x238] sm:$0xff] %vm544, %v471
    %v617 = vld [vmem:[%s0 + $0x48] sm:$0xff]
    %v618 = vld [vmem:[%s0 + $0x50] sm:$0xff]
    %v619 = vld [vmem:[%s0 + $0x58] sm:$0xff]
    %v620 = vld [vmem:[%s0 + $0x60] sm:$0xff]
    %v621 = vld [vmem:[%s0 + $0x68] sm:$0xff]
    %v622 = vld [vmem:[%s0 + $0x70] sm:$0xff]
    %v623 = vld [vmem:[%s0 + $0x78] sm:$0xff]
    %v624 = vld [vmem:[%s0 + $0x80] sm:$0xff]
    %v625 = vld [vmem:[%s0 + $0x88] sm:$0xff]
    %v626 = vld [vmem:[%s0 + $0x90] sm:$0xff]
    %v627 = vld [vmem:[%s0 + $0x98] sm:$0xff]
    %v628 = vld [vmem:[%s0 + $0xa0] sm:$0xff]
    %v629 = vld [vmem:[%s0 + $0xa8] sm:$0xff]
    %v630 = vld [vmem:[%s0 + $0xb0] sm:$0xff]
    %v631 = vld [vmem:[%s0 + $0xb8] sm:$0xff]
    %v632 = vld [vmem:[%s0 + $0xc0] sm:$0xff]
    %v633 = vld [vmem:[%s0 + $0xc8] sm:$0xff]
    %v634 = vld [vmem:[%s0 + $0xd0] sm:$0xff]
    %v635 = vld [vmem:[%s0 + $0xd8] sm:$0xff]
    %v636 = vld [vmem:[%s0 + $0xe0] sm:$0xff]
    %v637 = vld [vmem:[%s0 + $0xe8] sm:$0xff]
    %v638 = vld [vmem:[%s0 + $0xf0] sm:$0xff]
    %v639 = vld [vmem:[%s0 + $0xf8] sm:$0xff]
    %v640 = vld [vmem:[%s0 + $0x100] sm:$0xff]
    %v641 = vld [vmem:[%s0 + $0x108] sm:$0xff]
    %v642 = vld [vmem:[%s0 + $0x110] sm:$0xff]
    %v643 = vld [vmem:[%s0 + $0x118] sm:$0xff]
    %v644 = vld [vmem:[%s0 + $0x120] sm:$0xff]
    %v645 = vld [vmem:[%s0 + $0x128] sm:$0xff]
    %v646 = vld [vmem:[%s0 + $0x130] sm:$0xff]
    %v647 = vld [vmem:[%s0 + $0x138] sm:$0xff]
    %v648 = vld [vmem:[%s0 + $0x140] sm:$0xff]
    %v649 = vld [vmem:[%s0 + $0x148] sm:$0xff]
    %v650 = vld [vmem:[%s0 + $0x150] sm:$0xff]
    %v651 = vld [vmem:[%s0 + $0x158] sm:$0xff]
    %v652 = vld [vmem:[%s0 + $0x160] sm:$0xff]
    %v653 = vld [vmem:[%s0 + $0x168] sm:$0xff]
    %v654 = vld [vmem:[%s0 + $0x170] sm:$0xff]
    %v655 = vld [vmem:[%s0 + $0x178] sm:$0xff]
    %v656 = vld [vmem:[%s0 + $0x180] sm:$0xff]
    %v657 = vld [vmem:[%s0 + $0x188] sm:$0xff]
    %v658 = vld [vmem:[%s0 + $0x190] sm:$0xff]
    %v659 = vld [vmem:[%s0 + $0x198] sm:$0xff]
    %v660 = vld [vmem:[%s0 + $0x1a0] sm:$0xff]
    %v661 = vld [vmem:[%s0 + $0x1a8] sm:$0xff]
    %v662 = vld [vmem:[%s0 + $0x1b0] sm:$0xff]
    %v663 = vld [vmem:[%s0 + $0x1b8] sm:$0xff]
    %v664 = vld [vmem:[%s0 + $0x1c0] sm:$0xff]
    %v665 = vld [vmem:[%s0 + $0x1c8] sm:$0xff]
    %v666 = vld [vmem:[%s0 + $0x1d0] sm:$0xff]
    %v667 = vld [vmem:[%s0 + $0x1d8] sm:$0xff]
    %v668 = vld [vmem:[%s0 + $0x1e0] sm:$0xff]
    %v669 = vld [vmem:[%s0 + $0x1e8] sm:$0xff]
    %v670 = vld [vmem:[%s0 + $0x1f0] sm:$0xff]
    %v671 = vld [vmem:[%s0 + $0x1f8] sm:$0xff]
    %v672 = vld [vmem:[%s0 + $0x200] sm:$0xff]
    %v673 = vld [vmem:[%s0 + $0x208] sm:$0xff]
    %v674 = vld [vmem:[%s0 + $0x210] sm:$0xff]
    %v675 = vld [vmem:[%s0 + $0x218] sm:$0xff]
    %v676 = vld [vmem:[%s0 + $0x220] sm:$0xff]
    %v677 = vld [vmem:[%s0 + $0x228] sm:$0xff]
    %v678 = vld [vmem:[%s0 + $0x230] sm:$0xff]
    %v679 = vld [vmem:[%s0 + $0x238] sm:$0xff]
    %v680 = vld [vmem:[%s0 + $0x240] sm:$0xff]
    %v681 = vld [vmem:[%s0 + $0x248] sm:$0xff]
    %v682 = vld [vmem:[%s0 + $0x250] sm:$0xff]
    %v683 = vld [vmem:[%s0 + $0x258] sm:$0xff]
    %v684 = vld [vmem:[%s0 + $0x260] sm:$0xff]
    %v685 = vld [vmem:[%s0 + $0x268] sm:$0xff]
    %v686 = vld [vmem:[%s0 + $0x270] sm:$0xff]
    %v687 = vld [vmem:[%s0 + $0x278] sm:$0xff]
    %v688 = vld [vmem:[%s0 + $0x280] sm:$0xff]
    %761 = vrot.lane.b32.xlu0 %v617, 6
    %v762 = vpop.permute.xlu0 %761
    %763 = vrot.lane.b32.xlu0 %v618, 6
    %v764 = vpop.permute.xlu0 %763
    %765 = vrot.lane.b32.xlu0 %v619, 6
    %v766 = vpop.permute.xlu0 %765
    %767 = vrot.lane.b32.xlu0 %v620, 6
    %v768 = vpop.permute.xlu0 %767
    %769 = vrot.lane.b32.xlu0 %v621, 6
    %v770 = vpop.permute.xlu0 %769
    %771 = vrot.lane.b32.xlu0 %v622, 6
    %v772 = vpop.permute.xlu0 %771
    %773 = vrot.lane.b32.xlu0 %v623, 6
    %v774 = vpop.permute.xlu0 %773
    %775 = vrot.lane.b32.xlu0 %v624, 6
    %v776 = vpop.permute.xlu0 %775
    %777 = vrot.lane.b32.xlu0 %v625, 6
    %v778 = vpop.permute.xlu0 %777
    %779 = vrot.lane.b32.xlu0 %v626, 6
    %v780 = vpop.permute.xlu0 %779
    %781 = vrot.lane.b32.xlu0 %v627, 6
    %v782 = vpop.permute.xlu0 %781
    %783 = vrot.lane.b32.xlu0 %v628, 6
    %v784 = vpop.permute.xlu0 %783
    %785 = vrot.lane.b32.xlu0 %v629, 6
    %v786 = vpop.permute.xlu0 %785
    %787 = vrot.lane.b32.xlu0 %v630, 6
    %v788 = vpop.permute.xlu0 %787
    %789 = vrot.lane.b32.xlu0 %v631, 6
    %v790 = vpop.permute.xlu0 %789
    %791 = vrot.lane.b32.xlu0 %v632, 6
    %v792 = vpop.permute.xlu0 %791
    %793 = vrot.lane.b32.xlu0 %v633, 6
    %v794 = vpop.permute.xlu0 %793
    %795 = vrot.lane.b32.xlu0 %v634, 6
    %v796 = vpop.permute.xlu0 %795
    %797 = vrot.lane.b32.xlu0 %v635, 6
    %v798 = vpop.permute.xlu0 %797
    %799 = vrot.lane.b32.xlu0 %v636, 6
    %v800 = vpop.permute.xlu0 %799
    %801 = vrot.lane.b32.xlu0 %v637, 6
    %v802 = vpop.permute.xlu0 %801
    %803 = vrot.lane.b32.xlu0 %v638, 6
    %v804 = vpop.permute.xlu0 %803
    %805 = vrot.lane.b32.xlu0 %v639, 6
    %v806 = vpop.permute.xlu0 %805
    %807 = vrot.lane.b32.xlu0 %v640, 6
    %v808 = vpop.permute.xlu0 %807
    %809 = vrot.lane.b32.xlu0 %v641, 6
    %v810 = vpop.permute.xlu0 %809
    %811 = vrot.lane.b32.xlu0 %v642, 6
    %v812 = vpop.permute.xlu0 %811
    %813 = vrot.lane.b32.xlu0 %v643, 6
    %v814 = vpop.permute.xlu0 %813
    %815 = vrot.lane.b32.xlu0 %v644, 6
    %v816 = vpop.permute.xlu0 %815
    %817 = vrot.lane.b32.xlu0 %v645, 6
    %v818 = vpop.permute.xlu0 %817
    %819 = vrot.lane.b32.xlu0 %v646, 6
    %v820 = vpop.permute.xlu0 %819
    %821 = vrot.lane.b32.xlu0 %v647, 6
    %v822 = vpop.permute.xlu0 %821
    %823 = vrot.lane.b32.xlu0 %v648, 6
    %v824 = vpop.permute.xlu0 %823
    %825 = vrot.lane.b32.xlu0 %v649, 6
    %v826 = vpop.permute.xlu0 %825
    %827 = vrot.lane.b32.xlu0 %v650, 6
    %v828 = vpop.permute.xlu0 %827
    %829 = vrot.lane.b32.xlu0 %v651, 6
    %v830 = vpop.permute.xlu0 %829
    %831 = vrot.lane.b32.xlu0 %v652, 6
    %v832 = vpop.permute.xlu0 %831
    %833 = vrot.lane.b32.xlu0 %v653, 6
    %v834 = vpop.permute.xlu0 %833
    %835 = vrot.lane.b32.xlu0 %v654, 6
    %v836 = vpop.permute.xlu0 %835
    %837 = vrot.lane.b32.xlu0 %v655, 6
    %v838 = vpop.permute.xlu0 %837
    %839 = vrot.lane.b32.xlu0 %v656, 6
    %v840 = vpop.permute.xlu0 %839
    %841 = vrot.lane.b32.xlu0 %v657, 6
    %v842 = vpop.permute.xlu0 %841
    %843 = vrot.lane.b32.xlu0 %v658, 6
    %v844 = vpop.permute.xlu0 %843
    %845 = vrot.lane.b32.xlu0 %v659, 6
    %v846 = vpop.permute.xlu0 %845
    %847 = vrot.lane.b32.xlu0 %v660, 6
    %v848 = vpop.permute.xlu0 %847
    %849 = vrot.lane.b32.xlu0 %v661, 6
    %v850 = vpop.permute.xlu0 %849
    %851 = vrot.lane.b32.xlu0 %v662, 6
    %v852 = vpop.permute.xlu0 %851
    %853 = vrot.lane.b32.xlu0 %v663, 6
    %v854 = vpop.permute.xlu0 %853
    %855 = vrot.lane.b32.xlu0 %v664, 6
    %v856 = vpop.permute.xlu0 %855
    %857 = vrot.lane.b32.xlu0 %v665, 6
    %v858 = vpop.permute.xlu0 %857
    %859 = vrot.lane.b32.xlu0 %v666, 6
    %v860 = vpop.permute.xlu0 %859
    %861 = vrot.lane.b32.xlu0 %v667, 6
    %v862 = vpop.permute.xlu0 %861
    %863 = vrot.lane.b32.xlu0 %v668, 6
    %v864 = vpop.permute.xlu0 %863
    %865 = vrot.lane.b32.xlu0 %v669, 6
    %v866 = vpop.permute.xlu0 %865
    %867 = vrot.lane.b32.xlu0 %v670, 6
    %v868 = vpop.permute.xlu0 %867
    %869 = vrot.lane.b32.xlu0 %v671, 6
    %v870 = vpop.permute.xlu0 %869
    %871 = vrot.lane.b32.xlu0 %v672, 6
    %v872 = vpop.permute.xlu0 %871
    %873 = vrot.lane.b32.xlu0 %v673, 6
    %v874 = vpop.permute.xlu0 %873
    %875 = vrot.lane.b32.xlu0 %v674, 6
    %v876 = vpop.permute.xlu0 %875
    %877 = vrot.lane.b32.xlu0 %v675, 6
    %v878 = vpop.permute.xlu0 %877
    %879 = vrot.lane.b32.xlu0 %v676, 6
    %v880 = vpop.permute.xlu0 %879
    %881 = vrot.lane.b32.xlu0 %v677, 6
    %v882 = vpop.permute.xlu0 %881
    %883 = vrot.lane.b32.xlu0 %v678, 6
    %v884 = vpop.permute.xlu0 %883
    %885 = vrot.lane.b32.xlu0 %v679, 6
    %v886 = vpop.permute.xlu0 %885
    %887 = vrot.lane.b32.xlu0 %v680, 6
    %v888 = vpop.permute.xlu0 %887
    %889 = vrot.lane.b32.xlu0 %v681, 6
    %v890 = vpop.permute.xlu0 %889
    %891 = vrot.lane.b32.xlu0 %v682, 6
    %v892 = vpop.permute.xlu0 %891
    %893 = vrot.lane.b32.xlu0 %v683, 6
    %v894 = vpop.permute.xlu0 %893
    %895 = vrot.lane.b32.xlu0 %v684, 6
    %v896 = vpop.permute.xlu0 %895
    %897 = vrot.lane.b32.xlu0 %v685, 6
    %v898 = vpop.permute.xlu0 %897
    %899 = vrot.lane.b32.xlu0 %v686, 6
    %v900 = vpop.permute.xlu0 %899
    %901 = vrot.lane.b32.xlu0 %v687, 6
    %v902 = vpop.permute.xlu0 %901
    %903 = vrot.lane.b32.xlu0 %v688, 6
    %v904 = vpop.permute.xlu0 %903
    %vm977 = vcmask 72752
    %978 = vst.msk [vmem:[#allocation2] sm:$0xff] %vm977, %v762
    %979 = vst.msk [vmem:[#allocation2 + $0x8] sm:$0xff] %vm977, %v764
    %980 = vst.msk [vmem:[#allocation2 + $0x10] sm:$0xff] %vm977, %v766
    %981 = vst.msk [vmem:[#allocation2 + $0x18] sm:$0xff] %vm977, %v768
    %982 = vst.msk [vmem:[#allocation2 + $0x20] sm:$0xff] %vm977, %v770
    %983 = vst.msk [vmem:[#allocation2 + $0x28] sm:$0xff] %vm977, %v772
    %984 = vst.msk [vmem:[#allocation2 + $0x30] sm:$0xff] %vm977, %v774
    %985 = vst.msk [vmem:[#allocation2 + $0x38] sm:$0xff] %vm977, %v776
    %986 = vst.msk [vmem:[#allocation2 + $0x40] sm:$0xff] %vm977, %v778
    %987 = vst.msk [vmem:[#allocation2 + $0x48] sm:$0xff] %vm977, %v780
    %988 = vst.msk [vmem:[#allocation2 + $0x50] sm:$0xff] %vm977, %v782
    %989 = vst.msk [vmem:[#allocation2 + $0x58] sm:$0xff] %vm977, %v784
    %990 = vst.msk [vmem:[#allocation2 + $0x60] sm:$0xff] %vm977, %v786
    %991 = vst.msk [vmem:[#allocation2 + $0x68] sm:$0xff] %vm977, %v788
    %992 = vst.msk [vmem:[#allocation2 + $0x70] sm:$0xff] %vm977, %v790
    %993 = vst.msk [vmem:[#allocation2 + $0x78] sm:$0xff] %vm977, %v792
    %994 = vst.msk [vmem:[#allocation2 + $0x80] sm:$0xff] %vm977, %v794
    %995 = vst.msk [vmem:[#allocation2 + $0x88] sm:$0xff] %vm977, %v796
    %996 = vst.msk [vmem:[#allocation2 + $0x90] sm:$0xff] %vm977, %v798
    %997 = vst.msk [vmem:[#allocation2 + $0x98] sm:$0xff] %vm977, %v800
    %998 = vst.msk [vmem:[#allocation2 + $0xa0] sm:$0xff] %vm977, %v802
    %999 = vst.msk [vmem:[#allocation2 + $0xa8] sm:$0xff] %vm977, %v804
    %1000 = vst.msk [vmem:[#allocation2 + $0xb0] sm:$0xff] %vm977, %v806
    %1001 = vst.msk [vmem:[#allocation2 + $0xb8] sm:$0xff] %vm977, %v808
    %1002 = vst.msk [vmem:[#allocation2 + $0xc0] sm:$0xff] %vm977, %v810
    %1003 = vst.msk [vmem:[#allocation2 + $0xc8] sm:$0xff] %vm977, %v812
    %1004 = vst.msk [vmem:[#allocation2 + $0xd0] sm:$0xff] %vm977, %v814
    %1005 = vst.msk [vmem:[#allocation2 + $0xd8] sm:$0xff] %vm977, %v816
    %1006 = vst.msk [vmem:[#allocation2 + $0xe0] sm:$0xff] %vm977, %v818
    %1007 = vst.msk [vmem:[#allocation2 + $0xe8] sm:$0xff] %vm977, %v820
    %1008 = vst.msk [vmem:[#allocation2 + $0xf0] sm:$0xff] %vm977, %v822
    %1009 = vst.msk [vmem:[#allocation2 + $0xf8] sm:$0xff] %vm977, %v824
    %1010 = vst.msk [vmem:[#allocation2 + $0x100] sm:$0xff] %vm977, %v826
    %1011 = vst.msk [vmem:[#allocation2 + $0x108] sm:$0xff] %vm977, %v828
    %1012 = vst.msk [vmem:[#allocation2 + $0x110] sm:$0xff] %vm977, %v830
    %1013 = vst.msk [vmem:[#allocation2 + $0x118] sm:$0xff] %vm977, %v832
    %1014 = vst.msk [vmem:[#allocation2 + $0x120] sm:$0xff] %vm977, %v834
    %1015 = vst.msk [vmem:[#allocation2 + $0x128] sm:$0xff] %vm977, %v836
    %1016 = vst.msk [vmem:[#allocation2 + $0x130] sm:$0xff] %vm977, %v838
    %1017 = vst.msk [vmem:[#allocation2 + $0x138] sm:$0xff] %vm977, %v840
    %1018 = vst.msk [vmem:[#allocation2 + $0x140] sm:$0xff] %vm977, %v842
    %1019 = vst.msk [vmem:[#allocation2 + $0x148] sm:$0xff] %vm977, %v844
    %1020 = vst.msk [vmem:[#allocation2 + $0x150] sm:$0xff] %vm977, %v846
    %1021 = vst.msk [vmem:[#allocation2 + $0x158] sm:$0xff] %vm977, %v848
    %1022 = vst.msk [vmem:[#allocation2 + $0x160] sm:$0xff] %vm977, %v850
    %1023 = vst.msk [vmem:[#allocation2 + $0x168] sm:$0xff] %vm977, %v852
    %1024 = vst.msk [vmem:[#allocation2 + $0x170] sm:$0xff] %vm977, %v854
    %1025 = vst.msk [vmem:[#allocation2 + $0x178] sm:$0xff] %vm977, %v856
    %1026 = vst.msk [vmem:[#allocation2 + $0x180] sm:$0xff] %vm977, %v858
    %1027 = vst.msk [vmem:[#allocation2 + $0x188] sm:$0xff] %vm977, %v860
    %1028 = vst.msk [vmem:[#allocation2 + $0x190] sm:$0xff] %vm977, %v862
    %1029 = vst.msk [vmem:[#allocation2 + $0x198] sm:$0xff] %vm977, %v864
    %1030 = vst.msk [vmem:[#allocation2 + $0x1a0] sm:$0xff] %vm977, %v866
    %1031 = vst.msk [vmem:[#allocation2 + $0x1a8] sm:$0xff] %vm977, %v868
    %1032 = vst.msk [vmem:[#allocation2 + $0x1b0] sm:$0xff] %vm977, %v870
    %1033 = vst.msk [vmem:[#allocation2 + $0x1b8] sm:$0xff] %vm977, %v872
    %1034 = vst.msk [vmem:[#allocation2 + $0x1c0] sm:$0xff] %vm977, %v874
    %1035 = vst.msk [vmem:[#allocation2 + $0x1c8] sm:$0xff] %vm977, %v876
    %1036 = vst.msk [vmem:[#allocation2 + $0x1d0] sm:$0xff] %vm977, %v878
    %1037 = vst.msk [vmem:[#allocation2 + $0x1d8] sm:$0xff] %vm977, %v880
    %1038 = vst.msk [vmem:[#allocation2 + $0x1e0] sm:$0xff] %vm977, %v882
    %1039 = vst.msk [vmem:[#allocation2 + $0x1e8] sm:$0xff] %vm977, %v884
    %1040 = vst.msk [vmem:[#allocation2 + $0x1f0] sm:$0xff] %vm977, %v886
    %1041 = vst.msk [vmem:[#allocation2 + $0x1f8] sm:$0xff] %vm977, %v888
    %1042 = vst.msk [vmem:[#allocation2 + $0x200] sm:$0xff] %vm977, %v890
    %1043 = vst.msk [vmem:[#allocation2 + $0x208] sm:$0xff] %vm977, %v892
    %1044 = vst.msk [vmem:[#allocation2 + $0x210] sm:$0xff] %vm977, %v894
    %1045 = vst.msk [vmem:[#allocation2 + $0x218] sm:$0xff] %vm977, %v896
    %1046 = vst.msk [vmem:[#allocation2 + $0x220] sm:$0xff] %vm977, %v898
    %1047 = vst.msk [vmem:[#allocation2 + $0x228] sm:$0xff] %vm977, %v900
    %1048 = vst.msk [vmem:[#allocation2 + $0x230] sm:$0xff] %vm977, %v902
    %1049 = vst.msk [vmem:[#allocation2 + $0x238] sm:$0xff] %vm977, %v904
    %v1050 = vld [vmem:[%s0 + $0x50] sm:$0xff]
    %v1051 = vld [vmem:[%s0 + $0x58] sm:$0xff]
    %v1052 = vld [vmem:[%s0 + $0x60] sm:$0xff]
    %v1053 = vld [vmem:[%s0 + $0x68] sm:$0xff]
    %v1054 = vld [vmem:[%s0 + $0x70] sm:$0xff]
    %v1055 = vld [vmem:[%s0 + $0x78] sm:$0xff]
    %v1056 = vld [vmem:[%s0 + $0x80] sm:$0xff]
    %v1057 = vld [vmem:[%s0 + $0x88] sm:$0xff]
    %v1058 = vld [vmem:[%s0 + $0x90] sm:$0xff]
    %v1059 = vld [vmem:[%s0 + $0x98] sm:$0xff]
    %v1060 = vld [vmem:[%s0 + $0xa0] sm:$0xff]
    %v1061 = vld [vmem:[%s0 + $0xa8] sm:$0xff]
    %v1062 = vld [vmem:[%s0 + $0xb0] sm:$0xff]
    %v1063 = vld [vmem:[%s0 + $0xb8] sm:$0xff]
    %v1064 = vld [vmem:[%s0 + $0xc0] sm:$0xff]
    %v1065 = vld [vmem:[%s0 + $0xc8] sm:$0xff]
    %v1066 = vld [vmem:[%s0 + $0xd0] sm:$0xff]
    %v1067 = vld [vmem:[%s0 + $0xd8] sm:$0xff]
    %v1068 = vld [vmem:[%s0 + $0xe0] sm:$0xff]
    %v1069 = vld [vmem:[%s0 + $0xe8] sm:$0xff]
    %v1070 = vld [vmem:[%s0 + $0xf0] sm:$0xff]
    %v1071 = vld [vmem:[%s0 + $0xf8] sm:$0xff]
    %v1072 = vld [vmem:[%s0 + $0x100] sm:$0xff]
    %v1073 = vld [vmem:[%s0 + $0x108] sm:$0xff]
    %v1074 = vld [vmem:[%s0 + $0x110] sm:$0xff]
    %v1075 = vld [vmem:[%s0 + $0x118] sm:$0xff]
    %v1076 = vld [vmem:[%s0 + $0x120] sm:$0xff]
    %v1077 = vld [vmem:[%s0 + $0x128] sm:$0xff]
    %v1078 = vld [vmem:[%s0 + $0x130] sm:$0xff]
    %v1079 = vld [vmem:[%s0 + $0x138] sm:$0xff]
    %v1080 = vld [vmem:[%s0 + $0x140] sm:$0xff]
    %v1081 = vld [vmem:[%s0 + $0x148] sm:$0xff]
    %v1082 = vld [vmem:[%s0 + $0x150] sm:$0xff]
    %v1083 = vld [vmem:[%s0 + $0x158] sm:$0xff]
    %v1084 = vld [vmem:[%s0 + $0x160] sm:$0xff]
    %v1085 = vld [vmem:[%s0 + $0x168] sm:$0xff]
    %v1086 = vld [vmem:[%s0 + $0x170] sm:$0xff]
    %v1087 = vld [vmem:[%s0 + $0x178] sm:$0xff]
    %v1088 = vld [vmem:[%s0 + $0x180] sm:$0xff]
    %v1089 = vld [vmem:[%s0 + $0x188] sm:$0xff]
    %v1090 = vld [vmem:[%s0 + $0x190] sm:$0xff]
    %v1091 = vld [vmem:[%s0 + $0x198] sm:$0xff]
    %v1092 = vld [vmem:[%s0 + $0x1a0] sm:$0xff]
    %v1093 = vld [vmem:[%s0 + $0x1a8] sm:$0xff]
    %v1094 = vld [vmem:[%s0 + $0x1b0] sm:$0xff]
    %v1095 = vld [vmem:[%s0 + $0x1b8] sm:$0xff]
    %v1096 = vld [vmem:[%s0 + $0x1c0] sm:$0xff]
    %v1097 = vld [vmem:[%s0 + $0x1c8] sm:$0xff]
    %v1098 = vld [vmem:[%s0 + $0x1d0] sm:$0xff]
    %v1099 = vld [vmem:[%s0 + $0x1d8] sm:$0xff]
    %v1100 = vld [vmem:[%s0 + $0x1e0] sm:$0xff]
    %v1101 = vld [vmem:[%s0 + $0x1e8] sm:$0xff]
    %v1102 = vld [vmem:[%s0 + $0x1f0] sm:$0xff]
    %v1103 = vld [vmem:[%s0 + $0x1f8] sm:$0xff]
    %v1104 = vld [vmem:[%s0 + $0x200] sm:$0xff]
    %v1105 = vld [vmem:[%s0 + $0x208] sm:$0xff]
    %v1106 = vld [vmem:[%s0 + $0x210] sm:$0xff]
    %v1107 = vld [vmem:[%s0 + $0x218] sm:$0xff]
    %v1108 = vld [vmem:[%s0 + $0x220] sm:$0xff]
    %v1109 = vld [vmem:[%s0 + $0x228] sm:$0xff]
    %v1110 = vld [vmem:[%s0 + $0x230] sm:$0xff]
    %v1111 = vld [vmem:[%s0 + $0x238] sm:$0xff]
    %v1112 = vld [vmem:[%s0 + $0x240] sm:$0xff]
    %v1113 = vld [vmem:[%s0 + $0x248] sm:$0xff]
    %v1114 = vld [vmem:[%s0 + $0x250] sm:$0xff]
    %v1115 = vld [vmem:[%s0 + $0x258] sm:$0xff]
    %v1116 = vld [vmem:[%s0 + $0x260] sm:$0xff]
    %v1117 = vld [vmem:[%s0 + $0x268] sm:$0xff]
    %v1118 = vld [vmem:[%s0 + $0x270] sm:$0xff]
    %v1119 = vld [vmem:[%s0 + $0x278] sm:$0xff]
    %v1120 = vld [vmem:[%s0 + $0x280] sm:$0xff]
    %v1121 = vld [vmem:[%s0 + $0x288] sm:$0xff]
    %1194 = vrot.lane.b32.xlu0 %v1050, 9
    %v1195 = vpop.permute.xlu0 %1194
    %1196 = vrot.lane.b32.xlu0 %v1051, 9
    %v1197 = vpop.permute.xlu0 %1196
    %1198 = vrot.lane.b32.xlu0 %v1052, 9
    %v1199 = vpop.permute.xlu0 %1198
    %1200 = vrot.lane.b32.xlu0 %v1053, 9
    %v1201 = vpop.permute.xlu0 %1200
    %1202 = vrot.lane.b32.xlu0 %v1054, 9
    %v1203 = vpop.permute.xlu0 %1202
    %1204 = vrot.lane.b32.xlu0 %v1055, 9
    %v1205 = vpop.permute.xlu0 %1204
    %1206 = vrot.lane.b32.xlu0 %v1056, 9
    %v1207 = vpop.permute.xlu0 %1206
    %1208 = vrot.lane.b32.xlu0 %v1057, 9
    %v1209 = vpop.permute.xlu0 %1208
    %1210 = vrot.lane.b32.xlu0 %v1058, 9
    %v1211 = vpop.permute.xlu0 %1210
    %1212 = vrot.lane.b32.xlu0 %v1059, 9
    %v1213 = vpop.permute.xlu0 %1212
    %1214 = vrot.lane.b32.xlu0 %v1060, 9
    %v1215 = vpop.permute.xlu0 %1214
    %1216 = vrot.lane.b32.xlu0 %v1061, 9
    %v1217 = vpop.permute.xlu0 %1216
    %1218 = vrot.lane.b32.xlu0 %v1062, 9
    %v1219 = vpop.permute.xlu0 %1218
    %1220 = vrot.lane.b32.xlu0 %v1063, 9
    %v1221 = vpop.permute.xlu0 %1220
    %1222 = vrot.lane.b32.xlu0 %v1064, 9
    %v1223 = vpop.permute.xlu0 %1222
    %1224 = vrot.lane.b32.xlu0 %v1065, 9
    %v1225 = vpop.permute.xlu0 %1224
    %1226 = vrot.lane.b32.xlu0 %v1066, 9
    %v1227 = vpop.permute.xlu0 %1226
    %1228 = vrot.lane.b32.xlu0 %v1067, 9
    %v1229 = vpop.permute.xlu0 %1228
    %1230 = vrot.lane.b32.xlu0 %v1068, 9
    %v1231 = vpop.permute.xlu0 %1230
    %1232 = vrot.lane.b32.xlu0 %v1069, 9
    %v1233 = vpop.permute.xlu0 %1232
    %1234 = vrot.lane.b32.xlu0 %v1070, 9
    %v1235 = vpop.permute.xlu0 %1234
    %1236 = vrot.lane.b32.xlu0 %v1071, 9
    %v1237 = vpop.permute.xlu0 %1236
    %1238 = vrot.lane.b32.xlu0 %v1072, 9
    %v1239 = vpop.permute.xlu0 %1238
    %1240 = vrot.lane.b32.xlu0 %v1073, 9
    %v1241 = vpop.permute.xlu0 %1240
    %1242 = vrot.lane.b32.xlu0 %v1074, 9
    %v1243 = vpop.permute.xlu0 %1242
    %1244 = vrot.lane.b32.xlu0 %v1075, 9
    %v1245 = vpop.permute.xlu0 %1244
    %1246 = vrot.lane.b32.xlu0 %v1076, 9
    %v1247 = vpop.permute.xlu0 %1246
    %1248 = vrot.lane.b32.xlu0 %v1077, 9
    %v1249 = vpop.permute.xlu0 %1248
    %1250 = vrot.lane.b32.xlu0 %v1078, 9
    %v1251 = vpop.permute.xlu0 %1250
    %1252 = vrot.lane.b32.xlu0 %v1079, 9
    %v1253 = vpop.permute.xlu0 %1252
    %1254 = vrot.lane.b32.xlu0 %v1080, 9
    %v1255 = vpop.permute.xlu0 %1254
    %1256 = vrot.lane.b32.xlu0 %v1081, 9
    %v1257 = vpop.permute.xlu0 %1256
    %1258 = vrot.lane.b32.xlu0 %v1082, 9
    %v1259 = vpop.permute.xlu0 %1258
    %1260 = vrot.lane.b32.xlu0 %v1083, 9
    %v1261 = vpop.permute.xlu0 %1260
    %1262 = vrot.lane.b32.xlu0 %v1084, 9
    %v1263 = vpop.permute.xlu0 %1262
    %1264 = vrot.lane.b32.xlu0 %v1085, 9
    %v1265 = vpop.permute.xlu0 %1264
    %1266 = vrot.lane.b32.xlu0 %v1086, 9
    %v1267 = vpop.permute.xlu0 %1266
    %1268 = vrot.lane.b32.xlu0 %v1087, 9
    %v1269 = vpop.permute.xlu0 %1268
    %1270 = vrot.lane.b32.xlu0 %v1088, 9
    %v1271 = vpop.permute.xlu0 %1270
    %1272 = vrot.lane.b32.xlu0 %v1089, 9
    %v1273 = vpop.permute.xlu0 %1272
    %1274 = vrot.lane.b32.xlu0 %v1090, 9
    %v1275 = vpop.permute.xlu0 %1274
    %1276 = vrot.lane.b32.xlu0 %v1091, 9
    %v1277 = vpop.permute.xlu0 %1276
    %1278 = vrot.lane.b32.xlu0 %v1092, 9
    %v1279 = vpop.permute.xlu0 %1278
    %1280 = vrot.lane.b32.xlu0 %v1093, 9
    %v1281 = vpop.permute.xlu0 %1280
    %1282 = vrot.lane.b32.xlu0 %v1094, 9
    %v1283 = vpop.permute.xlu0 %1282
    %1284 = vrot.lane.b32.xlu0 %v1095, 9
    %v1285 = vpop.permute.xlu0 %1284
    %1286 = vrot.lane.b32.xlu0 %v1096, 9
    %v1287 = vpop.permute.xlu0 %1286
    %1288 = vrot.lane.b32.xlu0 %v1097, 9
    %v1289 = vpop.permute.xlu0 %1288
    %1290 = vrot.lane.b32.xlu0 %v1098, 9
    %v1291 = vpop.permute.xlu0 %1290
    %1292 = vrot.lane.b32.xlu0 %v1099, 9
    %v1293 = vpop.permute.xlu0 %1292
    %1294 = vrot.lane.b32.xlu0 %v1100, 9
    %v1295 = vpop.permute.xlu0 %1294
    %1296 = vrot.lane.b32.xlu0 %v1101, 9
    %v1297 = vpop.permute.xlu0 %1296
    %1298 = vrot.lane.b32.xlu0 %v1102, 9
    %v1299 = vpop.permute.xlu0 %1298
    %1300 = vrot.lane.b32.xlu0 %v1103, 9
    %v1301 = vpop.permute.xlu0 %1300
    %1302 = vrot.lane.b32.xlu0 %v1104, 9
    %v1303 = vpop.permute.xlu0 %1302
    %1304 = vrot.lane.b32.xlu0 %v1105, 9
    %v1305 = vpop.permute.xlu0 %1304
    %1306 = vrot.lane.b32.xlu0 %v1106, 9
    %v1307 = vpop.permute.xlu0 %1306
    %1308 = vrot.lane.b32.xlu0 %v1107, 9
    %v1309 = vpop.permute.xlu0 %1308
    %1310 = vrot.lane.b32.xlu0 %v1108, 9
    %v1311 = vpop.permute.xlu0 %1310
    %1312 = vrot.lane.b32.xlu0 %v1109, 9
    %v1313 = vpop.permute.xlu0 %1312
    %1314 = vrot.lane.b32.xlu0 %v1110, 9
    %v1315 = vpop.permute.xlu0 %1314
    %1316 = vrot.lane.b32.xlu0 %v1111, 9
    %v1317 = vpop.permute.xlu0 %1316
    %1318 = vrot.lane.b32.xlu0 %v1112, 9
    %v1319 = vpop.permute.xlu0 %1318
    %1320 = vrot.lane.b32.xlu0 %v1113, 9
    %v1321 = vpop.permute.xlu0 %1320
    %1322 = vrot.lane.b32.xlu0 %v1114, 9
    %v1323 = vpop.permute.xlu0 %1322
    %1324 = vrot.lane.b32.xlu0 %v1115, 9
    %v1325 = vpop.permute.xlu0 %1324
    %1326 = vrot.lane.b32.xlu0 %v1116, 9
    %v1327 = vpop.permute.xlu0 %1326
    %1328 = vrot.lane.b32.xlu0 %v1117, 9
    %v1329 = vpop.permute.xlu0 %1328
    %1330 = vrot.lane.b32.xlu0 %v1118, 9
    %v1331 = vpop.permute.xlu0 %1330
    %1332 = vrot.lane.b32.xlu0 %v1119, 9
    %v1333 = vpop.permute.xlu0 %1332
    %1334 = vrot.lane.b32.xlu0 %v1120, 9
    %v1335 = vpop.permute.xlu0 %1334
    %1336 = vrot.lane.b32.xlu0 %v1121, 9
    %v1337 = vpop.permute.xlu0 %1336
    %vm1410 = vcmask 97352
    %1411 = vst.msk [vmem:[#allocation2] sm:$0xff] %vm1410, %v1195
    %1412 = vst.msk [vmem:[#allocation2 + $0x8] sm:$0xff] %vm1410, %v1197
    %1413 = vst.msk [vmem:[#allocation2 + $0x10] sm:$0xff] %vm1410, %v1199
    %1414 = vst.msk [vmem:[#allocation2 + $0x18] sm:$0xff] %vm1410, %v1201
    %1415 = vst.msk [vmem:[#allocation2 + $0x20] sm:$0xff] %vm1410, %v1203
    %1416 = vst.msk [vmem:[#allocation2 + $0x28] sm:$0xff] %vm1410, %v1205
    %1417 = vst.msk [vmem:[#allocation2 + $0x30] sm:$0xff] %vm1410, %v1207
    %1418 = vst.msk [vmem:[#allocation2 + $0x38] sm:$0xff] %vm1410, %v1209
    %1419 = vst.msk [vmem:[#allocation2 + $0x40] sm:$0xff] %vm1410, %v1211
    %1420 = vst.msk [vmem:[#allocation2 + $0x48] sm:$0xff] %vm1410, %v1213
    %1421 = vst.msk [vmem:[#allocation2 + $0x50] sm:$0xff] %vm1410, %v1215
    %1422 = vst.msk [vmem:[#allocation2 + $0x58] sm:$0xff] %vm1410, %v1217
    %1423 = vst.msk [vmem:[#allocation2 + $0x60] sm:$0xff] %vm1410, %v1219
    %1424 = vst.msk [vmem:[#allocation2 + $0x68] sm:$0xff] %vm1410, %v1221
    %1425 = vst.msk [vmem:[#allocation2 + $0x70] sm:$0xff] %vm1410, %v1223
    %1426 = vst.msk [vmem:[#allocation2 + $0x78] sm:$0xff] %vm1410, %v1225
    %1427 = vst.msk [vmem:[#allocation2 + $0x80] sm:$0xff] %vm1410, %v1227
    %1428 = vst.msk [vmem:[#allocation2 + $0x88] sm:$0xff] %vm1410, %v1229
    %1429 = vst.msk [vmem:[#allocation2 + $0x90] sm:$0xff] %vm1410, %v1231
    %1430 = vst.msk [vmem:[#allocation2 + $0x98] sm:$0xff] %vm1410, %v1233
    %1431 = vst.msk [vmem:[#allocation2 + $0xa0] sm:$0xff] %vm1410, %v1235
    %1432 = vst.msk [vmem:[#allocation2 + $0xa8] sm:$0xff] %vm1410, %v1237
    %1433 = vst.msk [vmem:[#allocation2 + $0xb0] sm:$0xff] %vm1410, %v1239
    %1434 = vst.msk [vmem:[#allocation2 + $0xb8] sm:$0xff] %vm1410, %v1241
    %1435 = vst.msk [vmem:[#allocation2 + $0xc0] sm:$0xff] %vm1410, %v1243
    %1436 = vst.msk [vmem:[#allocation2 + $0xc8] sm:$0xff] %vm1410, %v1245
    %1437 = vst.msk [vmem:[#allocation2 + $0xd0] sm:$0xff] %vm1410, %v1247
    %1438 = vst.msk [vmem:[#allocation2 + $0xd8] sm:$0xff] %vm1410, %v1249
    %1439 = vst.msk [vmem:[#allocation2 + $0xe0] sm:$0xff] %vm1410, %v1251
    %1440 = vst.msk [vmem:[#allocation2 + $0xe8] sm:$0xff] %vm1410, %v1253
    %1441 = vst.msk [vmem:[#allocation2 + $0xf0] sm:$0xff] %vm1410, %v1255
    %1442 = vst.msk [vmem:[#allocation2 + $0xf8] sm:$0xff] %vm1410, %v1257
    %1443 = vst.msk [vmem:[#allocation2 + $0x100] sm:$0xff] %vm1410, %v1259
    %1444 = vst.msk [vmem:[#allocation2 + $0x108] sm:$0xff] %vm1410, %v1261
    %1445 = vst.msk [vmem:[#allocation2 + $0x110] sm:$0xff] %vm1410, %v1263
    %1446 = vst.msk [vmem:[#allocation2 + $0x118] sm:$0xff] %vm1410, %v1265
    %1447 = vst.msk [vmem:[#allocation2 + $0x120] sm:$0xff] %vm1410, %v1267
    %1448 = vst.msk [vmem:[#allocation2 + $0x128] sm:$0xff] %vm1410, %v1269
    %1449 = vst.msk [vmem:[#allocation2 + $0x130] sm:$0xff] %vm1410, %v1271
    %1450 = vst.msk [vmem:[#allocation2 + $0x138] sm:$0xff] %vm1410, %v1273
    %1451 = vst.msk [vmem:[#allocation2 + $0x140] sm:$0xff] %vm1410, %v1275
    %1452 = vst.msk [vmem:[#allocation2 + $0x148] sm:$0xff] %vm1410, %v1277
    %1453 = vst.msk [vmem:[#allocation2 + $0x150] sm:$0xff] %vm1410, %v1279
    %1454 = vst.msk [vmem:[#allocation2 + $0x158] sm:$0xff] %vm1410, %v1281
    %1455 = vst.msk [vmem:[#allocation2 + $0x160] sm:$0xff] %vm1410, %v1283
    %1456 = vst.msk [vmem:[#allocation2 + $0x168] sm:$0xff] %vm1410, %v1285
    %1457 = vst.msk [vmem:[#allocation2 + $0x170] sm:$0xff] %vm1410, %v1287
    %1458 = vst.msk [vmem:[#allocation2 + $0x178] sm:$0xff] %vm1410, %v1289
    %1459 = vst.msk [vmem:[#allocation2 + $0x180] sm:$0xff] %vm1410, %v1291
    %1460 = vst.msk [vmem:[#allocation2 + $0x188] sm:$0xff] %vm1410, %v1293
    %1461 = vst.msk [vmem:[#allocation2 + $0x190] sm:$0xff] %vm1410, %v1295
    %1462 = vst.msk [vmem:[#allocation2 + $0x198] sm:$0xff] %vm1410, %v1297
    %1463 = vst.msk [vmem:[#allocation2 + $0x1a0] sm:$0xff] %vm1410, %v1299
    %1464 = vst.msk [vmem:[#allocation2 + $0x1a8] sm:$0xff] %vm1410, %v1301
    %1465 = vst.msk [vmem:[#allocation2 + $0x1b0] sm:$0xff] %vm1410, %v1303
    %1466 = vst.msk [vmem:[#allocation2 + $0x1b8] sm:$0xff] %vm1410, %v1305
    %1467 = vst.msk [vmem:[#allocation2 + $0x1c0] sm:$0xff] %vm1410, %v1307
    %1468 = vst.msk [vmem:[#allocation2 + $0x1c8] sm:$0xff] %vm1410, %v1309
    %1469 = vst.msk [vmem:[#allocation2 + $0x1d0] sm:$0xff] %vm1410, %v1311
    %1470 = vst.msk [vmem:[#allocation2 + $0x1d8] sm:$0xff] %vm1410, %v1313
    %1471 = vst.msk [vmem:[#allocation2 + $0x1e0] sm:$0xff] %vm1410, %v1315
    %1472 = vst.msk [vmem:[#allocation2 + $0x1e8] sm:$0xff] %vm1410, %v1317
    %1473 = vst.msk [vmem:[#allocation2 + $0x1f0] sm:$0xff] %vm1410, %v1319
    %1474 = vst.msk [vmem:[#allocation2 + $0x1f8] sm:$0xff] %vm1410, %v1321
    %1475 = vst.msk [vmem:[#allocation2 + $0x200] sm:$0xff] %vm1410, %v1323
    %1476 = vst.msk [vmem:[#allocation2 + $0x208] sm:$0xff] %vm1410, %v1325
    %1477 = vst.msk [vmem:[#allocation2 + $0x210] sm:$0xff] %vm1410, %v1327
    %1478 = vst.msk [vmem:[#allocation2 + $0x218] sm:$0xff] %vm1410, %v1329
    %1479 = vst.msk [vmem:[#allocation2 + $0x220] sm:$0xff] %vm1410, %v1331
    %1480 = vst.msk [vmem:[#allocation2 + $0x228] sm:$0xff] %vm1410, %v1333
    %1481 = vst.msk [vmem:[#allocation2 + $0x230] sm:$0xff] %vm1410, %v1335
    %1482 = vst.msk [vmem:[#allocation2 + $0x238] sm:$0xff] %vm1410, %v1337
    %v1483 = vld [vmem:[#allocation2] sm:$0xff]
    %v1484 = vld [vmem:[#allocation2 + $0x8] sm:$0xff]
    %v1485 = vld [vmem:[#allocation2 + $0x10] sm:$0xff]
    %v1486 = vld [vmem:[#allocation2 + $0x18] sm:$0xff]
    %v1487 = vld [vmem:[#allocation2 + $0x20] sm:$0xff]
    %v1488 = vld [vmem:[#allocation2 + $0x28] sm:$0xff]
    %v1489 = vld [vmem:[#allocation2 + $0x30] sm:$0xff]
    %v1490 = vld [vmem:[#allocation2 + $0x38] sm:$0xff]
    %v1491 = vld [vmem:[#allocation2 + $0x40] sm:$0xff]
    %v1492 = vld [vmem:[#allocation2 + $0x48] sm:$0xff]
    %v1493 = vld [vmem:[#allocation2 + $0x50] sm:$0xff]
    %v1494 = vld [vmem:[#allocation2 + $0x58] sm:$0xff]
    %v1495 = vld [vmem:[#allocation2 + $0x60] sm:$0xff]
    %v1496 = vld [vmem:[#allocation2 + $0x68] sm:$0xff]
    %v1497 = vld [vmem:[#allocation2 + $0x70] sm:$0xff]
    %v1498 = vld [vmem:[#allocation2 + $0x78] sm:$0xff]
    %v1499 = vld [vmem:[#allocation2 + $0x80] sm:$0xff]
    %v1500 = vld [vmem:[#allocation2 + $0x88] sm:$0xff]
    %v1501 = vld [vmem:[#allocation2 + $0x90] sm:$0xff]
    %v1502 = vld [vmem:[#allocation2 + $0x98] sm:$0xff]
    %v1503 = vld [vmem:[#allocation2 + $0xa0] sm:$0xff]
    %v1504 = vld [vmem:[#allocation2 + $0xa8] sm:$0xff]
    %v1505 = vld [vmem:[#allocation2 + $0xb0] sm:$0xff]
    %v1506 = vld [vmem:[#allocation2 + $0xb8] sm:$0xff]
    %v1507 = vld [vmem:[#allocation2 + $0xc0] sm:$0xff]
    %v1508 = vld [vmem:[#allocation2 + $0xc8] sm:$0xff]
    %v1509 = vld [vmem:[#allocation2 + $0xd0] sm:$0xff]
    %v1510 = vld [vmem:[#allocation2 + $0xd8] sm:$0xff]
    %v1511 = vld [vmem:[#allocation2 + $0xe0] sm:$0xff]
    %v1512 = vld [vmem:[#allocation2 + $0xe8] sm:$0xff]
    %v1513 = vld [vmem:[#allocation2 + $0xf0] sm:$0xff]
    %v1514 = vld [vmem:[#allocation2 + $0xf8] sm:$0xff]
    %v1515 = vld [vmem:[#allocation2 + $0x100] sm:$0xff]
    %v1516 = vld [vmem:[#allocation2 + $0x108] sm:$0xff]
    %v1517 = vld [vmem:[#allocation2 + $0x110] sm:$0xff]
    %v1518 = vld [vmem:[#allocation2 + $0x118] sm:$0xff]
    %v1519 = vld [vmem:[#allocation2 + $0x120] sm:$0xff]
    %v1520 = vld [vmem:[#allocation2 + $0x128] sm:$0xff]
    %v1521 = vld [vmem:[#allocation2 + $0x130] sm:$0xff]
    %v1522 = vld [vmem:[#allocation2 + $0x138] sm:$0xff]
    %v1523 = vld [vmem:[#allocation2 + $0x140] sm:$0xff]
    %v1524 = vld [vmem:[#allocation2 + $0x148] sm:$0xff]
    %v1525 = vld [vmem:[#allocation2 + $0x150] sm:$0xff]
    %v1526 = vld [vmem:[#allocation2 + $0x158] sm:$0xff]
    %v1527 = vld [vmem:[#allocation2 + $0x160] sm:$0xff]
    %v1528 = vld [vmem:[#allocation2 + $0x168] sm:$0xff]
    %v1529 = vld [vmem:[#allocation2 + $0x170] sm:$0xff]
    %v1530 = vld [vmem:[#allocation2 + $0x178] sm:$0xff]
    %v1531 = vld [vmem:[#allocation2 + $0x180] sm:$0xff]
    %v1532 = vld [vmem:[#allocation2 + $0x188] sm:$0xff]
    %v1533 = vld [vmem:[#allocation2 + $0x190] sm:$0xff]
    %v1534 = vld [vmem:[#allocation2 + $0x198] sm:$0xff]
    %v1535 = vld [vmem:[#allocation2 + $0x1a0] sm:$0xff]
    %v1536 = vld [vmem:[#allocation2 + $0x1a8] sm:$0xff]
    %v1537 = vld [vmem:[#allocation2 + $0x1b0] sm:$0xff]
    %v1538 = vld [vmem:[#allocation2 + $0x1b8] sm:$0xff]
    %v1539 = vld [vmem:[#allocation2 + $0x1c0] sm:$0xff]
    %v1540 = vld [vmem:[#allocation2 + $0x1c8] sm:$0xff]
    %v1541 = vld [vmem:[#allocation2 + $0x1d0] sm:$0xff]
    %v1542 = vld [vmem:[#allocation2 + $0x1d8] sm:$0xff]
    %v1543 = vld [vmem:[#allocation2 + $0x1e0] sm:$0xff]
    %v1544 = vld [vmem:[#allocation2 + $0x1e8] sm:$0xff]
    %v1545 = vld [vmem:[#allocation2 + $0x1f0] sm:$0xff]
    %v1546 = vld [vmem:[#allocation2 + $0x1f8] sm:$0xff]
    %v1547 = vld [vmem:[#allocation2 + $0x200] sm:$0xff]
    %v1548 = vld [vmem:[#allocation2 + $0x208] sm:$0xff]
    %v1549 = vld [vmem:[#allocation2 + $0x210] sm:$0xff]
    %v1550 = vld [vmem:[#allocation2 + $0x218] sm:$0xff]
    %v1551 = vld [vmem:[#allocation2 + $0x220] sm:$0xff]
    %v1552 = vld [vmem:[#allocation2 + $0x228] sm:$0xff]
    %v1553 = vld [vmem:[#allocation2 + $0x230] sm:$0xff]
    %v1554 = vld [vmem:[#allocation2 + $0x238] sm:$0xff]
    %v1555 = vld [vmem:[%s1] sm:$0xff]
    %v1556 = vld [vmem:[%s1 + $0x8] sm:$0xf]
    %v1557 = vld [vmem:[%s2] sm:$0x1]
    %v1559 = vlaneseq
    %v1560 = vshrl.u32 %v1559, 7
    %v1561 = vsub.s32 0, %v1560
    %v1562 = vrot.slane %v1557, %v1561
    %vm1564 = vcmask 97280
    %v1566 = vsel %vm1564, %v1483, 0
    %v1569 = vsel %vm1564, %v1484, 0
    %v1572 = vsel %vm1564, %v1485, 0
    %v1575 = vsel %vm1564, %v1486, 0
    %v1578 = vsel %vm1564, %v1487, 0
    %v1581 = vsel %vm1564, %v1488, 0
    %v1584 = vsel %vm1564, %v1489, 0
    %v1587 = vsel %vm1564, %v1490, 0
    %v1590 = vsel %vm1564, %v1491, 0
    %v1593 = vsel %vm1564, %v1492, 0
    %v1596 = vsel %vm1564, %v1493, 0
    %v1599 = vsel %vm1564, %v1494, 0
    %v1602 = vsel %vm1564, %v1495, 0
    %v1605 = vsel %vm1564, %v1496, 0
    %v1608 = vsel %vm1564, %v1497, 0
    %v1611 = vsel %vm1564, %v1498, 0
    %v1614 = vsel %vm1564, %v1499, 0
    %v1617 = vsel %vm1564, %v1500, 0
    %v1620 = vsel %vm1564, %v1501, 0
    %v1623 = vsel %vm1564, %v1502, 0
    %v1626 = vsel %vm1564, %v1503, 0
    %v1629 = vsel %vm1564, %v1504, 0
    %v1632 = vsel %vm1564, %v1505, 0
    %v1635 = vsel %vm1564, %v1506, 0
    %v1638 = vsel %vm1564, %v1507, 0
    %v1641 = vsel %vm1564, %v1508, 0
    %v1644 = vsel %vm1564, %v1509, 0
    %v1647 = vsel %vm1564, %v1510, 0
    %v1650 = vsel %vm1564, %v1511, 0
    %v1653 = vsel %vm1564, %v1512, 0
    %v1656 = vsel %vm1564, %v1513, 0
    %v1659 = vsel %vm1564, %v1514, 0
    %v1662 = vsel %vm1564, %v1515, 0
    %v1665 = vsel %vm1564, %v1516, 0
    %v1668 = vsel %vm1564, %v1517, 0
    %v1671 = vsel %vm1564, %v1518, 0
    %v1674 = vsel %vm1564, %v1519, 0
    %v1677 = vsel %vm1564, %v1520, 0
    %v1680 = vsel %vm1564, %v1521, 0
    %v1683 = vsel %vm1564, %v1522, 0
    %v1686 = vsel %vm1564, %v1523, 0
    %v1689 = vsel %vm1564, %v1524, 0
    %v1692 = vsel %vm1564, %v1525, 0
    %v1695 = vsel %vm1564, %v1526, 0
    %v1698 = vsel %vm1564, %v1527, 0
    %v1701 = vsel %vm1564, %v1528, 0
    %v1704 = vsel %vm1564, %v1529, 0
    %v1707 = vsel %vm1564, %v1530, 0
    %v1710 = vsel %vm1564, %v1531, 0
    %v1713 = vsel %vm1564, %v1532, 0
    %v1716 = vsel %vm1564, %v1533, 0
    %v1719 = vsel %vm1564, %v1534, 0
    %v1722 = vsel %vm1564, %v1535, 0
    %v1725 = vsel %vm1564, %v1536, 0
    %v1728 = vsel %vm1564, %v1537, 0
    %v1731 = vsel %vm1564, %v1538, 0
    %v1734 = vsel %vm1564, %v1539, 0
    %v1737 = vsel %vm1564, %v1540, 0
    %v1740 = vsel %vm1564, %v1541, 0
    %v1743 = vsel %vm1564, %v1542, 0
    %v1746 = vsel %vm1564, %v1543, 0
    %v1749 = vsel %vm1564, %v1544, 0
    %v1752 = vsel %vm1564, %v1545, 0
    %v1755 = vsel %vm1564, %v1546, 0
    %v1758 = vsel %vm1564, %v1547, 0
    %v1761 = vsel %vm1564, %v1548, 0
    %v1764 = vsel %vm1564, %v1549, 0
    %v1767 = vsel %vm1564, %v1550, 0
    %v1770 = vsel %vm1564, %v1551, 0
    %v1773 = vsel %vm1564, %v1552, 0
    %v1776 = vsel %vm1564, %v1553, 0
    %v1779 = vsel %vm1564, %v1554, 0
    %vm1781 = vcmask 1043456
    %v1783 = vsel %vm1781, %v1556, 0
    %1785 = vmatprep.subr.mxu0 0.0
    %1786 = vmatpush1.msra.mxu0 %v1555
    %1787 = vmatprep.subr.mxu0 0.0
    %1788 = vmatpush1.msra.mxu0 %v1783
    %1789 = vmatprep.subr.mxu0 0.0
    %1790 = vmatpush1.msra.mxu0 0.0
    %1791 = vmatprep.subr.mxu0 0.0
    %1792 = vmatpush1.msra.mxu0 0.0
    %1793 = vmatprep.subr.mxu0 0.0
    %1794 = vmatpush1.msra.mxu0 0.0
    %1795 = vmatprep.subr.mxu0 0.0
    %1796 = vmatpush1.msra.mxu0 0.0
    %1797 = vmatprep.subr.mxu0 0.0
    %1798 = vmatpush1.msra.mxu0 0.0
    %1799 = vmatprep.subr.mxu0 0.0
    %1800 = vmatpush1.msra.mxu0 0.0
    %1801 = vmatprep.subr.mxu0 0.0
    %1802 = vmatpush1.msra.mxu0 0.0
    %1803 = vmatprep.subr.mxu0 0.0
    %1804 = vmatpush1.msra.mxu0 0.0
    %1805 = vmatprep.subr.mxu0 0.0
    %1806 = vmatpush1.msra.mxu0 0.0
    %1807 = vmatprep.subr.mxu0 0.0
    %1808 = vmatpush1.msra.mxu0 0.0
    %1809 = vmatprep.subr.mxu0 0.0
    %1810 = vmatpush1.msra.mxu0 0.0
    %1811 = vmatprep.subr.mxu0 0.0
    %1812 = vmatpush1.msra.mxu0 0.0
    %1813 = vmatprep.subr.mxu0 0.0
    %1814 = vmatpush1.msra.mxu0 0.0
    %1815 = vmatprep.subr.mxu0 0.0
    %1816 = vmatpush1.msra.mxu0 0.0
    %1817 = vmatprep.subr.mxu0 0.0
    %1818 = vmatpush1.msra.mxu0 0.0
    %1819 = vmatprep.subr.mxu0 0.0
    %1820 = vmatpush1.msra.mxu0 0.0
    %1821 = vmatprep.subr.mxu0 0.0
    %1822 = vmatpush1.msra.mxu0 0.0
    %1823 = vmatprep.subr.mxu0 0.0
    %1824 = vmatpush1.msra.mxu0 0.0
    %1825 = vmatprep.subr.mxu0 0.0
    %1826 = vmatpush1.msra.mxu0 0.0
    %1827 = vmatprep.subr.mxu0 0.0
    %1828 = vmatpush1.msra.mxu0 0.0
    %1829 = vmatprep.subr.mxu0 0.0
    %1830 = vmatpush1.msra.mxu0 0.0
    %1831 = vmatprep.subr.mxu0 0.0
    %1832 = vmatpush1.msra.mxu0 0.0
    %1833 = vmatprep.subr.mxu0 0.0
    %1834 = vmatpush1.msra.mxu0 0.0
    %1835 = vmatprep.subr.mxu0 0.0
    %1836 = vmatpush1.msra.mxu0 0.0
    %1837 = vmatprep.subr.mxu0 0.0
    %1838 = vmatpush1.msra.mxu0 0.0
    %1839 = vmatprep.subr.mxu0 0.0
    %1840 = vmatpush1.msra.mxu0 0.0
    %1841 = vmatprep.subr.mxu0 0.0
    %1842 = vmatpush1.msra.mxu0 0.0
    %1843 = vmatprep.subr.mxu0 0.0
    %1844 = vmatpush1.msra.mxu0 0.0
    %1845 = vmatprep.subr.mxu0 0.0
    %1846 = vmatpush1.msra.mxu0 0.0
    %1847 = vmatprep.subr.mxu0 0.0
    %1848 = vmatpush1.msra.mxu0 0.0
    %1849 = vmatprep.mubr.f32.mxu0 0.0
    %1850 = vmatmul.mubr.f32.gmra.mrb[0].mxu0 %v1566
    %v1851 = vpop.f32.mrb[0].mxu0
    %v1852 = vadd.f32 %v1562, %v1851
    %v1853 = vpop.f32.mrb[0].mxu0
    %1854 = vmatprep.mubr.f32.mxu0 0.0
    %1855 = vmatmul.mubr.f32.gmra.mrb[0].mxu0 %v1569
    %v1856 = vpop.f32.mrb[0].mxu0
    %v1857 = vadd.f32 %v1562, %v1856
    %v1858 = vpop.f32.mrb[0].mxu0
    %1859 = vmatprep.mubr.f32.mxu0 0.0
    %1860 = vmatmul.mubr.f32.gmra.mrb[0].mxu0 %v1572
    %v1861 = vpop.f32.mrb[0].mxu0
    %v1862 = vadd.f32 %v1562, %v1861
    %v1863 = vpop.f32.mrb[0].mxu0
    %1864 = vmatprep.mubr.f32.mxu0 0.0
    %1865 = vmatmul.mubr.f32.gmra.mrb[0].mxu0 %v1575
    %v1866 = vpop.f32.mrb[0].mxu0
    %v1867 = vadd.f32 %v1562, %v1866
    %v1868 = vpop.f32.mrb[0].mxu0
    %1869 = vmatprep.mubr.f32.mxu0 0.0
    %1870 = vmatmul.mubr.f32.gmra.mrb[0].mxu0 %v1578
    %v1871 = vpop.f32.mrb[0].mxu0
    %v1872 = vadd.f32 %v1562, %v1871
    %v1873 = vpop.f32.mrb[0].mxu0
    %1874 = vmatprep.mubr.f32.mxu0 0.0
    %1875 = vmatmul.mubr.f32.gmra.mrb[0].mxu0 %v1581
    %v1876 = vpop.f32.mrb[0].mxu0
    %v1877 = vadd.f32 %v1562, %v1876
    %v1878 = vpop.f32.mrb[0].mxu0
    %1879 = vmatprep.mubr.f32.mxu0 0.0
    %1880 = vmatmul.mubr.f32.gmra.mrb[0].mxu0 %v1584
    %v1881 = vpop.f32.mrb[0].mxu0
    %v1882 = vadd.f32 %v1562, %v1881
    %v1883 = vpop.f32.mrb[0].mxu0
    %1884 = vmatprep.mubr.f32.mxu0 0.0
    %1885 = vmatmul.mubr.f32.gmra.mrb[0].mxu0 %v1587
    %v1886 = vpop.f32.mrb[0].mxu0
    %v1887 = vadd.f32 %v1562, %v1886
    %v1888 = vpop.f32.mrb[0].mxu0
    %1889 = vmatprep.mubr.f32.mxu0 0.0
    %1890 = vmatmul.mubr.f32.gmra.mrb[0].mxu0 %v1590
    %v1891 = vpop.f32.mrb[0].mxu0
    %v1892 = vpop.f32.mrb[0].mxu0
    %1893 = vmatprep.mubr.f32.mxu0 0.0
    %1894 = vmatmul.mubr.f32.gmra.mrb[0].mxu0 %v1593
    %v1895 = vpop.f32.mrb[0].mxu0
    %v1896 = vadd.f32 %v1562, %v1895
    %v1897 = vpop.f32.mrb[0].mxu0
    %1898 = vmatprep.mubr.f32.mxu0 0.0
    %1899 = vmatmul.mubr.f32.gmra.mrb[0].mxu0 %v1596
    %v1900 = vpop.f32.mrb[0].mxu0
    %v1901 = vadd.f32 %v1562, %v1900
    %v1902 = vpop.f32.mrb[0].mxu0
    %1903 = vmatprep.mubr.f32.mxu0 0.0
    %1904 = vmatmul.mubr.f32.gmra.mrb[0].mxu0 %v1599
    %v1905 = vpop.f32.mrb[0].mxu0
    %v1906 = vadd.f32 %v1562, %v1905
    %v1907 = vpop.f32.mrb[0].mxu0
    %1908 = vmatprep.mubr.f32.mxu0 0.0
    %1909 = vmatmul.mubr.f32.gmra.mrb[0].mxu0 %v1602
    %v1910 = vpop.f32.mrb[0].mxu0
    %v1911 = vadd.f32 %v1562, %v1910
    %v1912 = vpop.f32.mrb[0].mxu0
    %1913 = vmatprep.mubr.f32.mxu0 0.0
    %1914 = vmatmul.mubr.f32.gmra.mrb[0].mxu0 %v1605
    %v1915 = vpop.f32.mrb[0].mxu0
    %v1916 = vadd.f32 %v1562, %v1915
    %v1917 = vpop.f32.mrb[0].mxu0
    %1918 = vmatprep.mubr.f32.mxu0 0.0
    %1919 = vmatmul.mubr.f32.gmra.mrb[0].mxu0 %v1608
    %v1920 = vpop.f32.mrb[0].mxu0
    %v1921 = vadd.f32 %v1562, %v1920
    %v1922 = vpop.f32.mrb[0].mxu0
    %1923 = vmatprep.mubr.f32.mxu0 0.0
    %1924 = vmatmul.mubr.f32.gmra.mrb[0].mxu0 %v1611
    %v1925 = vpop.f32.mrb[0].mxu0
    %v1926 = vadd.f32 %v1562, %v1925
    %v1927 = vpop.f32.mrb[0].mxu0
    %1928 = vmatprep.mubr.f32.mxu0 0.0
    %1929 = vmatmul.mubr.f32.gmra.mrb[0].mxu0 %v1614
    %v1930 = vpop.f32.mrb[0].mxu0
    %v1931 = vadd.f32 %v1562, %v1930
    %v1932 = vpop.f32.mrb[0].mxu0
    %1933 = vmatprep.mubr.f32.mxu0 0.0
    %1934 = vmatmul.mubr.f32.gmra.mrb[0].mxu0 %v1617
    %v1935 = vpop.f32.mrb[0].mxu0
    %v1936 = vpop.f32.mrb[0].mxu0
    %1937 = vmatprep.mubr.f32.mxu0 0.0
    %1938 = vmatmul.mubr.f32.gmra.mrb[0].mxu0 %v1620
    %v1939 = vpop.f32.mrb[0].mxu0
    %v1940 = vadd.f32 %v1562, %v1939
    %v1941 = vpop.f32.mrb[0].mxu0
    %1942 = vmatprep.mubr.f32.mxu0 0.0
    %1943 = vmatmul.mubr.f32.gmra.mrb[0].mxu0 %v1623
    %v1944 = vpop.f32.mrb[0].mxu0
    %v1945 = vadd.f32 %v1562, %v1944
    %v1946 = vpop.f32.mrb[0].mxu0
    %1947 = vmatprep.mubr.f32.mxu0 0.0
    %1948 = vmatmul.mubr.f32.gmra.mrb[0].mxu0 %v1626
    %v1949 = vpop.f32.mrb[0].mxu0
    %v1950 = vadd.f32 %v1562, %v1949
    %v1951 = vpop.f32.mrb[0].mxu0
    %1952 = vmatprep.mubr.f32.mxu0 0.0
    %1953 = vmatmul.mubr.f32.gmra.mrb[0].mxu0 %v1629
    %v1954 = vpop.f32.mrb[0].mxu0
    %v1955 = vadd.f32 %v1562, %v1954
    %v1956 = vpop.f32.mrb[0].mxu0
    %1957 = vmatprep.mubr.f32.mxu0 0.0
    %1958 = vmatmul.mubr.f32.gmra.mrb[0].mxu0 %v1632
    %v1959 = vpop.f32.mrb[0].mxu0
    %v1960 = vadd.f32 %v1562, %v1959
    %v1961 = vpop.f32.mrb[0].mxu0
    %1962 = vmatprep.mubr.f32.mxu0 0.0
    %1963 = vmatmul.mubr.f32.gmra.mrb[0].mxu0 %v1635
    %v1964 = vpop.f32.mrb[0].mxu0
    %v1965 = vadd.f32 %v1562, %v1964
    %v1966 = vpop.f32.mrb[0].mxu0
    %1967 = vmatprep.mubr.f32.mxu0 0.0
    %1968 = vmatmul.mubr.f32.gmra.mrb[0].mxu0 %v1638
    %v1969 = vpop.f32.mrb[0].mxu0
    %v1970 = vadd.f32 %v1562, %v1969
    %v1971 = vpop.f32.mrb[0].mxu0
    %1972 = vmatprep.mubr.f32.mxu0 0.0
    %1973 = vmatmul.mubr.f32.gmra.mrb[0].mxu0 %v1641
    %v1974 = vpop.f32.mrb[0].mxu0
    %v1975 = vadd.f32 %v1562, %v1974
    %v1976 = vpop.f32.mrb[0].mxu0
    %1977 = vmatprep.mubr.f32.mxu0 0.0
    %1978 = vmatmul.mubr.f32.gmra.mrb[0].mxu0 %v1644
    %v1979 = vpop.f32.mrb[0].mxu0
    %v1980 = vpop.f32.mrb[0].mxu0
    %1981 = vmatprep.mubr.f32.mxu0 0.0
    %1982 = vmatmul.mubr.f32.gmra.mrb[0].mxu0 %v1647
    %v1983 = vpop.f32.mrb[0].mxu0
    %v1984 = vadd.f32 %v1562, %v1983
    %v1985 = vpop.f32.mrb[0].mxu0
    %1986 = vmatprep.mubr.f32.mxu0 0.0
    %1987 = vmatmul.mubr.f32.gmra.mrb[0].mxu0 %v1650
    %v1988 = vpop.f32.mrb[0].mxu0
    %v1989 = vadd.f32 %v1562, %v1988
    %v1990 = vpop.f32.mrb[0].mxu0
    %1991 = vmatprep.mubr.f32.mxu0 0.0
    %1992 = vmatmul.mubr.f32.gmra.mrb[0].mxu0 %v1653
    %v1993 = vpop.f32.mrb[0].mxu0
    %v1994 = vadd.f32 %v1562, %v1993
    %v1995 = vpop.f32.mrb[0].mxu0
    %1996 = vmatprep.mubr.f32.mxu0 0.0
    %1997 = vmatmul.mubr.f32.gmra.mrb[0].mxu0 %v1656
    %v1998 = vpop.f32.mrb[0].mxu0
    %v1999 = vadd.f32 %v1562, %v1998
    %v2000 = vpop.f32.mrb[0].mxu0
    %2001 = vmatprep.mubr.f32.mxu0 0.0
    %2002 = vmatmul.mubr.f32.gmra.mrb[0].mxu0 %v1659
    %v2003 = vpop.f32.mrb[0].mxu0
    %v2004 = vadd.f32 %v1562, %v2003
    %v2005 = vpop.f32.mrb[0].mxu0
    %2006 = vmatprep.mubr.f32.mxu0 0.0
    %2007 = vmatmul.mubr.f32.gmra.mrb[0].mxu0 %v1662
    %v2008 = vpop.f32.mrb[0].mxu0
    %v2009 = vadd.f32 %v1562, %v2008
    %v2010 = vpop.f32.mrb[0].mxu0
    %2011 = vmatprep.mubr.f32.mxu0 0.0
    %2012 = vmatmul.mubr.f32.gmra.mrb[0].mxu0 %v1665
    %v2013 = vpop.f32.mrb[0].mxu0
    %v2014 = vadd.f32 %v1562, %v2013
    %v2015 = vpop.f32.mrb[0].mxu0
    %2016 = vmatprep.mubr.f32.mxu0 0.0
    %2017 = vmatmul.mubr.f32.gmra.mrb[0].mxu0 %v1668
    %v2018 = vpop.f32.mrb[0].mxu0
    %v2019 = vadd.f32 %v1562, %v2018
    %v2020 = vpop.f32.mrb[0].mxu0
    %2021 = vmatprep.mubr.f32.mxu0 0.0
    %2022 = vmatmul.mubr.f32.gmra.mrb[0].mxu0 %v1671
    %v2023 = vpop.f32.mrb[0].mxu0
    %v2024 = vpop.f32.mrb[0].mxu0
    %2025 = vmatprep.mubr.f32.mxu0 0.0
    %2026 = vmatmul.mubr.f32.gmra.mrb[0].mxu0 %v1674
    %v2027 = vpop.f32.mrb[0].mxu0
    %v2028 = vadd.f32 %v1562, %v2027
    %v2029 = vpop.f32.mrb[0].mxu0
    %2030 = vmatprep.mubr.f32.mxu0 0.0
    %2031 = vmatmul.mubr.f32.gmra.mrb[0].mxu0 %v1677
    %v2032 = vpop.f32.mrb[0].mxu0
    %v2033 = vadd.f32 %v1562, %v2032
    %v2034 = vpop.f32.mrb[0].mxu0
    %2035 = vmatprep.mubr.f32.mxu0 0.0
    %2036 = vmatmul.mubr.f32.gmra.mrb[0].mxu0 %v1680
    %v2037 = vpop.f32.mrb[0].mxu0
    %v2038 = vadd.f32 %v1562, %v2037
    %v2039 = vpop.f32.mrb[0].mxu0
    %2040 = vmatprep.mubr.f32.mxu0 0.0
    %2041 = vmatmul.mubr.f32.gmra.mrb[0].mxu0 %v1683
    %v2042 = vpop.f32.mrb[0].mxu0
    %v2043 = vadd.f32 %v1562, %v2042
    %v2044 = vpop.f32.mrb[0].mxu0
    %2045 = vmatprep.mubr.f32.mxu0 0.0
    %2046 = vmatmul.mubr.f32.gmra.mrb[0].mxu0 %v1686
    %v2047 = vpop.f32.mrb[0].mxu0
    %v2048 = vadd.f32 %v1562, %v2047
    %v2049 = vpop.f32.mrb[0].mxu0
    %2050 = vmatprep.mubr.f32.mxu0 0.0
    %2051 = vmatmul.mubr.f32.gmra.mrb[0].mxu0 %v1689
    %v2052 = vpop.f32.mrb[0].mxu0
    %v2053 = vadd.f32 %v1562, %v2052
    %v2054 = vpop.f32.mrb[0].mxu0
    %2055 = vmatprep.mubr.f32.mxu0 0.0
    %2056 = vmatmul.mubr.f32.gmra.mrb[0].mxu0 %v1692
    %v2057 = vpop.f32.mrb[0].mxu0
    %v2058 = vadd.f32 %v1562, %v2057
    %v2059 = vpop.f32.mrb[0].mxu0
    %2060 = vmatprep.mubr.f32.mxu0 0.0
    %2061 = vmatmul.mubr.f32.gmra.mrb[0].mxu0 %v1695
    %v2062 = vpop.f32.mrb[0].mxu0
    %v2063 = vadd.f32 %v1562, %v2062
    %v2064 = vpop.f32.mrb[0].mxu0
    %2065 = vmatprep.mubr.f32.mxu0 0.0
    %2066 = vmatmul.mubr.f32.gmra.mrb[0].mxu0 %v1698
    %v2067 = vpop.f32.mrb[0].mxu0
    %v2068 = vpop.f32.mrb[0].mxu0
    %2069 = vmatprep.mubr.f32.mxu0 0.0
    %2070 = vmatmul.mubr.f32.gmra.mrb[0].mxu0 %v1701
    %v2071 = vpop.f32.mrb[0].mxu0
    %v2072 = vadd.f32 %v1562, %v2071
    %v2073 = vpop.f32.mrb[0].mxu0
    %2074 = vmatprep.mubr.f32.mxu0 0.0
    %2075 = vmatmul.mubr.f32.gmra.mrb[0].mxu0 %v1704
    %v2076 = vpop.f32.mrb[0].mxu0
    %v2077 = vadd.f32 %v1562, %v2076
    %v2078 = vpop.f32.mrb[0].mxu0
    %2079 = vmatprep.mubr.f32.mxu0 0.0
    %2080 = vmatmul.mubr.f32.gmra.mrb[0].mxu0 %v1707
    %v2081 = vpop.f32.mrb[0].mxu0
    %v2082 = vadd.f32 %v1562, %v2081
    %v2083 = vpop.f32.mrb[0].mxu0
    %2084 = vmatprep.mubr.f32.mxu0 0.0
    %2085 = vmatmul.mubr.f32.gmra.mrb[0].mxu0 %v1710
    %v2086 = vpop.f32.mrb[0].mxu0
    %v2087 = vadd.f32 %v1562, %v2086
    %v2088 = vpop.f32.mrb[0].mxu0
    %2089 = vmatprep.mubr.f32.mxu0 0.0
    %2090 = vmatmul.mubr.f32.gmra.mrb[0].mxu0 %v1713
    %v2091 = vpop.f32.mrb[0].mxu0
    %v2092 = vadd.f32 %v1562, %v2091
    %v2093 = vpop.f32.mrb[0].mxu0
    %2094 = vmatprep.mubr.f32.mxu0 0.0
    %2095 = vmatmul.mubr.f32.gmra.mrb[0].mxu0 %v1716
    %v2096 = vpop.f32.mrb[0].mxu0
    %v2097 = vadd.f32 %v1562, %v2096
    %v2098 = vpop.f32.mrb[0].mxu0
    %2099 = vmatprep.mubr.f32.mxu0 0.0
    %2100 = vmatmul.mubr.f32.gmra.mrb[0].mxu0 %v1719
    %v2101 = vpop.f32.mrb[0].mxu0
    %v2102 = vadd.f32 %v1562, %v2101
    %v2103 = vpop.f32.mrb[0].mxu0
    %2104 = vmatprep.mubr.f32.mxu0 0.0
    %2105 = vmatmul.mubr.f32.gmra.mrb[0].mxu0 %v1722
    %v2106 = vpop.f32.mrb[0].mxu0
    %v2107 = vadd.f32 %v1562, %v2106
    %v2108 = vpop.f32.mrb[0].mxu0
    %2109 = vmatprep.mubr.f32.mxu0 0.0
    %2110 = vmatmul.mubr.f32.gmra.mrb[0].mxu0 %v1725
    %v2111 = vpop.f32.mrb[0].mxu0
    %v2112 = vpop.f32.mrb[0].mxu0
    %2113 = vmatprep.mubr.f32.mxu0 0.0
    %2114 = vmatmul.mubr.f32.gmra.mrb[0].mxu0 %v1728
    %v2115 = vpop.f32.mrb[0].mxu0
    %v2116 = vadd.f32 %v1562, %v2115
    %v2117 = vpop.f32.mrb[0].mxu0
    %2118 = vmatprep.mubr.f32.mxu0 0.0
    %2119 = vmatmul.mubr.f32.gmra.mrb[0].mxu0 %v1731
    %v2120 = vpop.f32.mrb[0].mxu0
    %v2121 = vadd.f32 %v1562, %v2120
    %v2122 = vpop.f32.mrb[0].mxu0
    %2123 = vmatprep.mubr.f32.mxu0 0.0
    %2124 = vmatmul.mubr.f32.gmra.mrb[0].mxu0 %v1734
    %v2125 = vpop.f32.mrb[0].mxu0
    %v2126 = vadd.f32 %v1562, %v2125
    %v2127 = vpop.f32.mrb[0].mxu0
    %2128 = vmatprep.mubr.f32.mxu0 0.0
    %2129 = vmatmul.mubr.f32.gmra.mrb[0].mxu0 %v1737
    %v2130 = vpop.f32.mrb[0].mxu0
    %v2131 = vadd.f32 %v1562, %v2130
    %v2132 = vpop.f32.mrb[0].mxu0
    %2133 = vmatprep.mubr.f32.mxu0 0.0
    %2134 = vmatmul.mubr.f32.gmra.mrb[0].mxu0 %v1740
    %v2135 = vpop.f32.mrb[0].mxu0
    %v2136 = vadd.f32 %v1562, %v2135
    %v2137 = vpop.f32.mrb[0].mxu0
    %2138 = vmatprep.mubr.f32.mxu0 0.0
    %2139 = vmatmul.mubr.f32.gmra.mrb[0].mxu0 %v1743
    %v2140 = vpop.f32.mrb[0].mxu0
    %v2141 = vadd.f32 %v1562, %v2140
    %v2142 = vpop.f32.mrb[0].mxu0
    %2143 = vmatprep.mubr.f32.mxu0 0.0
    %2144 = vmatmul.mubr.f32.gmra.mrb[0].mxu0 %v1746
    %v2145 = vpop.f32.mrb[0].mxu0
    %v2146 = vadd.f32 %v1562, %v2145
    %v2147 = vpop.f32.mrb[0].mxu0
    %2148 = vmatprep.mubr.f32.mxu0 0.0
    %2149 = vmatmul.mubr.f32.gmra.mrb[0].mxu0 %v1749
    %v2150 = vpop.f32.mrb[0].mxu0
    %v2151 = vadd.f32 %v1562, %v2150
    %v2152 = vpop.f32.mrb[0].mxu0
    %2153 = vmatprep.mubr.f32.mxu0 0.0
    %2154 = vmatmul.mubr.f32.gmra.mrb[0].mxu0 %v1752
    %v2155 = vpop.f32.mrb[0].mxu0
    %v2156 = vpop.f32.mrb[0].mxu0
    %2157 = vmatprep.mubr.f32.mxu0 0.0
    %2158 = vmatmul.mubr.f32.gmra.mrb[0].mxu0 %v1755
    %v2159 = vpop.f32.mrb[0].mxu0
    %v2160 = vadd.f32 %v1562, %v2159
    %v2161 = vpop.f32.mrb[0].mxu0
    %2162 = vmatprep.mubr.f32.mxu0 0.0
    %2163 = vmatmul.mubr.f32.gmra.mrb[0].mxu0 %v1758
    %v2164 = vpop.f32.mrb[0].mxu0
    %v2165 = vadd.f32 %v1562, %v2164
    %v2166 = vpop.f32.mrb[0].mxu0
    %2167 = vmatprep.mubr.f32.mxu0 0.0
    %2168 = vmatmul.mubr.f32.gmra.mrb[0].mxu0 %v1761
    %v2169 = vpop.f32.mrb[0].mxu0
    %v2170 = vadd.f32 %v1562, %v2169
    %v2171 = vpop.f32.mrb[0].mxu0
    %2172 = vmatprep.mubr.f32.mxu0 0.0
    %2173 = vmatmul.mubr.f32.gmra.mrb[0].mxu0 %v1764
    %v2174 = vpop.f32.mrb[0].mxu0
    %v2175 = vadd.f32 %v1562, %v2174
    %v2176 = vpop.f32.mrb[0].mxu0
    %2177 = vmatprep.mubr.f32.mxu0 0.0
    %2178 = vmatmul.mubr.f32.gmra.mrb[0].mxu0 %v1767
    %v2179 = vpop.f32.mrb[0].mxu0
    %v2180 = vadd.f32 %v1562, %v2179
    %v2181 = vpop.f32.mrb[0].mxu0
    %2182 = vmatprep.mubr.f32.mxu0 0.0
    %2183 = vmatmul.mubr.f32.gmra.mrb[0].mxu0 %v1770
    %v2184 = vpop.f32.mrb[0].mxu0
    %v2185 = vadd.f32 %v1562, %v2184
    %v2186 = vpop.f32.mrb[0].mxu0
    %2187 = vmatprep.mubr.f32.mxu0 0.0
    %2188 = vmatmul.mubr.f32.gmra.mrb[0].mxu0 %v1773
    %v2189 = vpop.f32.mrb[0].mxu0
    %v2190 = vadd.f32 %v1562, %v2189
    %v2191 = vpop.f32.mrb[0].mxu0
    %2192 = vmatprep.mubr.f32.mxu0 0.0
    %2193 = vmatmul.mubr.f32.gmra.mrb[0].mxu0 %v1776
    %v2194 = vpop.f32.mrb[0].mxu0
    %v2195 = vadd.f32 %v1562, %v2194
    %v2196 = vpop.f32.mrb[0].mxu0
    %2197 = vmatprep.mubr.f32.mxu0 0.0
    %2198 = vmatmul.mubr.f32.gmra.mrb[0].mxu0 %v1779
    %v2199 = vpop.f32.mrb[0].mxu0
    %v2200 = vpop.f32.mrb[0].mxu0
    %2201 = vdwg.mxu0
    %v2202 = vmax.f32 %v1852, 0.0
    %v2203 = vmax.f32 %v1857, 0.0
    %v2204 = vmax.f32 %v1862, 0.0
    %v2205 = vmax.f32 %v1867, 0.0
    %v2206 = vmax.f32 %v1872, 0.0
    %v2207 = vmax.f32 %v1877, 0.0
    %v2208 = vmax.f32 %v1882, 0.0
    %v2209 = vmax.f32 %v1887, 0.0
    %v2210 = vmax.f32 %v1896, 0.0
    %v2211 = vmax.f32 %v1901, 0.0
    %v2212 = vmax.f32 %v1906, 0.0
    %v2213 = vmax.f32 %v1911, 0.0
    %v2214 = vmax.f32 %v1916, 0.0
    %v2215 = vmax.f32 %v1921, 0.0
    %v2216 = vmax.f32 %v1926, 0.0
    %v2217 = vmax.f32 %v1931, 0.0
    %v2218 = vmax.f32 %v1940, 0.0
    %v2219 = vmax.f32 %v1945, 0.0
    %v2220 = vmax.f32 %v1950, 0.0
    %v2221 = vmax.f32 %v1955, 0.0
    %v2222 = vmax.f32 %v1960, 0.0
    %v2223 = vmax.f32 %v1965, 0.0
    %v2224 = vmax.f32 %v1970, 0.0
    %v2225 = vmax.f32 %v1975, 0.0
    %v2226 = vmax.f32 %v1984, 0.0
    %v2227 = vmax.f32 %v1989, 0.0
    %v2228 = vmax.f32 %v1994, 0.0
    %v2229 = vmax.f32 %v1999, 0.0
    %v2230 = vmax.f32 %v2004, 0.0
    %v2231 = vmax.f32 %v2009, 0.0
    %v2232 = vmax.f32 %v2014, 0.0
    %v2233 = vmax.f32 %v2019, 0.0
    %v2234 = vmax.f32 %v2028, 0.0
    %v2235 = vmax.f32 %v2033, 0.0
    %v2236 = vmax.f32 %v2038, 0.0
    %v2237 = vmax.f32 %v2043, 0.0
    %v2238 = vmax.f32 %v2048, 0.0
    %v2239 = vmax.f32 %v2053, 0.0
    %v2240 = vmax.f32 %v2058, 0.0
    %v2241 = vmax.f32 %v2063, 0.0
    %v2242 = vmax.f32 %v2072, 0.0
    %v2243 = vmax.f32 %v2077, 0.0
    %v2244 = vmax.f32 %v2082, 0.0
    %v2245 = vmax.f32 %v2087, 0.0
    %v2246 = vmax.f32 %v2092, 0.0
    %v2247 = vmax.f32 %v2097, 0.0
    %v2248 = vmax.f32 %v2102, 0.0
    %v2249 = vmax.f32 %v2107, 0.0
    %v2250 = vmax.f32 %v2116, 0.0
    %v2251 = vmax.f32 %v2121, 0.0
    %v2252 = vmax.f32 %v2126, 0.0
    %v2253 = vmax.f32 %v2131, 0.0
    %v2254 = vmax.f32 %v2136, 0.0
    %v2255 = vmax.f32 %v2141, 0.0
    %v2256 = vmax.f32 %v2146, 0.0
    %v2257 = vmax.f32 %v2151, 0.0
    %v2258 = vmax.f32 %v2160, 0.0
    %v2259 = vmax.f32 %v2165, 0.0
    %v2260 = vmax.f32 %v2170, 0.0
    %v2261 = vmax.f32 %v2175, 0.0
    %v2262 = vmax.f32 %v2180, 0.0
    %v2263 = vmax.f32 %v2185, 0.0
    %v2264 = vmax.f32 %v2190, 0.0
    %v2265 = vmax.f32 %v2195, 0.0
    %v2266 = vmax.f32 %v2202, %v2210
    %v2267 = vmax.f32 %v2203, %v2211
    %v2268 = vmax.f32 %v2204, %v2212
    %v2269 = vmax.f32 %v2205, %v2213
    %v2270 = vmax.f32 %v2206, %v2214
    %v2271 = vmax.f32 %v2207, %v2215
    %v2272 = vmax.f32 %v2208, %v2216
    %v2273 = vmax.f32 %v2209, %v2217
    %v2274 = vmax.f32 %v2218, %v2226
    %v2275 = vmax.f32 %v2219, %v2227
    %v2276 = vmax.f32 %v2220, %v2228
    %v2277 = vmax.f32 %v2221, %v2229
    %v2278 = vmax.f32 %v2222, %v2230
    %v2279 = vmax.f32 %v2223, %v2231
    %v2280 = vmax.f32 %v2224, %v2232
    %v2281 = vmax.f32 %v2225, %v2233
    %v2282 = vmax.f32 %v2234, %v2242
    %v2283 = vmax.f32 %v2235, %v2243
    %v2284 = vmax.f32 %v2236, %v2244
    %v2285 = vmax.f32 %v2237, %v2245
    %v2286 = vmax.f32 %v2238, %v2246
    %v2287 = vmax.f32 %v2239, %v2247
    %v2288 = vmax.f32 %v2240, %v2248
    %v2289 = vmax.f32 %v2241, %v2249
    %v2290 = vmax.f32 %v2250, %v2258
    %v2291 = vmax.f32 %v2251, %v2259
    %v2292 = vmax.f32 %v2252, %v2260
    %v2293 = vmax.f32 %v2253, %v2261
    %v2294 = vmax.f32 %v2254, %v2262
    %v2295 = vmax.f32 %v2255, %v2263
    %v2296 = vmax.f32 %v2256, %v2264
    %v2297 = vmax.f32 %v2257, %v2265
    %v2298 = vmax.f32 %v2266, %v2267
    %v2299 = vmax.f32 %v2268, %v2269
    %v2300 = vmax.f32 %v2270, %v2271
    %v2301 = vmax.f32 %v2272, %v2273
    %v2302 = vmax.f32 %v2274, %v2275
    %v2303 = vmax.f32 %v2276, %v2277
    %v2304 = vmax.f32 %v2278, %v2279
    %v2305 = vmax.f32 %v2280, %v2281
    %v2306 = vmax.f32 %v2282, %v2283
    %v2307 = vmax.f32 %v2284, %v2285
    %v2308 = vmax.f32 %v2286, %v2287
    %v2309 = vmax.f32 %v2288, %v2289
    %v2310 = vmax.f32 %v2290, %v2291
    %v2311 = vmax.f32 %v2292, %v2293
    %v2312 = vmax.f32 %v2294, %v2295
    %v2313 = vmax.f32 %v2296, %v2297
    %vm2314 = vcmask 130048
    %2315 = vst.msk [vmem:[#allocation3] sm:$0xff] %vm2314, %v2298
    %2316 = vst.msk [vmem:[#allocation3 + $0x8] sm:$0xff] %vm2314, %v2299
    %2317 = vst.msk [vmem:[#allocation3 + $0x10] sm:$0xff] %vm2314, %v2300
    %2318 = vst.msk [vmem:[#allocation3 + $0x18] sm:$0xff] %vm2314, %v2301
    %2319 = vst.msk [vmem:[#allocation3 + $0x20] sm:$0xff] %vm2314, %v2302
    %2320 = vst.msk [vmem:[#allocation3 + $0x28] sm:$0xff] %vm2314, %v2303
    %2321 = vst.msk [vmem:[#allocation3 + $0x30] sm:$0xff] %vm2314, %v2304
    %2322 = vst.msk [vmem:[#allocation3 + $0x38] sm:$0xff] %vm2314, %v2305
    %2323 = vst.msk [vmem:[#allocation3 + $0x40] sm:$0xff] %vm2314, %v2306
    %2324 = vst.msk [vmem:[#allocation3 + $0x48] sm:$0xff] %vm2314, %v2307
    %2325 = vst.msk [vmem:[#allocation3 + $0x50] sm:$0xff] %vm2314, %v2308
    %2326 = vst.msk [vmem:[#allocation3 + $0x58] sm:$0xff] %vm2314, %v2309
    %2327 = vst.msk [vmem:[#allocation3 + $0x60] sm:$0xff] %vm2314, %v2310
    %2328 = vst.msk [vmem:[#allocation3 + $0x68] sm:$0xff] %vm2314, %v2311
    %2329 = vst.msk [vmem:[#allocation3 + $0x70] sm:$0xff] %vm2314, %v2312
    %2330 = vst.msk [vmem:[#allocation3 + $0x78] sm:$0xff] %vm2314, %v2313
    %2331 = vst.msk [vmem:[#allocation3 + $0x80] sm:$0xff] %vm2314, 0.0
    %v2332 = vld [vmem:[#allocation3] sm:$0xff]
    %v2333 = vld [vmem:[#allocation3 + $0x8] sm:$0xff]
    %v2334 = vld [vmem:[#allocation3 + $0x10] sm:$0xff]
    %v2335 = vld [vmem:[#allocation3 + $0x18] sm:$0xff]
    %v2336 = vld [vmem:[#allocation3 + $0x20] sm:$0xff]
    %v2337 = vld [vmem:[#allocation3 + $0x28] sm:$0xff]
    %v2338 = vld [vmem:[#allocation3 + $0x30] sm:$0xff]
    %v2339 = vld [vmem:[#allocation3 + $0x38] sm:$0xff]
    %v2340 = vld [vmem:[#allocation3 + $0x40] sm:$0xff]
    %v2341 = vld [vmem:[#allocation3 + $0x48] sm:$0xff]
    %v2342 = vld [vmem:[#allocation3 + $0x50] sm:$0xff]
    %v2343 = vld [vmem:[#allocation3 + $0x58] sm:$0xff]
    %2344 = vst.msk [vmem:[#allocation4] sm:$0xff] %vm2314, %v2332
    %2345 = vst.msk [vmem:[#allocation4 + $0x8] sm:$0xff] %vm2314, %v2333
    %2346 = vst.msk [vmem:[#allocation4 + $0x10] sm:$0xff] %vm2314, %v2334
    %2347 = vst.msk [vmem:[#allocation4 + $0x18] sm:$0xff] %vm2314, %v2335
    %2348 = vst.msk [vmem:[#allocation4 + $0x20] sm:$0xff] %vm2314, %v2336
    %2349 = vst.msk [vmem:[#allocation4 + $0x28] sm:$0xff] %vm2314, %v2337
    %2350 = vst.msk [vmem:[#allocation4 + $0x30] sm:$0xff] %vm2314, %v2338
    %2351 = vst.msk [vmem:[#allocation4 + $0x38] sm:$0xff] %vm2314, %v2339
    %2352 = vst.msk [vmem:[#allocation4 + $0x40] sm:$0xff] %vm2314, %v2340
    %2353 = vst.msk [vmem:[#allocation4 + $0x48] sm:$0xff] %vm2314, %v2341
    %2354 = vst.msk [vmem:[#allocation4 + $0x50] sm:$0xff] %vm2314, %v2342
    %2355 = vst.msk [vmem:[#allocation4 + $0x58] sm:$0xff] %vm2314, %v2343
    %v2356 = vld [vmem:[#allocation3 + $0x8] sm:$0xff]
    %v2357 = vld [vmem:[#allocation3 + $0x10] sm:$0xff]
    %v2358 = vld [vmem:[#allocation3 + $0x18] sm:$0xff]
    %v2359 = vld [vmem:[#allocation3 + $0x20] sm:$0xff]
    %v2360 = vld [vmem:[#allocation3 + $0x28] sm:$0xff]
    %v2361 = vld [vmem:[#allocation3 + $0x30] sm:$0xff]
    %v2362 = vld [vmem:[#allocation3 + $0x38] sm:$0xff]
    %v2363 = vld [vmem:[#allocation3 + $0x40] sm:$0xff]
    %v2364 = vld [vmem:[#allocation3 + $0x48] sm:$0xff]
    %v2365 = vld [vmem:[#allocation3 + $0x50] sm:$0xff]
    %v2366 = vld [vmem:[#allocation3 + $0x58] sm:$0xff]
    %v2367 = vld [vmem:[#allocation3 + $0x60] sm:$0xff]
    %2380 = vrot.lane.b32.xlu0 %v2356, 16
    %v2381 = vpop.permute.xlu0 %2380
    %2382 = vrot.lane.b32.xlu0 %v2357, 16
    %v2383 = vpop.permute.xlu0 %2382
    %2384 = vrot.lane.b32.xlu0 %v2358, 16
    %v2385 = vpop.permute.xlu0 %2384
    %2386 = vrot.lane.b32.xlu0 %v2359, 16
    %v2387 = vpop.permute.xlu0 %2386
    %2388 = vrot.lane.b32.xlu0 %v2360, 16
    %v2389 = vpop.permute.xlu0 %2388
    %2390 = vrot.lane.b32.xlu0 %v2361, 16
    %v2391 = vpop.permute.xlu0 %2390
    %2392 = vrot.lane.b32.xlu0 %v2362, 16
    %v2393 = vpop.permute.xlu0 %2392
    %2394 = vrot.lane.b32.xlu0 %v2363, 16
    %v2395 = vpop.permute.xlu0 %2394
    %2396 = vrot.lane.b32.xlu0 %v2364, 16
    %v2397 = vpop.permute.xlu0 %2396
    %2398 = vrot.lane.b32.xlu0 %v2365, 16
    %v2399 = vpop.permute.xlu0 %2398
    %2400 = vrot.lane.b32.xlu0 %v2366, 16
    %v2401 = vpop.permute.xlu0 %2400
    %2402 = vrot.lane.b32.xlu0 %v2367, 16
    %v2403 = vpop.permute.xlu0 %2402
    %vm2416 = vcmask 261248
    %2417 = vst.msk [vmem:[#allocation4] sm:$0xff] %vm2416, %v2381
    %2418 = vst.msk [vmem:[#allocation4 + $0x8] sm:$0xff] %vm2416, %v2383
    %2419 = vst.msk [vmem:[#allocation4 + $0x10] sm:$0xff] %vm2416, %v2385
    %2420 = vst.msk [vmem:[#allocation4 + $0x18] sm:$0xff] %vm2416, %v2387
    %2421 = vst.msk [vmem:[#allocation4 + $0x20] sm:$0xff] %vm2416, %v2389
    %2422 = vst.msk [vmem:[#allocation4 + $0x28] sm:$0xff] %vm2416, %v2391
    %2423 = vst.msk [vmem:[#allocation4 + $0x30] sm:$0xff] %vm2416, %v2393
    %2424 = vst.msk [vmem:[#allocation4 + $0x38] sm:$0xff] %vm2416, %v2395
    %2425 = vst.msk [vmem:[#allocation4 + $0x40] sm:$0xff] %vm2416, %v2397
    %2426 = vst.msk [vmem:[#allocation4 + $0x48] sm:$0xff] %vm2416, %v2399
    %2427 = vst.msk [vmem:[#allocation4 + $0x50] sm:$0xff] %vm2416, %v2401
    %2428 = vst.msk [vmem:[#allocation4 + $0x58] sm:$0xff] %vm2416, %v2403
    %v2429 = vld [vmem:[#allocation3 + $0x20] sm:$0xff]
    %v2430 = vld [vmem:[#allocation3 + $0x28] sm:$0xff]
    %v2431 = vld [vmem:[#allocation3 + $0x30] sm:$0xff]
    %v2432 = vld [vmem:[#allocation3 + $0x38] sm:$0xff]
    %v2433 = vld [vmem:[#allocation3 + $0x40] sm:$0xff]
    %v2434 = vld [vmem:[#allocation3 + $0x48] sm:$0xff]
    %v2435 = vld [vmem:[#allocation3 + $0x50] sm:$0xff]
    %v2436 = vld [vmem:[#allocation3 + $0x58] sm:$0xff]
    %v2437 = vld [vmem:[#allocation3 + $0x60] sm:$0xff]
    %v2438 = vld [vmem:[#allocation3 + $0x68] sm:$0xff]
    %v2439 = vld [vmem:[#allocation3 + $0x70] sm:$0xff]
    %v2440 = vld [vmem:[#allocation3 + $0x78] sm:$0xff]
    %2453 = vrot.lane.b32.xlu0 %v2429, 32
    %v2454 = vpop.permute.xlu0 %2453
    %2455 = vrot.lane.b32.xlu0 %v2430, 32
    %v2456 = vpop.permute.xlu0 %2455
    %2457 = vrot.lane.b32.xlu0 %v2431, 32
    %v2458 = vpop.permute.xlu0 %2457
    %2459 = vrot.lane.b32.xlu0 %v2432, 32
    %v2460 = vpop.permute.xlu0 %2459
    %2461 = vrot.lane.b32.xlu0 %v2433, 32
    %v2462 = vpop.permute.xlu0 %2461
    %2463 = vrot.lane.b32.xlu0 %v2434, 32
    %v2464 = vpop.permute.xlu0 %2463
    %2465 = vrot.lane.b32.xlu0 %v2435, 32
    %v2466 = vpop.permute.xlu0 %2465
    %2467 = vrot.lane.b32.xlu0 %v2436, 32
    %v2468 = vpop.permute.xlu0 %2467
    %2469 = vrot.lane.b32.xlu0 %v2437, 32
    %v2470 = vpop.permute.xlu0 %2469
    %2471 = vrot.lane.b32.xlu0 %v2438, 32
    %v2472 = vpop.permute.xlu0 %2471
    %2473 = vrot.lane.b32.xlu0 %v2439, 32
    %v2474 = vpop.permute.xlu0 %2473
    %2475 = vrot.lane.b32.xlu0 %v2440, 32
    %v2476 = vpop.permute.xlu0 %2475
    %vm2489 = vcmask 392448
    %2490 = vst.msk [vmem:[#allocation4] sm:$0xff] %vm2489, %v2454
    %2491 = vst.msk [vmem:[#allocation4 + $0x8] sm:$0xff] %vm2489, %v2456
    %2492 = vst.msk [vmem:[#allocation4 + $0x10] sm:$0xff] %vm2489, %v2458
    %2493 = vst.msk [vmem:[#allocation4 + $0x18] sm:$0xff] %vm2489, %v2460
    %2494 = vst.msk [vmem:[#allocation4 + $0x20] sm:$0xff] %vm2489, %v2462
    %2495 = vst.msk [vmem:[#allocation4 + $0x28] sm:$0xff] %vm2489, %v2464
    %2496 = vst.msk [vmem:[#allocation4 + $0x30] sm:$0xff] %vm2489, %v2466
    %2497 = vst.msk [vmem:[#allocation4 + $0x38] sm:$0xff] %vm2489, %v2468
    %2498 = vst.msk [vmem:[#allocation4 + $0x40] sm:$0xff] %vm2489, %v2470
    %2499 = vst.msk [vmem:[#allocation4 + $0x48] sm:$0xff] %vm2489, %v2472
    %2500 = vst.msk [vmem:[#allocation4 + $0x50] sm:$0xff] %vm2489, %v2474
    %2501 = vst.msk [vmem:[#allocation4 + $0x58] sm:$0xff] %vm2489, %v2476
    %v2502 = vld [vmem:[#allocation3 + $0x28] sm:$0xff]
    %v2503 = vld [vmem:[#allocation3 + $0x30] sm:$0xff]
    %v2504 = vld [vmem:[#allocation3 + $0x38] sm:$0xff]
    %v2505 = vld [vmem:[#allocation3 + $0x40] sm:$0xff]
    %v2506 = vld [vmem:[#allocation3 + $0x48] sm:$0xff]
    %v2507 = vld [vmem:[#allocation3 + $0x50] sm:$0xff]
    %v2508 = vld [vmem:[#allocation3 + $0x58] sm:$0xff]
    %v2509 = vld [vmem:[#allocation3 + $0x60] sm:$0xff]
    %v2510 = vld [vmem:[#allocation3 + $0x68] sm:$0xff]
    %v2511 = vld [vmem:[#allocation3 + $0x70] sm:$0xff]
    %v2512 = vld [vmem:[#allocation3 + $0x78] sm:$0xff]
    %v2513 = vld [vmem:[#allocation3 + $0x80] sm:$0xff]
    %2526 = vrot.lane.b32.xlu0 %v2502, 48
    %v2527 = vpop.permute.xlu0 %2526
    %2528 = vrot.lane.b32.xlu0 %v2503, 48
    %v2529 = vpop.permute.xlu0 %2528
    %2530 = vrot.lane.b32.xlu0 %v2504, 48
    %v2531 = vpop.permute.xlu0 %2530
    %2532 = vrot.lane.b32.xlu0 %v2505, 48
    %v2533 = vpop.permute.xlu0 %2532
    %2534 = vrot.lane.b32.xlu0 %v2506, 48
    %v2535 = vpop.permute.xlu0 %2534
    %2536 = vrot.lane.b32.xlu0 %v2507, 48
    %v2537 = vpop.permute.xlu0 %2536
    %2538 = vrot.lane.b32.xlu0 %v2508, 48
    %v2539 = vpop.permute.xlu0 %2538
    %2540 = vrot.lane.b32.xlu0 %v2509, 48
    %v2541 = vpop.permute.xlu0 %2540
    %2542 = vrot.lane.b32.xlu0 %v2510, 48
    %v2543 = vpop.permute.xlu0 %2542
    %2544 = vrot.lane.b32.xlu0 %v2511, 48
    %v2545 = vpop.permute.xlu0 %2544
    %2546 = vrot.lane.b32.xlu0 %v2512, 48
    %v2547 = vpop.permute.xlu0 %2546
    %2548 = vrot.lane.b32.xlu0 %v2513, 48
    %v2549 = vpop.permute.xlu0 %2548
    %vm2562 = vcmask 523648
    %2563 = vst.msk [vmem:[#allocation4] sm:$0xff] %vm2562, %v2527
    %2564 = vst.msk [vmem:[#allocation4 + $0x8] sm:$0xff] %vm2562, %v2529
    %2565 = vst.msk [vmem:[#allocation4 + $0x10] sm:$0xff] %vm2562, %v2531
    %2566 = vst.msk [vmem:[#allocation4 + $0x18] sm:$0xff] %vm2562, %v2533
    %2567 = vst.msk [vmem:[#allocation4 + $0x20] sm:$0xff] %vm2562, %v2535
    %2568 = vst.msk [vmem:[#allocation4 + $0x28] sm:$0xff] %vm2562, %v2537
    %2569 = vst.msk [vmem:[#allocation4 + $0x30] sm:$0xff] %vm2562, %v2539
    %2570 = vst.msk [vmem:[#allocation4 + $0x38] sm:$0xff] %vm2562, %v2541
    %2571 = vst.msk [vmem:[#allocation4 + $0x40] sm:$0xff] %vm2562, %v2543
    %2572 = vst.msk [vmem:[#allocation4 + $0x48] sm:$0xff] %vm2562, %v2545
    %2573 = vst.msk [vmem:[#allocation4 + $0x50] sm:$0xff] %vm2562, %v2547
    %2574 = vst.msk [vmem:[#allocation4 + $0x58] sm:$0xff] %vm2562, %v2549
    %v2575 = vld [vmem:[#allocation4] sm:$0xff]
    %v2576 = vld [vmem:[#allocation4 + $0x8] sm:$0xff]
    %v2577 = vld [vmem:[#allocation4 + $0x10] sm:$0xff]
    %v2578 = vld [vmem:[#allocation4 + $0x18] sm:$0xff]
    %v2579 = vld [vmem:[#allocation4 + $0x20] sm:$0xff]
    %v2580 = vld [vmem:[#allocation4 + $0x28] sm:$0xff]
    %v2581 = vld [vmem:[#allocation4 + $0x30] sm:$0xff]
    %v2582 = vld [vmem:[#allocation4 + $0x38] sm:$0xff]
    %v2583 = vld [vmem:[#allocation4 + $0x40] sm:$0xff]
    %v2584 = vld [vmem:[#allocation4 + $0x48] sm:$0xff]
    %v2585 = vld [vmem:[#allocation4 + $0x50] sm:$0xff]
    %v2586 = vld [vmem:[#allocation4 + $0x58] sm:$0xff]
    %v2587 = vld [vmem:[%s3] sm:$0xff]
    %v2588 = vld [vmem:[%s3 + $0x8] sm:$0xff]
    %v2589 = vld [vmem:[%s3 + $0x10] sm:$0xff]
    %v2590 = vld [vmem:[%s3 + $0x18] sm:$0xff]
    %v2591 = vld [vmem:[%s3 + $0x20] sm:$0xff]
    %v2592 = vld [vmem:[%s3 + $0x28] sm:$0xff]
    %v2593 = vld [vmem:[%s3 + $0x30] sm:$0xff]
    %v2594 = vld [vmem:[%s3 + $0x38] sm:$0xff]
    %v2595 = vld [vmem:[%s4] sm:$0x1]
    %v2597 = vlaneseq
    %v2598 = vshrl.u32 %v2597, 7
    %v2599 = vsub.s32 0, %v2598
    %v2600 = vrot.slane %v2595, %v2599
    %vm2602 = vcmask 523264
    %v2604 = vsel %vm2602, %v2575, 0
    %v2607 = vsel %vm2602, %v2576, 0
    %v2610 = vsel %vm2602, %v2577, 0
    %v2613 = vsel %vm2602, %v2578, 0
    %v2616 = vsel %vm2602, %v2579, 0
    %v2619 = vsel %vm2602, %v2580, 0
    %v2622 = vsel %vm2602, %v2581, 0
    %v2625 = vsel %vm2602, %v2582, 0
    %v2628 = vsel %vm2602, %v2583, 0
    %v2631 = vsel %vm2602, %v2584, 0
    %v2634 = vsel %vm2602, %v2585, 0
    %v2637 = vsel %vm2602, %v2586, 0
    %2639 = vmatprep.subr.mxu0 0.0
    %2640 = vmatpush1.msra.mxu0 %v2587
    %2641 = vmatprep.subr.mxu0 0.0
    %2642 = vmatpush1.msra.mxu0 %v2588
    %2643 = vmatprep.subr.mxu0 0.0
    %2644 = vmatpush1.msra.mxu0 %v2589
    %2645 = vmatprep.subr.mxu0 0.0
    %2646 = vmatpush1.msra.mxu0 %v2590
    %2647 = vmatprep.subr.mxu0 0.0
    %2648 = vmatpush1.msra.mxu0 %v2591
    %2649 = vmatprep.subr.mxu0 0.0
    %2650 = vmatpush1.msra.mxu0 %v2592
    %2651 = vmatprep.subr.mxu0 0.0
    %2652 = vmatpush1.msra.mxu0 %v2593
    %2653 = vmatprep.subr.mxu0 0.0
    %2654 = vmatpush1.msra.mxu0 %v2594
    %2655 = vmatprep.subr.mxu0 0.0
    %2656 = vmatpush1.msra.mxu0 0.0
    %2657 = vmatprep.subr.mxu0 0.0
    %2658 = vmatpush1.msra.mxu0 0.0
    %2659 = vmatprep.subr.mxu0 0.0
    %2660 = vmatpush1.msra.mxu0 0.0
    %2661 = vmatprep.subr.mxu0 0.0
    %2662 = vmatpush1.msra.mxu0 0.0
    %2663 = vmatprep.subr.mxu0 0.0
    %2664 = vmatpush1.msra.mxu0 0.0
    %2665 = vmatprep.subr.mxu0 0.0
    %2666 = vmatpush1.msra.mxu0 0.0
    %2667 = vmatprep.subr.mxu0 0.0
    %2668 = vmatpush1.msra.mxu0 0.0
    %2669 = vmatprep.subr.mxu0 0.0
    %2670 = vmatpush1.msra.mxu0 0.0
    %2671 = vmatprep.subr.mxu0 0.0
    %2672 = vmatpush1.msra.mxu0 0.0
    %2673 = vmatprep.subr.mxu0 0.0
    %2674 = vmatpush1.msra.mxu0 0.0
    %2675 = vmatprep.subr.mxu0 0.0
    %2676 = vmatpush1.msra.mxu0 0.0
    %2677 = vmatprep.subr.mxu0 0.0
    %2678 = vmatpush1.msra.mxu0 0.0
    %2679 = vmatprep.subr.mxu0 0.0
    %2680 = vmatpush1.msra.mxu0 0.0
    %2681 = vmatprep.subr.mxu0 0.0
    %2682 = vmatpush1.msra.mxu0 0.0
    %2683 = vmatprep.subr.mxu0 0.0
    %2684 = vmatpush1.msra.mxu0 0.0
    %2685 = vmatprep.subr.mxu0 0.0
    %2686 = vmatpush1.msra.mxu0 0.0
    %2687 = vmatprep.subr.mxu0 0.0
    %2688 = vmatpush1.msra.mxu0 0.0
    %2689 = vmatprep.subr.mxu0 0.0
    %2690 = vmatpush1.msra.mxu0 0.0
    %2691 = vmatprep.subr.mxu0 0.0
    %2692 = vmatpush1.msra.mxu0 0.0
    %2693 = vmatprep.subr.mxu0 0.0
    %2694 = vmatpush1.msra.mxu0 0.0
    %2695 = vmatprep.subr.mxu0 0.0
    %2696 = vmatpush1.msra.mxu0 0.0
    %2697 = vmatprep.subr.mxu0 0.0
    %2698 = vmatpush1.msra.mxu0 0.0
    %2699 = vmatprep.subr.mxu0 0.0
    %2700 = vmatpush1.msra.mxu0 0.0
    %2701 = vmatprep.subr.mxu0 0.0
    %2702 = vmatpush1.msra.mxu0 0.0
    %2703 = vmatprep.mubr.f32.mxu0 0.0
    %2704 = vmatmul.mubr.f32.gmra.mrb[0].mxu0 %v2604
    %v2705 = vpop.f32.mrb[0].mxu0
    %v2706 = vadd.f32 %v2600, %v2705
    %v2707 = vpop.f32.mrb[0].mxu0
    %2708 = vmatprep.mubr.f32.mxu0 0.0
    %2709 = vmatmul.mubr.f32.gmra.mrb[0].mxu0 %v2607
    %v2710 = vpop.f32.mrb[0].mxu0
    %v2711 = vadd.f32 %v2600, %v2710
    %v2712 = vpop.f32.mrb[0].mxu0
    %2713 = vmatprep.mubr.f32.mxu0 0.0
    %2714 = vmatmul.mubr.f32.gmra.mrb[0].mxu0 %v2610
    %v2715 = vpop.f32.mrb[0].mxu0
    %v2716 = vadd.f32 %v2600, %v2715
    %v2717 = vpop.f32.mrb[0].mxu0
    %2718 = vmatprep.mubr.f32.mxu0 0.0
    %2719 = vmatmul.mubr.f32.gmra.mrb[0].mxu0 %v2613
    %v2720 = vpop.f32.mrb[0].mxu0
    %v2721 = vadd.f32 %v2600, %v2720
    %v2722 = vpop.f32.mrb[0].mxu0
    %2723 = vmatprep.mubr.f32.mxu0 0.0
    %2724 = vmatmul.mubr.f32.gmra.mrb[0].mxu0 %v2616
    %v2725 = vpop.f32.mrb[0].mxu0
    %v2726 = vadd.f32 %v2600, %v2725
    %v2727 = vpop.f32.mrb[0].mxu0
    %2728 = vmatprep.mubr.f32.mxu0 0.0
    %2729 = vmatmul.mubr.f32.gmra.mrb[0].mxu0 %v2619
    %v2730 = vpop.f32.mrb[0].mxu0
    %v2731 = vadd.f32 %v2600, %v2730
    %v2732 = vpop.f32.mrb[0].mxu0
    %2733 = vmatprep.mubr.f32.mxu0 0.0
    %2734 = vmatmul.mubr.f32.gmra.mrb[0].mxu0 %v2622
    %v2735 = vpop.f32.mrb[0].mxu0
    %v2736 = vadd.f32 %v2600, %v2735
    %v2737 = vpop.f32.mrb[0].mxu0
    %2738 = vmatprep.mubr.f32.mxu0 0.0
    %2739 = vmatmul.mubr.f32.gmra.mrb[0].mxu0 %v2625
    %v2740 = vpop.f32.mrb[0].mxu0
    %v2741 = vadd.f32 %v2600, %v2740
    %v2742 = vpop.f32.mrb[0].mxu0
    %2743 = vmatprep.mubr.f32.mxu0 0.0
    %2744 = vmatmul.mubr.f32.gmra.mrb[0].mxu0 %v2628
    %v2745 = vpop.f32.mrb[0].mxu0
    %v2746 = vadd.f32 %v2600, %v2745
    %v2747 = vpop.f32.mrb[0].mxu0
    %2748 = vmatprep.mubr.f32.mxu0 0.0
    %2749 = vmatmul.mubr.f32.gmra.mrb[0].mxu0 %v2631
    %v2750 = vpop.f32.mrb[0].mxu0
    %v2751 = vadd.f32 %v2600, %v2750
    %v2752 = vpop.f32.mrb[0].mxu0
    %2753 = vmatprep.mubr.f32.mxu0 0.0
    %2754 = vmatmul.mubr.f32.gmra.mrb[0].mxu0 %v2634
    %v2755 = vpop.f32.mrb[0].mxu0
    %v2756 = vadd.f32 %v2600, %v2755
    %v2757 = vpop.f32.mrb[0].mxu0
    %2758 = vmatprep.mubr.f32.mxu0 0.0
    %2759 = vmatmul.mubr.f32.gmra.mrb[0].mxu0 %v2637
    %v2760 = vpop.f32.mrb[0].mxu0
    %v2761 = vadd.f32 %v2600, %v2760
    %v2762 = vpop.f32.mrb[0].mxu0
    %2763 = vdwg.mxu0
    %v2764 = vmax.f32 %v2706, 0.0
    %v2765 = vmax.f32 %v2711, 0.0
    %v2766 = vmax.f32 %v2716, 0.0
    %v2767 = vmax.f32 %v2721, 0.0
    %v2768 = vmax.f32 %v2726, 0.0
    %v2769 = vmax.f32 %v2731, 0.0
    %v2770 = vmax.f32 %v2736, 0.0
    %v2771 = vmax.f32 %v2741, 0.0
    %v2772 = vmax.f32 %v2746, 0.0
    %v2773 = vmax.f32 %v2751, 0.0
    %v2774 = vmax.f32 %v2756, 0.0
    %v2775 = vmax.f32 %v2761, 0.0
    %vm2776 = vcmask 261120
    %2777 = vst.msk [vmem:[#allocation5] sm:$0xff] %vm2776, %v2764
    %2778 = vst.msk [vmem:[#allocation5 + $0x8] sm:$0xff] %vm2776, %v2765
    %2779 = vst.msk [vmem:[#allocation5 + $0x10] sm:$0xff] %vm2776, %v2766
    %2780 = vst.msk [vmem:[#allocation5 + $0x18] sm:$0xff] %vm2776, %v2767
    %2781 = vst.msk [vmem:[#allocation5 + $0x20] sm:$0xff] %vm2776, %v2768
    %2782 = vst.msk [vmem:[#allocation5 + $0x28] sm:$0xff] %vm2776, %v2769
    %2783 = vst.msk [vmem:[#allocation5 + $0x30] sm:$0xff] %vm2776, %v2770
    %2784 = vst.msk [vmem:[#allocation5 + $0x38] sm:$0xff] %vm2776, %v2771
    %2785 = vst.msk [vmem:[#allocation5 + $0x40] sm:$0xff] %vm2776, %v2772
    %2786 = vst.msk [vmem:[#allocation5 + $0x48] sm:$0xff] %vm2776, %v2773
    %2787 = vst.msk [vmem:[#allocation5 + $0x50] sm:$0xff] %vm2776, %v2774
    %2788 = vst.msk [vmem:[#allocation5 + $0x58] sm:$0xff] %vm2776, %v2775
    %2789 = vst.msk [vmem:[#allocation5 + $0x60] sm:$0xff] %vm2776, 0.0
    %v2790 = vld [vmem:[#allocation5] sm:$0xff]
    %v2791 = vld [vmem:[#allocation5 + $0x8] sm:$0xff]
    %v2792 = vld [vmem:[#allocation5 + $0x10] sm:$0xff]
    %v2793 = vld [vmem:[#allocation5 + $0x18] sm:$0xff]
    %v2794 = vld [vmem:[#allocation5 + $0x20] sm:$0xff]
    %v2795 = vld [vmem:[#allocation5 + $0x28] sm:$0xff]
    %v2796 = vld [vmem:[#allocation5 + $0x30] sm:$0xff]
    %v2797 = vld [vmem:[#allocation5 + $0x38] sm:$0xff]
    %2798 = vst.msk [vmem:[#allocation6] sm:$0xff] %vm2776, %v2790
    %2799 = vst.msk [vmem:[#allocation6 + $0x8] sm:$0xff] %vm2776, %v2791
    %2800 = vst.msk [vmem:[#allocation6 + $0x10] sm:$0xff] %vm2776, %v2792
    %2801 = vst.msk [vmem:[#allocation6 + $0x18] sm:$0xff] %vm2776, %v2793
    %2802 = vst.msk [vmem:[#allocation6 + $0x20] sm:$0xff] %vm2776, %v2794
    %2803 = vst.msk [vmem:[#allocation6 + $0x28] sm:$0xff] %vm2776, %v2795
    %2804 = vst.msk [vmem:[#allocation6 + $0x30] sm:$0xff] %vm2776, %v2796
    %2805 = vst.msk [vmem:[#allocation6 + $0x38] sm:$0xff] %vm2776, %v2797
    %v2806 = vld [vmem:[#allocation5 + $0x8] sm:$0xff]
    %v2807 = vld [vmem:[#allocation5 + $0x10] sm:$0xff]
    %v2808 = vld [vmem:[#allocation5 + $0x18] sm:$0xff]
    %v2809 = vld [vmem:[#allocation5 + $0x20] sm:$0xff]
    %v2810 = vld [vmem:[#allocation5 + $0x28] sm:$0xff]
    %v2811 = vld [vmem:[#allocation5 + $0x30] sm:$0xff]
    %v2812 = vld [vmem:[#allocation5 + $0x38] sm:$0xff]
    %v2813 = vld [vmem:[#allocation5 + $0x40] sm:$0xff]
    %2822 = vrot.lane.b32.xlu0 %v2806, 32
    %v2823 = vpop.permute.xlu0 %2822
    %2824 = vrot.lane.b32.xlu0 %v2807, 32
    %v2825 = vpop.permute.xlu0 %2824
    %2826 = vrot.lane.b32.xlu0 %v2808, 32
    %v2827 = vpop.permute.xlu0 %2826
    %2828 = vrot.lane.b32.xlu0 %v2809, 32
    %v2829 = vpop.permute.xlu0 %2828
    %2830 = vrot.lane.b32.xlu0 %v2810, 32
    %v2831 = vpop.permute.xlu0 %2830
    %2832 = vrot.lane.b32.xlu0 %v2811, 32
    %v2833 = vpop.permute.xlu0 %2832
    %2834 = vrot.lane.b32.xlu0 %v2812, 32
    %v2835 = vpop.permute.xlu0 %2834
    %2836 = vrot.lane.b32.xlu0 %v2813, 32
    %v2837 = vpop.permute.xlu0 %2836
    %vm2846 = vcmask 523520
    %2847 = vst.msk [vmem:[#allocation6] sm:$0xff] %vm2846, %v2823
    %2848 = vst.msk [vmem:[#allocation6 + $0x8] sm:$0xff] %vm2846, %v2825
    %2849 = vst.msk [vmem:[#allocation6 + $0x10] sm:$0xff] %vm2846, %v2827
    %2850 = vst.msk [vmem:[#allocation6 + $0x18] sm:$0xff] %vm2846, %v2829
    %2851 = vst.msk [vmem:[#allocation6 + $0x20] sm:$0xff] %vm2846, %v2831
    %2852 = vst.msk [vmem:[#allocation6 + $0x28] sm:$0xff] %vm2846, %v2833
    %2853 = vst.msk [vmem:[#allocation6 + $0x30] sm:$0xff] %vm2846, %v2835
    %2854 = vst.msk [vmem:[#allocation6 + $0x38] sm:$0xff] %vm2846, %v2837
    %v2855 = vld [vmem:[#allocation5 + $0x20] sm:$0xff]
    %v2856 = vld [vmem:[#allocation5 + $0x28] sm:$0xff]
    %v2857 = vld [vmem:[#allocation5 + $0x30] sm:$0xff]
    %v2858 = vld [vmem:[#allocation5 + $0x38] sm:$0xff]
    %v2859 = vld [vmem:[#allocation5 + $0x40] sm:$0xff]
    %v2860 = vld [vmem:[#allocation5 + $0x48] sm:$0xff]
    %v2861 = vld [vmem:[#allocation5 + $0x50] sm:$0xff]
    %v2862 = vld [vmem:[#allocation5 + $0x58] sm:$0xff]
    %2871 = vrot.lane.b32.xlu0 %v2855, 64
    %v2872 = vpop.permute.xlu0 %2871
    %2873 = vrot.lane.b32.xlu0 %v2856, 64
    %v2874 = vpop.permute.xlu0 %2873
    %2875 = vrot.lane.b32.xlu0 %v2857, 64
    %v2876 = vpop.permute.xlu0 %2875
    %2877 = vrot.lane.b32.xlu0 %v2858, 64
    %v2878 = vpop.permute.xlu0 %2877
    %2879 = vrot.lane.b32.xlu0 %v2859, 64
    %v2880 = vpop.permute.xlu0 %2879
    %2881 = vrot.lane.b32.xlu0 %v2860, 64
    %v2882 = vpop.permute.xlu0 %2881
    %2883 = vrot.lane.b32.xlu0 %v2861, 64
    %v2884 = vpop.permute.xlu0 %2883
    %2885 = vrot.lane.b32.xlu0 %v2862, 64
    %v2886 = vpop.permute.xlu0 %2885
    %vm2895 = vcmask 785920
    %2896 = vst.msk [vmem:[#allocation6] sm:$0xff] %vm2895, %v2872
    %2897 = vst.msk [vmem:[#allocation6 + $0x8] sm:$0xff] %vm2895, %v2874
    %2898 = vst.msk [vmem:[#allocation6 + $0x10] sm:$0xff] %vm2895, %v2876
    %2899 = vst.msk [vmem:[#allocation6 + $0x18] sm:$0xff] %vm2895, %v2878
    %2900 = vst.msk [vmem:[#allocation6 + $0x20] sm:$0xff] %vm2895, %v2880
    %2901 = vst.msk [vmem:[#allocation6 + $0x28] sm:$0xff] %vm2895, %v2882
    %2902 = vst.msk [vmem:[#allocation6 + $0x30] sm:$0xff] %vm2895, %v2884
    %2903 = vst.msk [vmem:[#allocation6 + $0x38] sm:$0xff] %vm2895, %v2886
    %v2904 = vld [vmem:[#allocation5 + $0x28] sm:$0xff]
    %v2905 = vld [vmem:[#allocation5 + $0x30] sm:$0xff]
    %v2906 = vld [vmem:[#allocation5 + $0x38] sm:$0xff]
    %v2907 = vld [vmem:[#allocation5 + $0x40] sm:$0xff]
    %v2908 = vld [vmem:[#allocation5 + $0x48] sm:$0xff]
    %v2909 = vld [vmem:[#allocation5 + $0x50] sm:$0xff]
    %v2910 = vld [vmem:[#allocation5 + $0x58] sm:$0xff]
    %v2911 = vld [vmem:[#allocation5 + $0x60] sm:$0xff]
    %2920 = vrot.lane.b32.xlu0 %v2904, 96
    %v2921 = vpop.permute.xlu0 %2920
    %2922 = vrot.lane.b32.xlu0 %v2905, 96
    %v2923 = vpop.permute.xlu0 %2922
    %2924 = vrot.lane.b32.xlu0 %v2906, 96
    %v2925 = vpop.permute.xlu0 %2924
    %2926 = vrot.lane.b32.xlu0 %v2907, 96
    %v2927 = vpop.permute.xlu0 %2926
    %2928 = vrot.lane.b32.xlu0 %v2908, 96
    %v2929 = vpop.permute.xlu0 %2928
    %2930 = vrot.lane.b32.xlu0 %v2909, 96
    %v2931 = vpop.permute.xlu0 %2930
    %2932 = vrot.lane.b32.xlu0 %v2910, 96
    %v2933 = vpop.permute.xlu0 %2932
    %2934 = vrot.lane.b32.xlu0 %v2911, 96
    %v2935 = vpop.permute.xlu0 %2934
    %vm2944 = vcmask 1048320
    %2945 = vst.msk [vmem:[#allocation6] sm:$0xff] %vm2944, %v2921
    %2946 = vst.msk [vmem:[#allocation6 + $0x8] sm:$0xff] %vm2944, %v2923
    %2947 = vst.msk [vmem:[#allocation6 + $0x10] sm:$0xff] %vm2944, %v2925
    %2948 = vst.msk [vmem:[#allocation6 + $0x18] sm:$0xff] %vm2944, %v2927
    %2949 = vst.msk [vmem:[#allocation6 + $0x20] sm:$0xff] %vm2944, %v2929
    %2950 = vst.msk [vmem:[#allocation6 + $0x28] sm:$0xff] %vm2944, %v2931
    %2951 = vst.msk [vmem:[#allocation6 + $0x30] sm:$0xff] %vm2944, %v2933
    %2952 = vst.msk [vmem:[#allocation6 + $0x38] sm:$0xff] %vm2944, %v2935
    %v2953 = vld [vmem:[#allocation6] sm:$0xff]
    %v2954 = vld [vmem:[#allocation6 + $0x8] sm:$0xff]
    %v2955 = vld [vmem:[#allocation6 + $0x10] sm:$0xff]
    %v2956 = vld [vmem:[#allocation6 + $0x18] sm:$0xff]
    %v2957 = vld [vmem:[#allocation6 + $0x20] sm:$0xff]
    %v2958 = vld [vmem:[#allocation6 + $0x28] sm:$0xff]
    %v2959 = vld [vmem:[#allocation6 + $0x30] sm:$0xff]
    %v2960 = vld [vmem:[#allocation6 + $0x38] sm:$0xff]
    %v2961 = vld [vmem:[%s5] sm:$0xff]
    %v2962 = vld [vmem:[%s5 + $0x8] sm:$0xff]
    %v2963 = vld [vmem:[%s5 + $0x10] sm:$0xff]
    %v2964 = vld [vmem:[%s5 + $0x18] sm:$0xff]
    %v2965 = vld [vmem:[%s5 + $0x20] sm:$0xff]
    %v2966 = vld [vmem:[%s5 + $0x28] sm:$0xff]
    %v2967 = vld [vmem:[%s5 + $0x30] sm:$0xff]
    %v2968 = vld [vmem:[%s5 + $0x38] sm:$0xff]
    %v2969 = vld [vmem:[%s5 + $0x40] sm:$0xff]
    %v2970 = vld [vmem:[%s5 + $0x48] sm:$0xff]
    %v2971 = vld [vmem:[%s5 + $0x50] sm:$0xff]
    %v2972 = vld [vmem:[%s5 + $0x58] sm:$0xff]
    %v2973 = vld [vmem:[%s5 + $0x60] sm:$0xff]
    %v2974 = vld [vmem:[%s5 + $0x68] sm:$0xff]
    %v2975 = vld [vmem:[%s5 + $0x70] sm:$0xff]
    %v2976 = vld [vmem:[%s5 + $0x78] sm:$0xff]
    %v2977 = vld [vmem:[%s6] sm:$0x1]
    %v2979 = vlaneseq
    %v2980 = vshrl.u32 %v2979, 7
    %v2981 = vsub.s32 0, %v2980
    %v2982 = vrot.slane %v2977, %v2981
    %2984 = vmatprep.subr.mxu0 0.0
    %2985 = vmatpush1.msra.mxu0 %v2961
    %2986 = vmatprep.subr.mxu0 0.0
    %2987 = vmatpush1.msra.mxu0 %v2962
    %2988 = vmatprep.subr.mxu0 0.0
    %2989 = vmatpush1.msra.mxu0 %v2963
    %2990 = vmatprep.subr.mxu0 0.0
    %2991 = vmatpush1.msra.mxu0 %v2964
    %2992 = vmatprep.subr.mxu0 0.0
    %2993 = vmatpush1.msra.mxu0 %v2965
    %2994 = vmatprep.subr.mxu0 0.0
    %2995 = vmatpush1.msra.mxu0 %v2966
    %2996 = vmatprep.subr.mxu0 0.0
    %2997 = vmatpush1.msra.mxu0 %v2967
    %2998 = vmatprep.subr.mxu0 0.0
    %2999 = vmatpush1.msra.mxu0 %v2968
    %3000 = vmatprep.subr.mxu0 0.0
    %3001 = vmatpush1.msra.mxu0 %v2969
    %3002 = vmatprep.subr.mxu0 0.0
    %3003 = vmatpush1.msra.mxu0 %v2970
    %3004 = vmatprep.subr.mxu0 0.0
    %3005 = vmatpush1.msra.mxu0 %v2971
    %3006 = vmatprep.subr.mxu0 0.0
    %3007 = vmatpush1.msra.mxu0 %v2972
    %3008 = vmatprep.subr.mxu0 0.0
    %3009 = vmatpush1.msra.mxu0 %v2973
    %3010 = vmatprep.subr.mxu0 0.0
    %3011 = vmatpush1.msra.mxu0 %v2974
    %3012 = vmatprep.subr.mxu0 0.0
    %3013 = vmatpush1.msra.mxu0 %v2975
    %3014 = vmatprep.subr.mxu0 0.0
    %3015 = vmatpush1.msra.mxu0 %v2976
    %3016 = vmatprep.subr.mxu0 0.0
    %3017 = vmatpush1.msra.mxu0 0.0
    %3018 = vmatprep.subr.mxu0 0.0
    %3019 = vmatpush1.msra.mxu0 0.0
    %3020 = vmatprep.subr.mxu0 0.0
    %3021 = vmatpush1.msra.mxu0 0.0
    %3022 = vmatprep.subr.mxu0 0.0
    %3023 = vmatpush1.msra.mxu0 0.0
    %3024 = vmatprep.subr.mxu0 0.0
    %3025 = vmatpush1.msra.mxu0 0.0
    %3026 = vmatprep.subr.mxu0 0.0
    %3027 = vmatpush1.msra.mxu0 0.0
    %3028 = vmatprep.subr.mxu0 0.0
    %3029 = vmatpush1.msra.mxu0 0.0
    %3030 = vmatprep.subr.mxu0 0.0
    %3031 = vmatpush1.msra.mxu0 0.0
    %3032 = vmatprep.subr.mxu0 0.0
    %3033 = vmatpush1.msra.mxu0 0.0
    %3034 = vmatprep.subr.mxu0 0.0
    %3035 = vmatpush1.msra.mxu0 0.0
    %3036 = vmatprep.subr.mxu0 0.0
    %3037 = vmatpush1.msra.mxu0 0.0
    %3038 = vmatprep.subr.mxu0 0.0
    %3039 = vmatpush1.msra.mxu0 0.0
    %3040 = vmatprep.subr.mxu0 0.0
    %3041 = vmatpush1.msra.mxu0 0.0
    %3042 = vmatprep.subr.mxu0 0.0
    %3043 = vmatpush1.msra.mxu0 0.0
    %3044 = vmatprep.subr.mxu0 0.0
    %3045 = vmatpush1.msra.mxu0 0.0
    %3046 = vmatprep.subr.mxu0 0.0
    %3047 = vmatpush1.msra.mxu0 0.0
    %3048 = vmatprep.mubr.f32.mxu0 0.0
    %3049 = vmatmul.mubr.f32.gmra.mrb[0].mxu0 %v2953
    %v3050 = vpop.f32.mrb[0].mxu0
    %v3051 = vadd.f32 %v2982, %v3050
    %v3052 = vpop.f32.mrb[0].mxu0
    %3053 = vmatprep.mubr.f32.mxu0 0.0
    %3054 = vmatmul.mubr.f32.gmra.mrb[0].mxu0 %v2954
    %v3055 = vpop.f32.mrb[0].mxu0
    %v3056 = vadd.f32 %v2982, %v3055
    %v3057 = vpop.f32.mrb[0].mxu0
    %3058 = vmatprep.mubr.f32.mxu0 0.0
    %3059 = vmatmul.mubr.f32.gmra.mrb[0].mxu0 %v2955
    %v3060 = vpop.f32.mrb[0].mxu0
    %v3061 = vpop.f32.mrb[0].mxu0
    %3062 = vmatprep.mubr.f32.mxu0 0.0
    %3063 = vmatmul.mubr.f32.gmra.mrb[0].mxu0 %v2956
    %v3064 = vpop.f32.mrb[0].mxu0
    %v3065 = vpop.f32.mrb[0].mxu0
    %3066 = vmatprep.mubr.f32.mxu0 0.0
    %3067 = vmatmul.mubr.f32.gmra.mrb[0].mxu0 %v2957
    %v3068 = vpop.f32.mrb[0].mxu0
    %v3069 = vadd.f32 %v2982, %v3068
    %v3070 = vpop.f32.mrb[0].mxu0
    %3071 = vmatprep.mubr.f32.mxu0 0.0
    %3072 = vmatmul.mubr.f32.gmra.mrb[0].mxu0 %v2958
    %v3073 = vpop.f32.mrb[0].mxu0
    %v3074 = vadd.f32 %v2982, %v3073
    %v3075 = vpop.f32.mrb[0].mxu0
    %3076 = vmatprep.mubr.f32.mxu0 0.0
    %3077 = vmatmul.mubr.f32.gmra.mrb[0].mxu0 %v2959
    %v3078 = vpop.f32.mrb[0].mxu0
    %v3079 = vpop.f32.mrb[0].mxu0
    %3080 = vmatprep.mubr.f32.mxu0 0.0
    %3081 = vmatmul.mubr.f32.gmra.mrb[0].mxu0 %v2960
    %v3082 = vpop.f32.mrb[0].mxu0
    %v3083 = vpop.f32.mrb[0].mxu0
    %3084 = vdwg.mxu0
    %v3085 = vmax.f32 %v3051, 0.0
    %v3086 = vmax.f32 %v3056, 0.0
    %v3087 = vmax.f32 %v3069, 0.0
    %v3088 = vmax.f32 %v3074, 0.0
    %3089 = vst.msk [vmem:[#allocation7] sm:$0xff] %vm2602, %v3085
    %3091 = vrot.lane.b32.xlu0 %v3086, 64
    %v3092 = vpop.permute.xlu0 %3091
    %vm3094 = vcmask 1048064
    %3095 = vst.msk [vmem:[#allocation7] sm:$0xff] %vm3094, %v3092
    %3096 = vst.msk [vmem:[#allocation7 + $0x8] sm:$0xff] %vm2602, %v3087
    %3098 = vrot.lane.b32.xlu0 %v3088, 64
    %v3099 = vpop.permute.xlu0 %3098
    %3101 = vst.msk [vmem:[#allocation7 + $0x8] sm:$0xff] %vm3094, %v3099
    %v3102 = vld [vmem:[#allocation7] sm:$0xff]
    %v3103 = vld [vmem:[#allocation7 + $0x8] sm:$0xff]
    %v3104 = vld [vmem:[%s7] sm:$0xff]
    %v3105 = vld [vmem:[%s7 + $0x8] sm:$0xff]
    %v3106 = vld [vmem:[%s7 + $0x10] sm:$0xff]
    %v3107 = vld [vmem:[%s7 + $0x18] sm:$0xff]
    %v3108 = vld [vmem:[%s7 + $0x20] sm:$0xff]
    %v3109 = vld [vmem:[%s7 + $0x28] sm:$0xff]
    %v3110 = vld [vmem:[%s7 + $0x30] sm:$0xff]
    %v3111 = vld [vmem:[%s7 + $0x38] sm:$0xff]
    %v3112 = vld [vmem:[%s7 + $0x40] sm:$0xff]
    %v3113 = vld [vmem:[%s7 + $0x48] sm:$0xff]
    %v3114 = vld [vmem:[%s7 + $0x50] sm:$0xff]
    %v3115 = vld [vmem:[%s7 + $0x58] sm:$0xff]
    %v3116 = vld [vmem:[%s7 + $0x60] sm:$0xff]
    %v3117 = vld [vmem:[%s7 + $0x68] sm:$0xff]
    %v3118 = vld [vmem:[%s7 + $0x70] sm:$0xff]
    %v3119 = vld [vmem:[%s7 + $0x78] sm:$0xff]
    %v3120 = vld [vmem:[%s7 + $0x80] sm:$0xff]
    %v3121 = vld [vmem:[%s7 + $0x88] sm:$0xff]
    %v3122 = vld [vmem:[%s7 + $0x90] sm:$0xff]
    %v3123 = vld [vmem:[%s7 + $0x98] sm:$0xff]
    %v3124 = vld [vmem:[%s7 + $0xa0] sm:$0xff]
    %v3125 = vld [vmem:[%s7 + $0xa8] sm:$0xff]
    %v3126 = vld [vmem:[%s7 + $0xb0] sm:$0xff]
    %v3127 = vld [vmem:[%s7 + $0xb8] sm:$0xff]
    %v3128 = vld [vmem:[%s7 + $0xc0] sm:$0xff]
    %v3129 = vld [vmem:[%s7 + $0xc8] sm:$0xff]
    %v3130 = vld [vmem:[%s7 + $0xd0] sm:$0xff]
    %v3131 = vld [vmem:[%s7 + $0xd8] sm:$0xff]
    %v3132 = vld [vmem:[%s7 + $0xe0] sm:$0xff]
    %v3133 = vld [vmem:[%s7 + $0xe8] sm:$0xff]
    %v3134 = vld [vmem:[%s7 + $0xf0] sm:$0xff]
    %v3135 = vld [vmem:[%s7 + $0xf8] sm:$0xff]
    %v3136 = vld [vmem:[%s8] sm:$0x1]
    %v3138 = vlaneseq
    %v3139 = vshrl.u32 %v3138, 7
    %v3140 = vsub.s32 0, %v3139
    %v3141 = vrot.slane %v3136, %v3140
    %3143 = vmatprep.subr.mxu0 0.0
    %3144 = vmatpush1.msra.mxu0 %v3104
    %3145 = vmatprep.subr.mxu0 0.0
    %3146 = vmatpush1.msra.mxu0 %v3105
    %3147 = vmatprep.subr.mxu0 0.0
    %3148 = vmatpush1.msra.mxu0 %v3106
    %3149 = vmatprep.subr.mxu0 0.0
    %3150 = vmatpush1.msra.mxu0 %v3107
    %3151 = vmatprep.subr.mxu0 0.0
    %3152 = vmatpush1.msra.mxu0 %v3108
    %3153 = vmatprep.subr.mxu0 0.0
    %3154 = vmatpush1.msra.mxu0 %v3109
    %3155 = vmatprep.subr.mxu0 0.0
    %3156 = vmatpush1.msra.mxu0 %v3110
    %3157 = vmatprep.subr.mxu0 0.0
    %3158 = vmatpush1.msra.mxu0 %v3111
    %3159 = vmatprep.subr.mxu0 0.0
    %3160 = vmatpush1.msra.mxu0 %v3112
    %3161 = vmatprep.subr.mxu0 0.0
    %3162 = vmatpush1.msra.mxu0 %v3113
    %3163 = vmatprep.subr.mxu0 0.0
    %3164 = vmatpush1.msra.mxu0 %v3114
    %3165 = vmatprep.subr.mxu0 0.0
    %3166 = vmatpush1.msra.mxu0 %v3115
    %3167 = vmatprep.subr.mxu0 0.0
    %3168 = vmatpush1.msra.mxu0 %v3116
    %3169 = vmatprep.subr.mxu0 0.0
    %3170 = vmatpush1.msra.mxu0 %v3117
    %3171 = vmatprep.subr.mxu0 0.0
    %3172 = vmatpush1.msra.mxu0 %v3118
    %3173 = vmatprep.subr.mxu0 0.0
    %3174 = vmatpush1.msra.mxu0 %v3119
    %3175 = vmatprep.subr.mxu0 0.0
    %3176 = vmatpush1.msra.mxu0 %v3120
    %3177 = vmatprep.subr.mxu0 0.0
    %3178 = vmatpush1.msra.mxu0 %v3121
    %3179 = vmatprep.subr.mxu0 0.0
    %3180 = vmatpush1.msra.mxu0 %v3122
    %3181 = vmatprep.subr.mxu0 0.0
    %3182 = vmatpush1.msra.mxu0 %v3123
    %3183 = vmatprep.subr.mxu0 0.0
    %3184 = vmatpush1.msra.mxu0 %v3124
    %3185 = vmatprep.subr.mxu0 0.0
    %3186 = vmatpush1.msra.mxu0 %v3125
    %3187 = vmatprep.subr.mxu0 0.0
    %3188 = vmatpush1.msra.mxu0 %v3126
    %3189 = vmatprep.subr.mxu0 0.0
    %3190 = vmatpush1.msra.mxu0 %v3127
    %3191 = vmatprep.subr.mxu0 0.0
    %3192 = vmatpush1.msra.mxu0 %v3128
    %3193 = vmatprep.subr.mxu0 0.0
    %3194 = vmatpush1.msra.mxu0 %v3129
    %3195 = vmatprep.subr.mxu0 0.0
    %3196 = vmatpush1.msra.mxu0 %v3130
    %3197 = vmatprep.subr.mxu0 0.0
    %3198 = vmatpush1.msra.mxu0 %v3131
    %3199 = vmatprep.subr.mxu0 0.0
    %3200 = vmatpush1.msra.mxu0 %v3132
    %3201 = vmatprep.subr.mxu0 0.0
    %3202 = vmatpush1.msra.mxu0 %v3133
    %3203 = vmatprep.subr.mxu0 0.0
    %3204 = vmatpush1.msra.mxu0 %v3134
    %3205 = vmatprep.subr.mxu0 0.0
    %3206 = vmatpush1.msra.mxu0 %v3135
    %3207 = vmatprep.mubr.f32.mxu0 %v3103
    %3208 = vmatmul.mubr.f32.gmra.mrb[0].mxu0 %v3102
    %v3209 = vpop.f32.mrb[0].mxu0
    %v3210 = vadd.f32 %v3141, %v3209
    %v3211 = vpop.f32.mrb[0].mxu0
    %3212 = vdwg.mxu0
    %v3213 = vtanh.pop %v3210
    %v3214 = vld [vmem:[%s9] sm:$0xff]
    %v3215 = vld [vmem:[%s9 + $0x8] sm:$0xff]
    %v3216 = vld [vmem:[%s9 + $0x10] sm:$0xff]
    %v3217 = vld [vmem:[%s9 + $0x18] sm:$0xff]
    %v3218 = vld [vmem:[%s9 + $0x20] sm:$0xff]
    %v3219 = vld [vmem:[%s9 + $0x28] sm:$0xff]
    %v3220 = vld [vmem:[%s9 + $0x30] sm:$0xff]
    %v3221 = vld [vmem:[%s9 + $0x38] sm:$0xff]
    %v3222 = vld [vmem:[%s10] sm:$0x1]
    %v3224 = vlaneseq
    %v3225 = vshrl.u32 %v3224, 7
    %v3226 = vsub.s32 0, %v3225
    %v3227 = vrot.slane %v3222, %v3226
    %v3230 = vsel %vm2602, %v3213, 0
    %3232 = vmatprep.subr.mxu0 0.0
    %3233 = vmatpush1.msra.mxu0 %v3214
    %3234 = vmatprep.subr.mxu0 0.0
    %3235 = vmatpush1.msra.mxu0 %v3215
    %3236 = vmatprep.subr.mxu0 0.0
    %3237 = vmatpush1.msra.mxu0 %v3216
    %3238 = vmatprep.subr.mxu0 0.0
    %3239 = vmatpush1.msra.mxu0 %v3217
    %3240 = vmatprep.subr.mxu0 0.0
    %3241 = vmatpush1.msra.mxu0 %v3218
    %3242 = vmatprep.subr.mxu0 0.0
    %3243 = vmatpush1.msra.mxu0 %v3219
    %3244 = vmatprep.subr.mxu0 0.0
    %3245 = vmatpush1.msra.mxu0 %v3220
    %3246 = vmatprep.subr.mxu0 0.0
    %3247 = vmatpush1.msra.mxu0 %v3221
    %3248 = vmatprep.subr.mxu0 0.0
    %3249 = vmatpush1.msra.mxu0 0.0
    %3250 = vmatprep.subr.mxu0 0.0
    %3251 = vmatpush1.msra.mxu0 0.0
    %3252 = vmatprep.subr.mxu0 0.0
    %3253 = vmatpush1.msra.mxu0 0.0
    %3254 = vmatprep.subr.mxu0 0.0
    %3255 = vmatpush1.msra.mxu0 0.0
    %3256 = vmatprep.subr.mxu0 0.0
    %3257 = vmatpush1.msra.mxu0 0.0
    %3258 = vmatprep.subr.mxu0 0.0
    %3259 = vmatpush1.msra.mxu0 0.0
    %3260 = vmatprep.subr.mxu0 0.0
    %3261 = vmatpush1.msra.mxu0 0.0
    %3262 = vmatprep.subr.mxu0 0.0
    %3263 = vmatpush1.msra.mxu0 0.0
    %3264 = vmatprep.subr.mxu0 0.0
    %3265 = vmatpush1.msra.mxu0 0.0
    %3266 = vmatprep.subr.mxu0 0.0
    %3267 = vmatpush1.msra.mxu0 0.0
    %3268 = vmatprep.subr.mxu0 0.0
    %3269 = vmatpush1.msra.mxu0 0.0
    %3270 = vmatprep.subr.mxu0 0.0
    %3271 = vmatpush1.msra.mxu0 0.0
    %3272 = vmatprep.subr.mxu0 0.0
    %3273 = vmatpush1.msra.mxu0 0.0
    %3274 = vmatprep.subr.mxu0 0.0
    %3275 = vmatpush1.msra.mxu0 0.0
    %3276 = vmatprep.subr.mxu0 0.0
    %3277 = vmatpush1.msra.mxu0 0.0
    %3278 = vmatprep.subr.mxu0 0.0
    %3279 = vmatpush1.msra.mxu0 0.0
    %3280 = vmatprep.subr.mxu0 0.0
    %3281 = vmatpush1.msra.mxu0 0.0
    %3282 = vmatprep.subr.mxu0 0.0
    %3283 = vmatpush1.msra.mxu0 0.0
    %3284 = vmatprep.subr.mxu0 0.0
    %3285 = vmatpush1.msra.mxu0 0.0
    %3286 = vmatprep.subr.mxu0 0.0
    %3287 = vmatpush1.msra.mxu0 0.0
    %3288 = vmatprep.subr.mxu0 0.0
    %3289 = vmatpush1.msra.mxu0 0.0
    %3290 = vmatprep.subr.mxu0 0.0
    %3291 = vmatpush1.msra.mxu0 0.0
    %3292 = vmatprep.subr.mxu0 0.0
    %3293 = vmatpush1.msra.mxu0 0.0
    %3294 = vmatprep.subr.mxu0 0.0
    %3295 = vmatpush1.msra.mxu0 0.0
    %3296 = vmatprep.mubr.f32.mxu0 0.0
    %3297 = vmatmul.mubr.f32.gmra.mrb[0].mxu0 %v3230
    %v3298 = vpop.f32.mrb[0].mxu0
    %v3299 = vadd.f32 %v3227, %v3298
    %v3300 = vpop.f32.mrb[0].mxu0
    %3301 = vdwg.mxu0
    %vm3302 = vcmask 39936
    %3303 = vst.msk [vmem:[#allocation8] sm:$0xff] %vm3302, %v3299
    // Predicated region
    $region46: #{qnetwork_forward.1} parent=1 // pred_check
      _
    $region47: #{qnetwork_forward.1} parent=1 // pred_check_branch
      %3305 = sbr.rel (0) target = $region49
    $region48: #{qnetwork_forward.1} parent=1 // pred_region
      %s3307 = ssub.s32 128, 128
      %3308 = vsyncadd [#allocation9], %s3307
      %s3310 = sshll.u32 [#allocation8], 4
      %s3311 = int_to_ptr.vmem [resolvable:$true] %s3310
      %3313 = dma.vmem_to_hbm [thread:$0]  %s3311, 128, %s11, [#allocation9]
    $region49: #{qnetwork_forward.1} parent=1 // pred_fallthru
      _
    // Predicated region
    $region50: #{qnetwork_forward.1} parent=1 // pred_check
      _
    $region51: #{qnetwork_forward.1} parent=1 // pred_check_branch
      %3315 = sbr.rel (0) target = $region53
    $region52: #{qnetwork_forward.1} parent=1 // pred_region
      %3316 = dma.done [#allocation9], 128
    $region53: #{qnetwork_forward.1} parent=1 // pred_fallthru
      _
    %3317 = vsyncpa [#allocation9], 1

</llo_original>
